<compile_context>
chip_gen: v7x
topology: tpu7x:2x2x1
jax: 0.10.0
libtpu: 0.0.40
codegen_flags: <defaults>
</compile_context>

<pallas_src>
import math
import functools

import jax
import jax.numpy as jnp
from jax.experimental import pallas as pl
from jax.experimental.pallas import tpu as pltpu


# ---------------------------------------------------------------------------
# Pallas kernel: attention + residual + LayerNorm + MLP for one batch tile
# ---------------------------------------------------------------------------
def _perceiver_attention_kernel(
    x_ref, q_ref,                    # (Bt, S, E) bf16, (Bt, L, E) f32
    wq_ref, bq_ref,                  # (E, E) bf16 (1/sqrt(hd) folded), (1, E) f32
    wkv_ref, bkv_ref,                # (E, 2E) bf16, (1, 2E) f32
    wo_ref, bo_ref,                  # (E, E) bf16, (1, E) f32
    g2_ref, beta2_ref,               # LayerNorm2 gamma/beta, (1, E) f32
    w1_ref, b1_ref,                  # (E, MLP) bf16, (1, MLP) f32
    w2_ref, b2_ref,                  # (MLP, E) bf16, (1, E) f32
    out_ref,                         # (Bt, L, E) f32
    *, n_heads: int,
):
    Bt, S, E = x_ref.shape
    L = q_ref.shape[1]
    H = n_heads
    hd = E // H
    bf16, f32 = jnp.bfloat16, jnp.float32

    x_rows = x_ref[...].reshape(Bt * S, E)            # bf16 (cast in wrapper)
    q_rows = q_ref[...].reshape(Bt * L, E)            # f32 (kept for exact residual)

    # --- fused projections: bf16 operands, f32 accumulation (MXU) ---
    Q = jnp.dot(q_rows.astype(bf16), wq_ref[...],
                preferred_element_type=f32) + bq_ref[...]          # (Bt*L, E)
    KV = jnp.dot(x_rows, wkv_ref[...],
                 preferred_element_type=f32) + bkv_ref[...]        # (Bt*S, 2E)

    # --- multi-head attention: heads folded into the einsum batch dim ---
    # Build (H*Bt, rows, hd) bf16 operands once (leading-axis stack of the
    # per-head column blocks), then drive the score / context contractions as
    # two batched, single-batch-dim bf16 einsums with f32 accumulation.
    Qb = Q.astype(bf16)
    KVb = KV.astype(bf16)
    q_heads = jnp.stack([Qb[:, h * hd:(h + 1) * hd] for h in range(H)],
                        axis=0).reshape(H * Bt, L, hd)
    k_heads = jnp.stack([KVb[:, h * hd:(h + 1) * hd] for h in range(H)],
                        axis=0).reshape(H * Bt, S, hd)
    v_heads = jnp.stack([KVb[:, E + h * hd:E + (h + 1) * hd] for h in range(H)],
                        axis=0).reshape(H * Bt, S, hd)

    s = jnp.einsum("bld,bsd->bls", q_heads, k_heads,
                   preferred_element_type=f32)                     # (H*Bt, L, S) f32
    s = s - jnp.max(s, axis=-1, keepdims=True)
    p = jnp.exp(s)                                                 # unnormalized, in (0, 1]
    inv_denom = pl.reciprocal(jnp.sum(p, axis=-1, keepdims=True), approx=True)
    ctx = jnp.einsum("bls,bsd->bld", p.astype(bf16), v_heads,
                     preferred_element_type=f32)                   # (H*Bt, L, hd) f32
    ctx = ctx * inv_denom                                          # normalize after the matmul

    # back to (Bt*L, E) with head-major columns for the single K=E output proj
    ctx = ctx.reshape(H, Bt * L, hd)
    ctx = jnp.concatenate([ctx[h] for h in range(H)], axis=-1)     # (Bt*L, E)

    attn = jnp.dot(ctx.astype(bf16), wo_ref[...],
                   preferred_element_type=f32) + bo_ref[...]       # (Bt*L, E)
    resid = attn + q_rows

    # --- LayerNorm2 (biased variance, eps=1e-5, matches torch.nn.LayerNorm) ---
    mean = jnp.mean(resid, axis=-1, keepdims=True)
    var = jnp.mean((resid - mean) ** 2, axis=-1, keepdims=True)
    hn = (resid - mean) * jax.lax.rsqrt(var + 1e-5)
    hn = hn * g2_ref[...] + beta2_ref[...]

    # --- MLP: Linear -> exact GELU (erf) -> Linear (bf16 operands, f32 acc) ---
    h1 = jnp.dot(hn.astype(bf16), w1_ref[...],
                 preferred_element_type=f32) + b1_ref[...]
    h1 = 0.5 * h1 * (1.0 + jax.lax.erf(h1 * (1.0 / math.sqrt(2.0))))
    h2 = jnp.dot(h1.astype(bf16), w2_ref[...],
                 preferred_element_type=f32) + b2_ref[...]

    out_ref[...] = (h2 + resid).reshape(Bt, L, E).astype(out_ref.dtype)


# ---------------------------------------------------------------------------
# Chip-aware tiling / VMEM heuristics
# ---------------------------------------------------------------------------
def _vmem_capacity_bytes():
    try:
        return int(pltpu.get_tpu_info().vmem_capacity_bytes)
    except Exception:
        pass
    try:
        kind = jax.devices()[0].device_kind.lower()
    except Exception:
        kind = ""
    # conservative fallback: 64 MiB per core on v7x, 128 MiB otherwise
    return (64 if "v7" in kind else 128) * 1024 * 1024


def _num_tensorcores():
    """How many TensorCores a `parallel` grid axis can be sharded over."""
    try:
        kind = jax.devices()[0].device_kind.lower()
    except Exception:
        return 1
    if ("lite" in kind or "v5e" in kind or "v6e" in kind
            or "v2" in kind or "v3" in kind):
        return 1                       # one TensorCore per device
    return 2                           # v4 / v5p megacore, v7x: 2 TCs share the grid


def _vmem_needed_bytes(bb, S, L, E, mlp, H):
    """Generous per-grid-step VMEM estimate: double-buffered x/q/out,
    single-buffered weights, f32 intermediates, 1.4x fudge."""
    f32, bf16 = 4, 2
    io = 2 * (bb * S * E * bf16 + 2 * bb * L * E * f32)            # x, q, out
    w = (E * E + E * 2 * E + E * E + E * mlp + mlp * E) * bf16 \
        + (6 * E + 2 * mlp) * f32
    act = (bb * S * 2 * E * f32                                    # KV (f32)
           + bb * S * 3 * E * bf16                                 # bf16 KV / K / V copies
           + 3 * bb * L * E * f32                                  # Q / ctx / resid
           + 2 * H * bb * L * S * f32                              # scores + probs
           + bb * L * mlp * f32)                                   # MLP hidden
    return int(1.4 * (io + w + act))


def _pick_block_b(B, S, L, E, mlp, H, n_cores, vmem_budget):
    divisors = [d for d in range(1, B + 1) if B % d == 0]
    fits = [d for d in divisors
            if _vmem_needed_bytes(d, S, L, E, mlp, H) <= vmem_budget]
    if not fits:
        fits = [1]
    if n_cores <= 1:
        # serial grid on one core: one big tile (grid may collapse to 1 step)
        return max(fits)
    # multi-TC: keep >= n_cores parallel grid steps when possible and aim for
    # ~256 MXU rows (Bt*L) per step on the 256-wide MXU generations.
    par = [d for d in fits if B // d >= n_cores] or fits
    target = max(1, -(-256 // max(L, 1)))          # ceil(256 / L)
    hit = [d for d in par if d >= target]
    return min(hit) if hit else max(par)


# ---------------------------------------------------------------------------
# Wrapper
# ---------------------------------------------------------------------------
def perceiver_attention(x, q, prepared, n_heads, block_b=None):
    B, S, E = x.shape
    _, L, _ = q.shape
    assert E % n_heads == 0
    mlp_dim = prepared["w1"].shape[1]

    vmem_limit = int(0.85 * _vmem_capacity_bytes())   # leave compiler headroom
    if block_b is None:
        block_b = _pick_block_b(B, S, L, E, mlp_dim, n_heads,
                                _num_tensorcores(), vmem_limit)
    assert B % block_b == 0
    grid = (B // block_b,)

    # x is only consumed as a bf16 MXU operand inside the kernel: casting here
    # halves its HBM->VMEM traffic without changing the result.
    x = x.astype(jnp.bfloat16)

    kernel = functools.partial(_perceiver_attention_kernel, n_heads=n_heads)

    def full(shape):
        # whole-array block with a constant index_map -> fetched once;
        # single-buffered so weights are not duplicated in VMEM.
        return pl.BlockSpec(shape, lambda b: (0,) * len(shape),
                            pipeline_mode=pl.Buffered(1))

    grid_spec = pltpu.PrefetchScalarGridSpec(
        num_scalar_prefetch=0,
        grid=grid,
        in_specs=[
            pl.BlockSpec((block_b, S, E), lambda b: (b, 0, 0)),   # x tile (bf16)
            pl.BlockSpec((block_b, L, E), lambda b: (b, 0, 0)),   # q tile (f32)
            full((E, E)), full((1, E)),                           # wq (scaled), bq
            full((E, 2 * E)), full((1, 2 * E)),                   # fused wk|wv, bk|bv
            full((E, E)), full((1, E)),                           # wo, bo
            full((1, E)), full((1, E)),                           # ln2 gamma, beta
            full((E, mlp_dim)), full((1, mlp_dim)),               # w1, b1
            full((mlp_dim, E)), full((1, E)),                     # w2, b2
        ],
        out_specs=pl.BlockSpec((block_b, L, E), lambda b: (b, 0, 0)),
    )

    return pl.pallas_call(
        kernel,
        out_shape=jax.ShapeDtypeStruct((B, L, E), q.dtype),
        grid_spec=grid_spec,
        compiler_params=pltpu.CompilerParams(
            dimension_semantics=("parallel",),
            vmem_limit_bytes=vmem_limit,
        ),
    )(
        x, q,
        prepared["wq"], prepared["bq"],
        prepared["wkv"], prepared["bkv"],
        prepared["wo"], prepared["bo"],
        prepared["ln2_g"], prepared["ln2_b"],
        prepared["w1"], prepared["b1"],
        prepared["w2"], prepared["b2"],
    )


# ---------------------------------------------------------------------------
# One-time parameter prep: fold 1/sqrt(hd) into wq/bq, fuse K|V weights,
# cast matmul weights to bf16 (biases / LN params stay f32).
# ---------------------------------------------------------------------------
def prepare_params(params, n_heads):
    E = params["wq"].shape[0]
    hd = E // n_heads
    scale = 1.0 / math.sqrt(hd)
    bf16, f32 = jnp.bfloat16, jnp.float32
    return {
        "wq": (params["wq"] * scale).astype(bf16),
        "bq": (params["bq"] * scale).astype(f32),
        "wkv": jnp.concatenate([params["wk"], params["wv"]], axis=1).astype(bf16),
        "bkv": jnp.concatenate([params["bk"], params["bv"]], axis=1).astype(f32),
        "wo": params["wo"].astype(bf16),
        "bo": params["bo"].astype(f32),
        "ln2_g": params["ln2_g"].astype(f32),
        "ln2_b": params["ln2_b"].astype(f32),
        "w1": params["w1"].astype(bf16),
        "b1": params["b1"].astype(f32),
        "w2": params["w2"].astype(bf16),
        "b2": params["b2"].astype(f32),
    }


# ---------------------------------------------------------------------------
# Deterministic parameter init (weights stored (in, out), i.e. transposed
# relative to torch nn.Linear's (out, in) convention).
# ---------------------------------------------------------------------------
def init_params(key, embed_dim, mlp_dim):
    ks = jax.random.split(key, 10)
    s = 0.05
    f32 = jnp.float32
    return {
        "wq": jax.random.normal(ks[0], (embed_dim, embed_dim), f32) * s,
        "wk": jax.random.normal(ks[1], (embed_dim, embed_dim), f32) * s,
        "wv": jax.random.normal(ks[2], (embed_dim, embed_dim), f32) * s,
        "bq": jax.random.normal(ks[3], (1, embed_dim), f32) * s,
        "bk": jax.random.normal(ks[4], (1, embed_dim), f32) * s,
        "bv": jax.random.normal(ks[5], (1, embed_dim), f32) * s,
        "wo": jax.random.normal(ks[6], (embed_dim, embed_dim), f32) * s,
        "bo": jax.random.normal(ks[7], (1, embed_dim), f32) * s,
        "ln2_g": jnp.ones((1, embed_dim), f32),
        "ln2_b": jnp.zeros((1, embed_dim), f32),
        "w1": jax.random.normal(ks[8], (embed_dim, mlp_dim), f32) * s,
        "b1": jnp.zeros((1, mlp_dim), f32),
        "w2": jax.random.normal(ks[9], (mlp_dim, embed_dim), f32) * s,
        "b2": jnp.zeros((1, embed_dim), f32),
    }


# ---------------------------------------------------------------------------
# Pure-JAX f32 reference (mirrors the PyTorch forward) for verification.
# ---------------------------------------------------------------------------
def reference(x, q, p, n_heads):
    B, S, E = x.shape
    L = q.shape[1]
    hd = E // n_heads
    scale = 1.0 / math.sqrt(hd)

    Q = jnp.einsum("ble,ef->blf", q, p["wq"]) + p["bq"]
    K = jnp.einsum("bse,ef->bsf", x, p["wk"]) + p["bk"]
    V = jnp.einsum("bse,ef->bsf", x, p["wv"]) + p["bv"]
    Q = Q.reshape(B, L, n_heads, hd).transpose(0, 2, 1, 3)
    K = K.reshape(B, S, n_heads, hd).transpose(0, 2, 1, 3)
    V = V.reshape(B, S, n_heads, hd).transpose(0, 2, 1, 3)
    scores = jnp.einsum("bhld,bhsd->bhls", Q, K) * scale
    probs = jax.nn.softmax(scores, axis=-1)
    o = jnp.einsum("bhls,bhsd->bhld", probs, V).transpose(0, 2, 1, 3).reshape(B, L, E)
    o = jnp.einsum("ble,ef->blf", o, p["wo"]) + p["bo"]

    resid = o + q
    mean = resid.mean(-1, keepdims=True)
    var = ((resid - mean) ** 2).mean(-1, keepdims=True)
    h2 = (resid - mean) / jnp.sqrt(var + 1e-5) * p["ln2_g"] + p["ln2_b"]
    h2 = h2 @ p["w1"] + p["b1"]
    h2 = 0.5 * h2 * (1.0 + jax.lax.erf(h2 / jnp.sqrt(2.0)))
    h2 = h2 @ p["w2"] + p["b2"]
    return h2 + resid


if __name__ == "__main__":
    # Lane-dense small shapes: E and S multiples of 128 so no masked partial stores.
    B, S, L, E, MLP, H = 4, 128, 8, 128, 256, 4

    key = jax.random.PRNGKey(0)
    kx, kq, kp = jax.random.split(key, 3)
    x = jax.random.normal(kx, (B, S, E), jnp.float32)   # key/value sequence
    q = jax.random.normal(kq, (B, L, E), jnp.float32)   # latent queries
    params = init_params(kp, E, MLP)
    prepared = prepare_params(params, n_heads=H)        # one-time, amortized prep

    out = perceiver_attention(x, q, prepared, n_heads=H)
    out = jax.block_until_ready(out)

    ref = reference(x, q, params, H)
    assert out.shape == (B, L, E), out.shape
    # bf16 MXU operands + approx reciprocal -> relaxed tolerance vs f32 reference.
    err = float(jnp.max(jnp.abs(out - ref)))
    assert jnp.allclose(out, ref, atol=5e-2, rtol=5e-2), err
    print("KERNEL_OK")
</pallas_src>

<mosaic_0001>
module attributes {stable_mosaic.version = 11 : i64} {
  func.func @_perceiver_attention_kernel(%arg0: i32, %arg1: memref<2x128x128xbf16, #tpu.memory_space<vmem>>, %arg2: memref<2x8x128xf32, #tpu.memory_space<vmem>>, %arg3: memref<128x128xbf16, #tpu.memory_space<vmem>>, %arg4: memref<1x128xf32, #tpu.memory_space<vmem>>, %arg5: memref<128x256xbf16, #tpu.memory_space<vmem>>, %arg6: memref<1x256xf32, #tpu.memory_space<vmem>>, %arg7: memref<128x128xbf16, #tpu.memory_space<vmem>>, %arg8: memref<1x128xf32, #tpu.memory_space<vmem>>, %arg9: memref<1x128xf32, #tpu.memory_space<vmem>>, %arg10: memref<1x128xf32, #tpu.memory_space<vmem>>, %arg11: memref<128x256xbf16, #tpu.memory_space<vmem>>, %arg12: memref<1x256xf32, #tpu.memory_space<vmem>>, %arg13: memref<256x128xbf16, #tpu.memory_space<vmem>>, %arg14: memref<1x128xf32, #tpu.memory_space<vmem>>, %arg15: memref<2x8x128xf32, #tpu.memory_space<vmem>>) attributes {dimension_semantics = [#tpu.dimension_semantics<parallel>], iteration_bounds = array<i64: 2>, scalar_prefetch = 0 : i64, scratch_operands = 0 : i64, tpu.core_type = #tpu.core_type<tc>, window_params = [{transform_indices = @transform_0, window_bounds = array<i64: 2, 128, 128>}, {transform_indices = @transform_1, window_bounds = array<i64: 2, 8, 128>}, {pipeline_mode = #tpu.pipeline_mode<synchronous>, transform_indices = @transform_2, window_bounds = array<i64: 128, 128>}, {pipeline_mode = #tpu.pipeline_mode<synchronous>, transform_indices = @transform_3, window_bounds = array<i64: 1, 128>}, {pipeline_mode = #tpu.pipeline_mode<synchronous>, transform_indices = @transform_4, window_bounds = array<i64: 128, 256>}, {pipeline_mode = #tpu.pipeline_mode<synchronous>, transform_indices = @transform_5, window_bounds = array<i64: 1, 256>}, {pipeline_mode = #tpu.pipeline_mode<synchronous>, transform_indices = @transform_6, window_bounds = array<i64: 128, 128>}, {pipeline_mode = #tpu.pipeline_mode<synchronous>, transform_indices = @transform_7, window_bounds = array<i64: 1, 128>}, {pipeline_mode = #tpu.pipeline_mode<synchronous>, transform_indices = @transform_8, window_bounds = array<i64: 1, 128>}, {pipeline_mode = #tpu.pipeline_mode<synchronous>, transform_indices = @transform_9, window_bounds = array<i64: 1, 128>}, {pipeline_mode = #tpu.pipeline_mode<synchronous>, transform_indices = @transform_10, window_bounds = array<i64: 128, 256>}, {pipeline_mode = #tpu.pipeline_mode<synchronous>, transform_indices = @transform_11, window_bounds = array<i64: 1, 256>}, {pipeline_mode = #tpu.pipeline_mode<synchronous>, transform_indices = @transform_12, window_bounds = array<i64: 256, 128>}, {pipeline_mode = #tpu.pipeline_mode<synchronous>, transform_indices = @transform_13, window_bounds = array<i64: 1, 128>}, {transform_indices = @transform_14, window_bounds = array<i64: 2, 8, 128>}]} {
    %c0 = arith.constant 0 : index
    %c0_0 = arith.constant 0 : index
    %c0_1 = arith.constant 0 : index
    %0 = vector.load %arg1[%c0, %c0_0, %c0_1] : memref<2x128x128xbf16, #tpu.memory_space<vmem>>, vector<2x128x128xbf16>
    %1 = vector.shape_cast %0 : vector<2x128x128xbf16> to vector<256x128xbf16>
    %c0_2 = arith.constant 0 : index
    %c0_3 = arith.constant 0 : index
    %c0_4 = arith.constant 0 : index
    %2 = vector.load %arg2[%c0_2, %c0_3, %c0_4] : memref<2x8x128xf32, #tpu.memory_space<vmem>>, vector<2x8x128xf32>
    %3 = vector.shape_cast %2 : vector<2x8x128xf32> to vector<16x128xf32>
    %4 = arith.truncf %3 : vector<16x128xf32> to vector<16x128xbf16>
    %c0_5 = arith.constant 0 : index
    %c0_6 = arith.constant 0 : index
    %5 = vector.load %arg3[%c0_5, %c0_6] : memref<128x128xbf16, #tpu.memory_space<vmem>>, vector<128x128xbf16>
    %cst = arith.constant dense<0.000000e+00> : vector<16x128xf32>
    %6 = tpu.matmul %4, %5, %cst {dimension_numbers = #tpu.dot_dimension_numbers<[1], [0], [0], [1], [0, 0, 1, 1], [], []>} : vector<16x128xbf16>, vector<128x128xbf16>, vector<16x128xf32> -> vector<16x128xf32>
    %c0_7 = arith.constant 0 : index
    %c0_8 = arith.constant 0 : index
    %7 = vector.load %arg4[%c0_7, %c0_8] : memref<1x128xf32, #tpu.memory_space<vmem>>, vector<1x128xf32>
    %8 = vector.broadcast %7 : vector<1x128xf32> to vector<16x128xf32>
    %9 = arith.addf %6, %8 : vector<16x128xf32>
    %c0_9 = arith.constant 0 : index
    %c0_10 = arith.constant 0 : index
    %10 = vector.load %arg5[%c0_9, %c0_10] : memref<128x256xbf16, #tpu.memory_space<vmem>>, vector<128x256xbf16>
    %cst_11 = arith.constant dense<0.000000e+00> : vector<256x256xf32>
    %11 = tpu.matmul %1, %10, %cst_11 {dimension_numbers = #tpu.dot_dimension_numbers<[1], [0], [0], [1], [0, 0, 1, 1], [], []>} : vector<256x128xbf16>, vector<128x256xbf16>, vector<256x256xf32> -> vector<256x256xf32>
    %c0_12 = arith.constant 0 : index
    %c0_13 = arith.constant 0 : index
    %12 = vector.load %arg6[%c0_12, %c0_13] : memref<1x256xf32, #tpu.memory_space<vmem>>, vector<1x256xf32>
    %13 = vector.broadcast %12 : vector<1x256xf32> to vector<256x256xf32>
    %14 = arith.addf %11, %13 : vector<256x256xf32>
    %15 = arith.truncf %9 : vector<16x128xf32> to vector<16x128xbf16>
    %16 = arith.truncf %14 : vector<256x256xf32> to vector<256x256xbf16>
    %17 = vector.extract_strided_slice %15 {offsets = [0, 0], sizes = [16, 32], strides = [1, 1]} : vector<16x128xbf16> to vector<16x32xbf16>
    %18 = vector.extract_strided_slice %15 {offsets = [0, 32], sizes = [16, 32], strides = [1, 1]} : vector<16x128xbf16> to vector<16x32xbf16>
    %19 = vector.extract_strided_slice %15 {offsets = [0, 64], sizes = [16, 32], strides = [1, 1]} : vector<16x128xbf16> to vector<16x32xbf16>
    %20 = vector.extract_strided_slice %15 {offsets = [0, 96], sizes = [16, 32], strides = [1, 1]} : vector<16x128xbf16> to vector<16x32xbf16>
    %21 = vector.shape_cast %17 : vector<16x32xbf16> to vector<1x16x32xbf16>
    %22 = vector.shape_cast %18 : vector<16x32xbf16> to vector<1x16x32xbf16>
    %23 = vector.shape_cast %19 : vector<16x32xbf16> to vector<1x16x32xbf16>
    %24 = vector.shape_cast %20 : vector<16x32xbf16> to vector<1x16x32xbf16>
    %25 = tpu.concatenate %21, %22, %23, %24 in 0 : vector<1x16x32xbf16>, vector<1x16x32xbf16>, vector<1x16x32xbf16>, vector<1x16x32xbf16> -> vector<4x16x32xbf16>
    %26 = vector.shape_cast %25 : vector<4x16x32xbf16> to vector<8x8x32xbf16>
    %27 = vector.extract_strided_slice %16 {offsets = [0, 0], sizes = [256, 32], strides = [1, 1]} : vector<256x256xbf16> to vector<256x32xbf16>
    %28 = vector.extract_strided_slice %16 {offsets = [0, 32], sizes = [256, 32], strides = [1, 1]} : vector<256x256xbf16> to vector<256x32xbf16>
    %29 = vector.extract_strided_slice %16 {offsets = [0, 64], sizes = [256, 32], strides = [1, 1]} : vector<256x256xbf16> to vector<256x32xbf16>
    %30 = vector.extract_strided_slice %16 {offsets = [0, 96], sizes = [256, 32], strides = [1, 1]} : vector<256x256xbf16> to vector<256x32xbf16>
    %31 = vector.shape_cast %27 : vector<256x32xbf16> to vector<1x256x32xbf16>
    %32 = vector.shape_cast %28 : vector<256x32xbf16> to vector<1x256x32xbf16>
    %33 = vector.shape_cast %29 : vector<256x32xbf16> to vector<1x256x32xbf16>
    %34 = vector.shape_cast %30 : vector<256x32xbf16> to vector<1x256x32xbf16>
    %35 = tpu.concatenate %31, %32, %33, %34 in 0 : vector<1x256x32xbf16>, vector<1x256x32xbf16>, vector<1x256x32xbf16>, vector<1x256x32xbf16> -> vector<4x256x32xbf16>
    %36 = vector.shape_cast %35 : vector<4x256x32xbf16> to vector<8x128x32xbf16>
    %37 = vector.extract_strided_slice %16 {offsets = [0, 128], sizes = [256, 32], strides = [1, 1]} : vector<256x256xbf16> to vector<256x32xbf16>
    %38 = vector.extract_strided_slice %16 {offsets = [0, 160], sizes = [256, 32], strides = [1, 1]} : vector<256x256xbf16> to vector<256x32xbf16>
    %39 = vector.extract_strided_slice %16 {offsets = [0, 192], sizes = [256, 32], strides = [1, 1]} : vector<256x256xbf16> to vector<256x32xbf16>
    %40 = vector.extract_strided_slice %16 {offsets = [0, 224], sizes = [256, 32], strides = [1, 1]} : vector<256x256xbf16> to vector<256x32xbf16>
    %41 = vector.shape_cast %37 : vector<256x32xbf16> to vector<1x256x32xbf16>
    %42 = vector.shape_cast %38 : vector<256x32xbf16> to vector<1x256x32xbf16>
    %43 = vector.shape_cast %39 : vector<256x32xbf16> to vector<1x256x32xbf16>
    %44 = vector.shape_cast %40 : vector<256x32xbf16> to vector<1x256x32xbf16>
    %45 = tpu.concatenate %41, %42, %43, %44 in 0 : vector<1x256x32xbf16>, vector<1x256x32xbf16>, vector<1x256x32xbf16>, vector<1x256x32xbf16> -> vector<4x256x32xbf16>
    %46 = vector.shape_cast %45 : vector<4x256x32xbf16> to vector<8x128x32xbf16>
    "tpu.trace_start"() <{level = 10 : i32, message = "bld,bsd->bls"}> : () -> ()
    %cst_14 = arith.constant dense<0.000000e+00> : vector<8x8x128xf32>
    %47 = tpu.matmul %26, %36, %cst_14 {dimension_numbers = #tpu.dot_dimension_numbers<[2], [2], [1], [1], [0, 0, 0, 1, 1, 1], [0], [0]>} : vector<8x8x32xbf16>, vector<8x128x32xbf16>, vector<8x8x128xf32> -> vector<8x8x128xf32>
    "tpu.trace_stop"() : () -> ()
    %cst_15 = arith.constant dense<0xFF800000> : vector<8x8xf32>
    %48 = vector.multi_reduction <maximumf>, %47, %cst_15 [2] : vector<8x8x128xf32> to vector<8x8xf32>
    %49 = vector.shape_cast %48 : vector<8x8xf32> to vector<8x8x1xf32>
    %50 = vector.broadcast %49 : vector<8x8x1xf32> to vector<8x8x128xf32>
    %51 = arith.subf %47, %50 : vector<8x8x128xf32>
    %52 = math.exp %51 : vector<8x8x128xf32>
    %cst_16 = arith.constant dense<0.000000e+00> : vector<8x8xf32>
    %53 = vector.multi_reduction <add>, %52, %cst_16 [2] : vector<8x8x128xf32> to vector<8x8xf32>
    %54 = vector.shape_cast %53 : vector<8x8xf32> to vector<8x8x1xf32>
    %55 = tpu.reciprocal %54 {approx = true} : vector<8x8x1xf32> -> vector<8x8x1xf32>
    %56 = arith.truncf %52 : vector<8x8x128xf32> to vector<8x8x128xbf16>
    "tpu.trace_start"() <{level = 10 : i32, message = "bls,bsd->bld"}> : () -> ()
    %cst_17 = arith.constant dense<0.000000e+00> : vector<8x8x32xf32>
    %57 = tpu.matmul %56, %46, %cst_17 {dimension_numbers = #tpu.dot_dimension_numbers<[2], [1], [1], [2], [0, 0, 0, 1, 1, 2], [0], [0]>} : vector<8x8x128xbf16>, vector<8x128x32xbf16>, vector<8x8x32xf32> -> vector<8x8x32xf32>
    "tpu.trace_stop"() : () -> ()
    %58 = vector.broadcast %55 : vector<8x8x1xf32> to vector<8x8x32xf32>
    %59 = arith.mulf %57, %58 : vector<8x8x32xf32>
    %60 = vector.shape_cast %59 : vector<8x8x32xf32> to vector<4x16x32xf32>
    %61 = vector.extract_strided_slice %60 {offsets = [0, 0, 0], sizes = [1, 16, 32], strides = [1, 1, 1]} : vector<4x16x32xf32> to vector<1x16x32xf32>
    %62 = vector.shape_cast %61 : vector<1x16x32xf32> to vector<16x32xf32>
    %63 = vector.extract_strided_slice %60 {offsets = [1, 0, 0], sizes = [1, 16, 32], strides = [1, 1, 1]} : vector<4x16x32xf32> to vector<1x16x32xf32>
    %64 = vector.shape_cast %63 : vector<1x16x32xf32> to vector<16x32xf32>
    %65 = vector.extract_strided_slice %60 {offsets = [2, 0, 0], sizes = [1, 16, 32], strides = [1, 1, 1]} : vector<4x16x32xf32> to vector<1x16x32xf32>
    %66 = vector.shape_cast %65 : vector<1x16x32xf32> to vector<16x32xf32>
    %67 = vector.extract_strided_slice %60 {offsets = [3, 0, 0], sizes = [1, 16, 32], strides = [1, 1, 1]} : vector<4x16x32xf32> to vector<1x16x32xf32>
    %68 = vector.shape_cast %67 : vector<1x16x32xf32> to vector<16x32xf32>
    %69 = tpu.concatenate %62, %64, %66, %68 in 1 : vector<16x32xf32>, vector<16x32xf32>, vector<16x32xf32>, vector<16x32xf32> -> vector<16x128xf32>
    %70 = arith.truncf %69 : vector<16x128xf32> to vector<16x128xbf16>
    %c0_18 = arith.constant 0 : index
    %c0_19 = arith.constant 0 : index
    %71 = vector.load %arg7[%c0_18, %c0_19] : memref<128x128xbf16, #tpu.memory_space<vmem>>, vector<128x128xbf16>
    %cst_20 = arith.constant dense<0.000000e+00> : vector<16x128xf32>
    %72 = tpu.matmul %70, %71, %cst_20 {dimension_numbers = #tpu.dot_dimension_numbers<[1], [0], [0], [1], [0, 0, 1, 1], [], []>} : vector<16x128xbf16>, vector<128x128xbf16>, vector<16x128xf32> -> vector<16x128xf32>
    %c0_21 = arith.constant 0 : index
    %c0_22 = arith.constant 0 : index
    %73 = vector.load %arg8[%c0_21, %c0_22] : memref<1x128xf32, #tpu.memory_space<vmem>>, vector<1x128xf32>
    %74 = vector.broadcast %73 : vector<1x128xf32> to vector<16x128xf32>
    %75 = arith.addf %72, %74 : vector<16x128xf32>
    %76 = arith.addf %75, %3 : vector<16x128xf32>
    %cst_23 = arith.constant dense<0.000000e+00> : vector<16xf32>
    %77 = vector.multi_reduction <add>, %76, %cst_23 [1] : vector<16x128xf32> to vector<16xf32>
    %78 = vector.shape_cast %77 : vector<16xf32> to vector<16x1xf32>
    %cst_24 = arith.constant 1.280000e+02 : f32
    %79 = vector.broadcast %cst_24 : f32 to vector<16x1xf32>
    %80 = arith.divf %78, %79 : vector<16x1xf32>
    %81 = vector.broadcast %80 : vector<16x1xf32> to vector<16x128xf32>
    %82 = arith.subf %76, %81 : vector<16x128xf32>
    %83 = arith.mulf %82, %82 : vector<16x128xf32>
    %cst_25 = arith.constant dense<0.000000e+00> : vector<16xf32>
    %84 = vector.multi_reduction <add>, %83, %cst_25 [1] : vector<16x128xf32> to vector<16xf32>
    %85 = vector.shape_cast %84 : vector<16xf32> to vector<16x1xf32>
    %cst_26 = arith.constant 1.280000e+02 : f32
    %86 = vector.broadcast %cst_26 : f32 to vector<16x1xf32>
    %87 = arith.divf %85, %86 : vector<16x1xf32>
    %88 = vector.broadcast %80 : vector<16x1xf32> to vector<16x128xf32>
    %89 = arith.subf %76, %88 : vector<16x128xf32>
    %cst_27 = arith.constant 9.99999974E-6 : f32
    %90 = vector.broadcast %cst_27 : f32 to vector<16x1xf32>
    %91 = arith.addf %87, %90 : vector<16x1xf32>
    %92 = math.rsqrt %91 : vector<16x1xf32>
    %93 = vector.broadcast %92 : vector<16x1xf32> to vector<16x128xf32>
    %94 = arith.mulf %89, %93 : vector<16x128xf32>
    %c0_28 = arith.constant 0 : index
    %c0_29 = arith.constant 0 : index
    %95 = vector.load %arg9[%c0_28, %c0_29] : memref<1x128xf32, #tpu.memory_space<vmem>>, vector<1x128xf32>
    %96 = vector.broadcast %95 : vector<1x128xf32> to vector<16x128xf32>
    %97 = arith.mulf %94, %96 : vector<16x128xf32>
    %c0_30 = arith.constant 0 : index
    %c0_31 = arith.constant 0 : index
    %98 = vector.load %arg10[%c0_30, %c0_31] : memref<1x128xf32, #tpu.memory_space<vmem>>, vector<1x128xf32>
    %99 = vector.broadcast %98 : vector<1x128xf32> to vector<16x128xf32>
    %100 = arith.addf %97, %99 : vector<16x128xf32>
    %101 = arith.truncf %100 : vector<16x128xf32> to vector<16x128xbf16>
    %c0_32 = arith.constant 0 : index
    %c0_33 = arith.constant 0 : index
    %102 = vector.load %arg11[%c0_32, %c0_33] : memref<128x256xbf16, #tpu.memory_space<vmem>>, vector<128x256xbf16>
    %cst_34 = arith.constant dense<0.000000e+00> : vector<16x256xf32>
    %103 = tpu.matmul %101, %102, %cst_34 {dimension_numbers = #tpu.dot_dimension_numbers<[1], [0], [0], [1], [0, 0, 1, 1], [], []>} : vector<16x128xbf16>, vector<128x256xbf16>, vector<16x256xf32> -> vector<16x256xf32>
    %c0_35 = arith.constant 0 : index
    %c0_36 = arith.constant 0 : index
    %104 = vector.load %arg12[%c0_35, %c0_36] : memref<1x256xf32, #tpu.memory_space<vmem>>, vector<1x256xf32>
    %105 = vector.broadcast %104 : vector<1x256xf32> to vector<16x256xf32>
    %106 = arith.addf %103, %105 : vector<16x256xf32>
    %cst_37 = arith.constant 5.000000e-01 : f32
    %107 = vector.broadcast %cst_37 : f32 to vector<16x256xf32>
    %108 = arith.mulf %107, %106 : vector<16x256xf32>
    %cst_38 = arith.constant 0.707106769 : f32
    %109 = vector.broadcast %cst_38 : f32 to vector<16x256xf32>
    %110 = arith.mulf %106, %109 : vector<16x256xf32>
    %111 = math.erf %110 : vector<16x256xf32>
    %cst_39 = arith.constant 1.000000e+00 : f32
    %112 = vector.broadcast %cst_39 : f32 to vector<16x256xf32>
    %113 = arith.addf %112, %111 : vector<16x256xf32>
    %114 = arith.mulf %108, %113 : vector<16x256xf32>
    %115 = arith.truncf %114 : vector<16x256xf32> to vector<16x256xbf16>
    %c0_40 = arith.constant 0 : index
    %c0_41 = arith.constant 0 : index
    %116 = vector.load %arg13[%c0_40, %c0_41] : memref<256x128xbf16, #tpu.memory_space<vmem>>, vector<256x128xbf16>
    %cst_42 = arith.constant dense<0.000000e+00> : vector<16x128xf32>
    %117 = tpu.matmul %115, %116, %cst_42 {dimension_numbers = #tpu.dot_dimension_numbers<[1], [0], [0], [1], [0, 0, 1, 1], [], []>} : vector<16x256xbf16>, vector<256x128xbf16>, vector<16x128xf32> -> vector<16x128xf32>
    %c0_43 = arith.constant 0 : index
    %c0_44 = arith.constant 0 : index
    %118 = vector.load %arg14[%c0_43, %c0_44] : memref<1x128xf32, #tpu.memory_space<vmem>>, vector<1x128xf32>
    %119 = vector.broadcast %118 : vector<1x128xf32> to vector<16x128xf32>
    %120 = arith.addf %117, %119 : vector<16x128xf32>
    %121 = arith.addf %120, %76 : vector<16x128xf32>
    %122 = vector.shape_cast %121 : vector<16x128xf32> to vector<2x8x128xf32>
    %c0_45 = arith.constant 0 : index
    %c0_46 = arith.constant 0 : index
    %c0_47 = arith.constant 0 : index
    %123 = vector.load %arg15[%c0_45, %c0_46, %c0_47] : memref<2x8x128xf32, #tpu.memory_space<vmem>>, vector<2x8x128xf32>
    tpu.vector_store %arg15[%c0_45, %c0_46, %c0_47], %122 {strides = array<i32>} : memref<2x8x128xf32, #tpu.memory_space<vmem>>, vector<2x8x128xf32>,
    return
  }
  func.func @transform_0(%arg0: i32) -> (i32, i32, i32) {
    %c0_i32 = arith.constant 0 : i32
    %c0_i32_0 = arith.constant 0 : i32
    %c0_i32_1 = arith.constant 0 : i32
    return %arg0, %c0_i32, %c0_i32_0 : i32, i32, i32
  }
  func.func @transform_1(%arg0: i32) -> (i32, i32, i32) {
    %c0_i32 = arith.constant 0 : i32
    %c0_i32_0 = arith.constant 0 : i32
    %c0_i32_1 = arith.constant 0 : i32
    return %arg0, %c0_i32, %c0_i32_0 : i32, i32, i32
  }
  func.func @transform_2(%arg0: i32) -> (i32, i32) {
    %c0_i32 = arith.constant 0 : i32
    %c0_i32_0 = arith.constant 0 : i32
    %c0_i32_1 = arith.constant 0 : i32
    return %c0_i32, %c0_i32_0 : i32, i32
  }
  func.func @transform_3(%arg0: i32) -> (i32, i32) {
    %c0_i32 = arith.constant 0 : i32
    %c0_i32_0 = arith.constant 0 : i32
    %c0_i32_1 = arith.constant 0 : i32
    return %c0_i32, %c0_i32_0 : i32, i32
  }
  func.func @transform_4(%arg0: i32) -> (i32, i32) {
    %c0_i32 = arith.constant 0 : i32
    %c0_i32_0 = arith.constant 0 : i32
    %c0_i32_1 = arith.constant 0 : i32
    return %c0_i32, %c0_i32_0 : i32, i32
  }
  func.func @transform_5(%arg0: i32) -> (i32, i32) {
    %c0_i32 = arith.constant 0 : i32
    %c0_i32_0 = arith.constant 0 : i32
    %c0_i32_1 = arith.constant 0 : i32
    return %c0_i32, %c0_i32_0 : i32, i32
  }
  func.func @transform_6(%arg0: i32) -> (i32, i32) {
    %c0_i32 = arith.constant 0 : i32
    %c0_i32_0 = arith.constant 0 : i32
    %c0_i32_1 = arith.constant 0 : i32
    return %c0_i32, %c0_i32_0 : i32, i32
  }
  func.func @transform_7(%arg0: i32) -> (i32, i32) {
    %c0_i32 = arith.constant 0 : i32
    %c0_i32_0 = arith.constant 0 : i32
    %c0_i32_1 = arith.constant 0 : i32
    return %c0_i32, %c0_i32_0 : i32, i32
  }
  func.func @transform_8(%arg0: i32) -> (i32, i32) {
    %c0_i32 = arith.constant 0 : i32
    %c0_i32_0 = arith.constant 0 : i32
    %c0_i32_1 = arith.constant 0 : i32
    return %c0_i32, %c0_i32_0 : i32, i32
  }
  func.func @transform_9(%arg0: i32) -> (i32, i32) {
    %c0_i32 = arith.constant 0 : i32
    %c0_i32_0 = arith.constant 0 : i32
    %c0_i32_1 = arith.constant 0 : i32
    return %c0_i32, %c0_i32_0 : i32, i32
  }
  func.func @transform_10(%arg0: i32) -> (i32, i32) {
    %c0_i32 = arith.constant 0 : i32
    %c0_i32_0 = arith.constant 0 : i32
    %c0_i32_1 = arith.constant 0 : i32
    return %c0_i32, %c0_i32_0 : i32, i32
  }
  func.func @transform_11(%arg0: i32) -> (i32, i32) {
    %c0_i32 = arith.constant 0 : i32
    %c0_i32_0 = arith.constant 0 : i32
    %c0_i32_1 = arith.constant 0 : i32
    return %c0_i32, %c0_i32_0 : i32, i32
  }
  func.func @transform_12(%arg0: i32) -> (i32, i32) {
    %c0_i32 = arith.constant 0 : i32
    %c0_i32_0 = arith.constant 0 : i32
    %c0_i32_1 = arith.constant 0 : i32
    return %c0_i32, %c0_i32_0 : i32, i32
  }
  func.func @transform_13(%arg0: i32) -> (i32, i32) {
    %c0_i32 = arith.constant 0 : i32
    %c0_i32_0 = arith.constant 0 : i32
    %c0_i32_1 = arith.constant 0 : i32
    return %c0_i32, %c0_i32_0 : i32, i32
  }
  func.func @transform_14(%arg0: i32) -> (i32, i32, i32) {
    %c0_i32 = arith.constant 0 : i32
    %c0_i32_0 = arith.constant 0 : i32
    %c0_i32_1 = arith.constant 0 : i32
    return %arg0, %c0_i32, %c0_i32_0 : i32, i32, i32
  }
}

</mosaic_0001>

<llo_original>
// kernel: tpu_custom_call.1
$region0: #{tpu_custom_call.1}
  #allocation0 [shape = 'u32[]', space=smem, size = 0x4, offset = 0x4, fixed_abs, tag = 'smem constant byte address 0x4 - core index']
  #allocation1 [shape = 'u32[144,128]{1,0:T(1,128)}', space=vmem, size = 0x12000, scoped, tag = 'internal scratch']
  %s0 = inlined_call_operand.hbm [shape: bf16[4,128,128], index: 0, kind: input, shape index: {}]
  %s1 = inlined_call_operand.hbm [shape: f32[4,8,128], index: 1, kind: input, shape index: {}]
  %s2 = inlined_call_operand.hbm [shape: bf16[128,128], index: 2, kind: input, shape index: {}]
  %s3 = inlined_call_operand.hbm [shape: f32[1,128], index: 3, kind: input, shape index: {}]
  %s4 = inlined_call_operand.hbm [shape: bf16[128,256], index: 4, kind: input, shape index: {}]
  %s5 = inlined_call_operand.hbm [shape: f32[1,256], index: 5, kind: input, shape index: {}]
  %s6 = inlined_call_operand.hbm [shape: bf16[128,128], index: 6, kind: input, shape index: {}]
  %s7 = inlined_call_operand.hbm [shape: f32[1,128], index: 7, kind: input, shape index: {}]
  %s8 = inlined_call_operand.hbm [shape: f32[1,128], index: 8, kind: input, shape index: {}]
  %s9 = inlined_call_operand.hbm [shape: f32[1,128], index: 9, kind: input, shape index: {}]
  %s10 = inlined_call_operand.hbm [shape: bf16[128,256], index: 10, kind: input, shape index: {}]
  %s11 = inlined_call_operand.hbm [shape: f32[1,256], index: 11, kind: input, shape index: {}]
  %s12 = inlined_call_operand.hbm [shape: bf16[256,128], index: 12, kind: input, shape index: {}]
  %s13 = inlined_call_operand.hbm [shape: f32[1,128], index: 13, kind: input, shape index: {}]
  %s14 = inlined_call_operand.hbm [shape: f32[4,8,128], index: 14, kind: output, shape index: {}]
  %s15 = sld [smem:[#allocation0]]
  $region145: #{tpu_custom_call.1} parent=0
    _
  %s17 = ssub.s32 1, %s15
  %s18 = scalar_select 0, %s17, %s15
  $region1: #{tpu_custom_call.1} parent=0
    #allocation2 [shape = 'u8[131072]{0}', space=vmem, size = 0x20000, scoped, tag = 'input window, operand 0']
    #allocation3 [shape = 's32[2]{0}', space=sflag, size = 0x8, scoped, tag = 'scoped memory for tpu_custom_call.1']
    #allocation4 [shape = 's32[2]{0}', space=sflag, size = 0x8, scoped, tag = 'scoped memory for tpu_custom_call.1']
    #allocation5 [shape = 'u8[16384]{0}', space=vmem, size = 0x4000, scoped, tag = 'input window, operand 1']
    #allocation6 [shape = 's32[2]{0}', space=sflag, size = 0x8, scoped, tag = 'scoped memory for tpu_custom_call.1']
    #allocation7 [shape = 'u8[32768]{0}', space=vmem, size = 0x8000, scoped, tag = 'input window, operand 2, single buffered']
    #allocation8 [shape = 'u8[512]{0}', space=vmem, size = 0x400, scoped, tag = 'input window, operand 3, single buffered']
    #allocation9 [shape = 's32[1]{0}', space=sflag, size = 0x4, scoped, tag = 'scoped memory for tpu_custom_call.1']
    #allocation10 [shape = 'u8[65536]{0}', space=vmem, size = 0x10000, scoped, tag = 'input window, operand 4, single buffered']
    #allocation11 [shape = 'u8[1024]{0}', space=vmem, size = 0x400, scoped, tag = 'input window, operand 5, single buffered']
    #allocation12 [shape = 's32[1]{0}', space=sflag, size = 0x4, scoped, tag = 'scoped memory for tpu_custom_call.1']
    #allocation13 [shape = 'u8[32768]{0}', space=vmem, size = 0x8000, scoped, tag = 'input window, operand 6, single buffered']
    #allocation14 [shape = 'u8[512]{0}', space=vmem, size = 0x400, scoped, tag = 'input window, operand 7, single buffered']
    #allocation15 [shape = 's32[1]{0}', space=sflag, size = 0x4, scoped, tag = 'scoped memory for tpu_custom_call.1']
    #allocation16 [shape = 'u8[512]{0}', space=vmem, size = 0x400, scoped, tag = 'input window, operand 8, single buffered']
    #allocation17 [shape = 'u8[512]{0}', space=vmem, size = 0x400, scoped, tag = 'input window, operand 9, single buffered']
    #allocation18 [shape = 's32[1]{0}', space=sflag, size = 0x4, scoped, tag = 'scoped memory for tpu_custom_call.1']
    #allocation19 [shape = 'u8[65536]{0}', space=vmem, size = 0x10000, scoped, tag = 'input window, operand 10, single buffered']
    #allocation20 [shape = 'u8[1024]{0}', space=vmem, size = 0x400, scoped, tag = 'input window, operand 11, single buffered']
    #allocation21 [shape = 's32[1]{0}', space=sflag, size = 0x4, scoped, tag = 'scoped memory for tpu_custom_call.1']
    #allocation22 [shape = 'u8[65536]{0}', space=vmem, size = 0x10000, scoped, tag = 'input window, operand 12, single buffered']
    #allocation23 [shape = 'u8[512]{0}', space=vmem, size = 0x400, scoped, tag = 'input window, operand 13, single buffered']
    #allocation24 [shape = 's32[1]{0}', space=sflag, size = 0x4, scoped, tag = 'scoped memory for tpu_custom_call.1']
    #allocation25 [shape = 'u8[16384]{0}', space=vmem, size = 0x4000, scoped, tag = 'output window, operand 0']
    %19 = vsyncpa [#allocation3], 0
    %s20 = scalar_lea.sflag [#allocation3], 1
    %21 = vsyncpa %s20, 0
    %22 = vsyncpa [#allocation6], 0
    %s23 = scalar_lea.sflag [#allocation6], 1
    %24 = vsyncpa %s23, 0
    %25 = vsyncpa [#allocation9], 0
    %26 = vsyncpa [#allocation12], 0
    %27 = vsyncpa [#allocation15], 0
    %28 = vsyncpa [#allocation18], 0
    %29 = vsyncpa [#allocation21], 0
    %30 = vsyncpa [#allocation24], 0
    %31 = vsyncpa [#allocation4], 0
    %s32 = scalar_lea.sflag [#allocation4], 1
    %33 = vsyncpa %s32, 0
    loop: start=0, step=1, limit=4
    $region2: #{tpu_custom_call.1} parent=1 // loop_pre_header
      _
    $region3: #{tpu_custom_call.1} parent=1 // loop_header
      %s35 = sphi 0, %s39
      %p36 = scmp.ge.s32.totalorder %s35, 4
      %s45 = sphi 0, %s47
      %s48 = sphi 0, %s45
      %s49 = sphi 0, %s48
      %s65 = sphi 0, %s49
      %s71 = sphi 0, %s73
      %s74 = sphi 0, %s71
      %s75 = sphi 0, %s74
      %s91 = sphi 0, %s75
      %s95 = sphi 0, %s95
      %s97 = sphi 0, %s95
      %s98 = sphi 0, %s97
      %s112 = sphi 0, %s98
      %s116 = sphi 0, %s116
      %s118 = sphi 0, %s116
      %s119 = sphi 0, %s118
      %s133 = sphi 0, %s119
      %s137 = sphi 0, %s137
      %s139 = sphi 0, %s137
      %s140 = sphi 0, %s139
      %s154 = sphi 0, %s140
      %s158 = sphi 0, %s158
      %s160 = sphi 0, %s158
      %s161 = sphi 0, %s160
      %s175 = sphi 0, %s161
      %s179 = sphi 0, %s179
      %s181 = sphi 0, %s179
      %s182 = sphi 0, %s181
      %s196 = sphi 0, %s182
      %s200 = sphi 0, %s200
      %s202 = sphi 0, %s200
      %s203 = sphi 0, %s202
      %s217 = sphi 0, %s203
      %s221 = sphi 0, %s221
      %s223 = sphi 0, %s221
      %s224 = sphi 0, %s223
      %s238 = sphi 0, %s224
      %s242 = sphi 0, %s242
      %s244 = sphi 0, %s242
      %s245 = sphi 0, %s244
      %s259 = sphi 0, %s245
      %s263 = sphi 0, %s263
      %s265 = sphi 0, %s263
      %s266 = sphi 0, %s265
      %s280 = sphi 0, %s266
      %s284 = sphi 0, %s284
      %s286 = sphi 0, %s284
      %s287 = sphi 0, %s286
      %s301 = sphi 0, %s287
      %s305 = sphi 0, %s305
      %s307 = sphi 0, %s305
      %s308 = sphi 0, %s307
      %s322 = sphi 0, %s308
      %s326 = sphi 0, %s326
      %s328 = sphi 0, %s326
      %s329 = sphi 0, %s328
      %s343 = sphi 0, %s329
      %s349 = sphi 0, %s351
      %s352 = sphi 0, %s349
      %s353 = sphi 0, %s352
      %s369 = sphi 0, %s353
    $region4: #{tpu_custom_call.1} parent=1 // loop_header_branch
      %38 = sbr.rel (%p36) target = $region8
    $region5: #{tpu_custom_call.1} parent=1 // loop_body
      %s40 = ssub.s32 %s35, 1
      %s41 = ssub.s32 %s35, 2
      %s42 = sadd.s32 %s35, 1
      %s43 = ssub.s32 %s35, %s42
      %p44 = scmp.eq.s32.totalorder %s43, 0
      %s46 = sadd.s32 %s45, 1
      %s47 = scalar_select %p44, %s45, %s46
      %p50 = pneg %p44
      %p51 = scmp.eq.s32.totalorder %s35, 1
      %p52 = por %p50, %p51
      %p53 = scmp.ne.s32.totalorder %s45, %s48
      %p54 = scmp.eq.s32.totalorder %s35, 0
      %p55 = por %p53, %p54
      %p56 = scmp.ne.s32.totalorder %s45, %s48
      %p57 = scmp.eq.s32.totalorder %s40, 1
      %p58 = por %p56, %p57
      %p59 = scmp.ne.s32.totalorder %s48, %s49
      %p60 = scmp.eq.s32.totalorder %s40, 0
      %p61 = por %p59, %p60
      %p62 = scmp.ne.s32.totalorder %s48, %s49
      %p63 = scmp.eq.s32.totalorder %s41, 1
      %p64 = por %p62, %p63
      %p66 = scmp.ne.s32.totalorder %s49, %s65
      %p67 = scmp.eq.s32.totalorder %s41, 0
      %p68 = por %p66, %p67
      %s69 = ssub.s32 %s35, %s42
      %p70 = scmp.eq.s32.totalorder %s69, 0
      %s72 = sadd.s32 %s71, 1
      %s73 = scalar_select %p70, %s71, %s72
      %p76 = pneg %p70
      %p77 = scmp.eq.s32.totalorder %s35, 1
      %p78 = por %p76, %p77
      %p79 = scmp.ne.s32.totalorder %s71, %s74
      %p80 = scmp.eq.s32.totalorder %s35, 0
      %p81 = por %p79, %p80
      %p82 = scmp.ne.s32.totalorder %s71, %s74
      %p83 = scmp.eq.s32.totalorder %s40, 1
      %p84 = por %p82, %p83
      %p85 = scmp.ne.s32.totalorder %s74, %s75
      %p86 = scmp.eq.s32.totalorder %s40, 0
      %p87 = por %p85, %p86
      %p88 = scmp.ne.s32.totalorder %s74, %s75
      %p89 = scmp.eq.s32.totalorder %s41, 1
      %p90 = por %p88, %p89
      %p92 = scmp.ne.s32.totalorder %s75, %s91
      %p93 = scmp.eq.s32.totalorder %s41, 0
      %p94 = por %p92, %p93
      %s96 = sadd.s32 %s95, 1
      %p99 = scmp.eq.s32.totalorder %s35, 1
      %p100 = scmp.ne.s32.totalorder %s95, %s97
      %p101 = scmp.eq.s32.totalorder %s35, 0
      %p102 = por %p100, %p101
      %p103 = scmp.ne.s32.totalorder %s95, %s97
      %p104 = scmp.eq.s32.totalorder %s40, 1
      %p105 = por %p103, %p104
      %p106 = scmp.ne.s32.totalorder %s97, %s98
      %p107 = scmp.eq.s32.totalorder %s40, 0
      %p108 = por %p106, %p107
      %p109 = scmp.ne.s32.totalorder %s97, %s98
      %p110 = scmp.eq.s32.totalorder %s41, 1
      %p111 = por %p109, %p110
      %p113 = scmp.ne.s32.totalorder %s98, %s112
      %p114 = scmp.eq.s32.totalorder %s41, 0
      %p115 = por %p113, %p114
      %s117 = sadd.s32 %s116, 1
      %p120 = scmp.eq.s32.totalorder %s35, 1
      %p121 = scmp.ne.s32.totalorder %s116, %s118
      %p122 = scmp.eq.s32.totalorder %s35, 0
      %p123 = por %p121, %p122
      %p124 = scmp.ne.s32.totalorder %s116, %s118
      %p125 = scmp.eq.s32.totalorder %s40, 1
      %p126 = por %p124, %p125
      %p127 = scmp.ne.s32.totalorder %s118, %s119
      %p128 = scmp.eq.s32.totalorder %s40, 0
      %p129 = por %p127, %p128
      %p130 = scmp.ne.s32.totalorder %s118, %s119
      %p131 = scmp.eq.s32.totalorder %s41, 1
      %p132 = por %p130, %p131
      %p134 = scmp.ne.s32.totalorder %s119, %s133
      %p135 = scmp.eq.s32.totalorder %s41, 0
      %p136 = por %p134, %p135
      %s138 = sadd.s32 %s137, 1
      %p141 = scmp.eq.s32.totalorder %s35, 1
      %p142 = scmp.ne.s32.totalorder %s137, %s139
      %p143 = scmp.eq.s32.totalorder %s35, 0
      %p144 = por %p142, %p143
      %p145 = scmp.ne.s32.totalorder %s137, %s139
      %p146 = scmp.eq.s32.totalorder %s40, 1
      %p147 = por %p145, %p146
      %p148 = scmp.ne.s32.totalorder %s139, %s140
      %p149 = scmp.eq.s32.totalorder %s40, 0
      %p150 = por %p148, %p149
      %p151 = scmp.ne.s32.totalorder %s139, %s140
      %p152 = scmp.eq.s32.totalorder %s41, 1
      %p153 = por %p151, %p152
      %p155 = scmp.ne.s32.totalorder %s140, %s154
      %p156 = scmp.eq.s32.totalorder %s41, 0
      %p157 = por %p155, %p156
      %s159 = sadd.s32 %s158, 1
      %p162 = scmp.eq.s32.totalorder %s35, 1
      %p163 = scmp.ne.s32.totalorder %s158, %s160
      %p164 = scmp.eq.s32.totalorder %s35, 0
      %p165 = por %p163, %p164
      %p166 = scmp.ne.s32.totalorder %s158, %s160
      %p167 = scmp.eq.s32.totalorder %s40, 1
      %p168 = por %p166, %p167
      %p169 = scmp.ne.s32.totalorder %s160, %s161
      %p170 = scmp.eq.s32.totalorder %s40, 0
      %p171 = por %p169, %p170
      %p172 = scmp.ne.s32.totalorder %s160, %s161
      %p173 = scmp.eq.s32.totalorder %s41, 1
      %p174 = por %p172, %p173
      %p176 = scmp.ne.s32.totalorder %s161, %s175
      %p177 = scmp.eq.s32.totalorder %s41, 0
      %p178 = por %p176, %p177
      %s180 = sadd.s32 %s179, 1
      %p183 = scmp.eq.s32.totalorder %s35, 1
      %p184 = scmp.ne.s32.totalorder %s179, %s181
      %p185 = scmp.eq.s32.totalorder %s35, 0
      %p186 = por %p184, %p185
      %p187 = scmp.ne.s32.totalorder %s179, %s181
      %p188 = scmp.eq.s32.totalorder %s40, 1
      %p189 = por %p187, %p188
      %p190 = scmp.ne.s32.totalorder %s181, %s182
      %p191 = scmp.eq.s32.totalorder %s40, 0
      %p192 = por %p190, %p191
      %p193 = scmp.ne.s32.totalorder %s181, %s182
      %p194 = scmp.eq.s32.totalorder %s41, 1
      %p195 = por %p193, %p194
      %p197 = scmp.ne.s32.totalorder %s182, %s196
      %p198 = scmp.eq.s32.totalorder %s41, 0
      %p199 = por %p197, %p198
      %s201 = sadd.s32 %s200, 1
      %p204 = scmp.eq.s32.totalorder %s35, 1
      %p205 = scmp.ne.s32.totalorder %s200, %s202
      %p206 = scmp.eq.s32.totalorder %s35, 0
      %p207 = por %p205, %p206
      %p208 = scmp.ne.s32.totalorder %s200, %s202
      %p209 = scmp.eq.s32.totalorder %s40, 1
      %p210 = por %p208, %p209
      %p211 = scmp.ne.s32.totalorder %s202, %s203
      %p212 = scmp.eq.s32.totalorder %s40, 0
      %p213 = por %p211, %p212
      %p214 = scmp.ne.s32.totalorder %s202, %s203
      %p215 = scmp.eq.s32.totalorder %s41, 1
      %p216 = por %p214, %p215
      %p218 = scmp.ne.s32.totalorder %s203, %s217
      %p219 = scmp.eq.s32.totalorder %s41, 0
      %p220 = por %p218, %p219
      %s222 = sadd.s32 %s221, 1
      %p225 = scmp.eq.s32.totalorder %s35, 1
      %p226 = scmp.ne.s32.totalorder %s221, %s223
      %p227 = scmp.eq.s32.totalorder %s35, 0
      %p228 = por %p226, %p227
      %p229 = scmp.ne.s32.totalorder %s221, %s223
      %p230 = scmp.eq.s32.totalorder %s40, 1
      %p231 = por %p229, %p230
      %p232 = scmp.ne.s32.totalorder %s223, %s224
      %p233 = scmp.eq.s32.totalorder %s40, 0
      %p234 = por %p232, %p233
      %p235 = scmp.ne.s32.totalorder %s223, %s224
      %p236 = scmp.eq.s32.totalorder %s41, 1
      %p237 = por %p235, %p236
      %p239 = scmp.ne.s32.totalorder %s224, %s238
      %p240 = scmp.eq.s32.totalorder %s41, 0
      %p241 = por %p239, %p240
      %s243 = sadd.s32 %s242, 1
      %p246 = scmp.eq.s32.totalorder %s35, 1
      %p247 = scmp.ne.s32.totalorder %s242, %s244
      %p248 = scmp.eq.s32.totalorder %s35, 0
      %p249 = por %p247, %p248
      %p250 = scmp.ne.s32.totalorder %s242, %s244
      %p251 = scmp.eq.s32.totalorder %s40, 1
      %p252 = por %p250, %p251
      %p253 = scmp.ne.s32.totalorder %s244, %s245
      %p254 = scmp.eq.s32.totalorder %s40, 0
      %p255 = por %p253, %p254
      %p256 = scmp.ne.s32.totalorder %s244, %s245
      %p257 = scmp.eq.s32.totalorder %s41, 1
      %p258 = por %p256, %p257
      %p260 = scmp.ne.s32.totalorder %s245, %s259
      %p261 = scmp.eq.s32.totalorder %s41, 0
      %p262 = por %p260, %p261
      %s264 = sadd.s32 %s263, 1
      %p267 = scmp.eq.s32.totalorder %s35, 1
      %p268 = scmp.ne.s32.totalorder %s263, %s265
      %p269 = scmp.eq.s32.totalorder %s35, 0
      %p270 = por %p268, %p269
      %p271 = scmp.ne.s32.totalorder %s263, %s265
      %p272 = scmp.eq.s32.totalorder %s40, 1
      %p273 = por %p271, %p272
      %p274 = scmp.ne.s32.totalorder %s265, %s266
      %p275 = scmp.eq.s32.totalorder %s40, 0
      %p276 = por %p274, %p275
      %p277 = scmp.ne.s32.totalorder %s265, %s266
      %p278 = scmp.eq.s32.totalorder %s41, 1
      %p279 = por %p277, %p278
      %p281 = scmp.ne.s32.totalorder %s266, %s280
      %p282 = scmp.eq.s32.totalorder %s41, 0
      %p283 = por %p281, %p282
      %s285 = sadd.s32 %s284, 1
      %p288 = scmp.eq.s32.totalorder %s35, 1
      %p289 = scmp.ne.s32.totalorder %s284, %s286
      %p290 = scmp.eq.s32.totalorder %s35, 0
      %p291 = por %p289, %p290
      %p292 = scmp.ne.s32.totalorder %s284, %s286
      %p293 = scmp.eq.s32.totalorder %s40, 1
      %p294 = por %p292, %p293
      %p295 = scmp.ne.s32.totalorder %s286, %s287
      %p296 = scmp.eq.s32.totalorder %s40, 0
      %p297 = por %p295, %p296
      %p298 = scmp.ne.s32.totalorder %s286, %s287
      %p299 = scmp.eq.s32.totalorder %s41, 1
      %p300 = por %p298, %p299
      %p302 = scmp.ne.s32.totalorder %s287, %s301
      %p303 = scmp.eq.s32.totalorder %s41, 0
      %p304 = por %p302, %p303
      %s306 = sadd.s32 %s305, 1
      %p309 = scmp.eq.s32.totalorder %s35, 1
      %p310 = scmp.ne.s32.totalorder %s305, %s307
      %p311 = scmp.eq.s32.totalorder %s35, 0
      %p312 = por %p310, %p311
      %p313 = scmp.ne.s32.totalorder %s305, %s307
      %p314 = scmp.eq.s32.totalorder %s40, 1
      %p315 = por %p313, %p314
      %p316 = scmp.ne.s32.totalorder %s307, %s308
      %p317 = scmp.eq.s32.totalorder %s40, 0
      %p318 = por %p316, %p317
      %p319 = scmp.ne.s32.totalorder %s307, %s308
      %p320 = scmp.eq.s32.totalorder %s41, 1
      %p321 = por %p319, %p320
      %p323 = scmp.ne.s32.totalorder %s308, %s322
      %p324 = scmp.eq.s32.totalorder %s41, 0
      %p325 = por %p323, %p324
      %s327 = sadd.s32 %s326, 1
      %p330 = scmp.eq.s32.totalorder %s35, 1
      %p331 = scmp.ne.s32.totalorder %s326, %s328
      %p332 = scmp.eq.s32.totalorder %s35, 0
      %p333 = por %p331, %p332
      %p334 = scmp.ne.s32.totalorder %s326, %s328
      %p335 = scmp.eq.s32.totalorder %s40, 1
      %p336 = por %p334, %p335
      %p337 = scmp.ne.s32.totalorder %s328, %s329
      %p338 = scmp.eq.s32.totalorder %s40, 0
      %p339 = por %p337, %p338
      %p340 = scmp.ne.s32.totalorder %s328, %s329
      %p341 = scmp.eq.s32.totalorder %s41, 1
      %p342 = por %p340, %p341
      %p344 = scmp.ne.s32.totalorder %s329, %s343
      %p345 = scmp.eq.s32.totalorder %s41, 0
      %p346 = por %p344, %p345
      %s347 = ssub.s32 %s35, %s42
      %p348 = scmp.eq.s32.totalorder %s347, 0
      %s350 = sadd.s32 %s349, 1
      %s351 = scalar_select %p348, %s349, %s350
      %p354 = pneg %p348
      %p355 = scmp.eq.s32.totalorder %s35, 1
      %p356 = por %p354, %p355
      %p357 = scmp.ne.s32.totalorder %s349, %s352
      %p358 = scmp.eq.s32.totalorder %s35, 0
      %p359 = por %p357, %p358
      %p360 = scmp.ne.s32.totalorder %s349, %s352
      %p361 = scmp.eq.s32.totalorder %s40, 1
      %p362 = por %p360, %p361
      %p363 = scmp.ne.s32.totalorder %s352, %s353
      %p364 = scmp.eq.s32.totalorder %s40, 0
      %p365 = por %p363, %p364
      %p366 = scmp.ne.s32.totalorder %s352, %s353
      %p367 = scmp.eq.s32.totalorder %s41, 1
      %p368 = por %p366, %p367
      %p370 = scmp.ne.s32.totalorder %s353, %s369
      %p371 = scmp.eq.s32.totalorder %s41, 0
      %p372 = por %p370, %p371
      %p373 = scmp.le.s32.totalorder 1, %s35
      %p374 = scmp.lt.s32.totalorder %s35, 3
      %p375 = pnand %p373, %p374
      %p376 = pneg %p375
      // Predicated region
      $region9: #{tpu_custom_call.1} parent=5 // pred_check
        _
      $region10: #{tpu_custom_call.1} parent=5 // pred_check_branch
        %378 = sbr.rel (%p375) target = $region12
      $region11: #{tpu_custom_call.1} parent=5 // pred_region
        %s379 = ssub.s32 %s35, 1
        // Predicated region
        $region13: #{tpu_custom_call.1} parent=11 // pred_check
          %p380 = pneg %p108
        $region14: #{tpu_custom_call.1} parent=11 // pred_check_branch
          %382 = sbr.rel (%p380) target = $region16
        $region15: #{tpu_custom_call.1} parent=11 // pred_region
          %s384 = ssub.s32 1024, 1024
          %385 = vsyncadd [#allocation6], %s384
          %s386 = sshll.u32 [#allocation7], 4
          %s387 = int_to_ptr.vmem [resolvable:$true] %s386
          %392 = dma.hbm_to_vmem [thread:$0]  %s2, 1024, %s387, [#allocation6], 64, 64, 4
        $region16: #{tpu_custom_call.1} parent=11 // pred_fallthru
          _
        // Predicated region
        $region17: #{tpu_custom_call.1} parent=11 // pred_check
          %p393 = pneg %p129
        $region18: #{tpu_custom_call.1} parent=11 // pred_check_branch
          %395 = sbr.rel (%p393) target = $region20
        $region19: #{tpu_custom_call.1} parent=11 // pred_region
          %s397 = ssub.s32 16, 16
          %398 = vsyncadd [#allocation9], %s397
          %s400 = sshll.u32 [#allocation8], 4
          %s401 = int_to_ptr.vmem [resolvable:$true] %s400
          %403 = dma.hbm_to_vmem [thread:$0]  %s3, 16, %s401, [#allocation9]
        $region20: #{tpu_custom_call.1} parent=11 // pred_fallthru
          _
        // Predicated region
        $region21: #{tpu_custom_call.1} parent=11 // pred_check
          %p404 = pneg %p150
        $region22: #{tpu_custom_call.1} parent=11 // pred_check_branch
          %406 = sbr.rel (%p404) target = $region24
        $region23: #{tpu_custom_call.1} parent=11 // pred_region
          %s408 = ssub.s32 2048, 2048
          %409 = vsyncadd [#allocation9], %s408
          %s410 = sshll.u32 [#allocation10], 4
          %s411 = int_to_ptr.vmem [resolvable:$true] %s410
          %416 = dma.hbm_to_vmem [thread:$0]  %s4, 2048, %s411, [#allocation9], 128, 128, 8
        $region24: #{tpu_custom_call.1} parent=11 // pred_fallthru
          _
        // Predicated region
        $region25: #{tpu_custom_call.1} parent=11 // pred_check
          %p417 = pneg %p171
        $region26: #{tpu_custom_call.1} parent=11 // pred_check_branch
          %419 = sbr.rel (%p417) target = $region28
        $region27: #{tpu_custom_call.1} parent=11 // pred_region
          %s421 = ssub.s32 32, 32
          %422 = vsyncadd [#allocation12], %s421
          %s424 = sshll.u32 [#allocation11], 4
          %s425 = int_to_ptr.vmem [resolvable:$true] %s424
          %427 = dma.hbm_to_vmem [thread:$0]  %s5, 32, %s425, [#allocation12]
        $region28: #{tpu_custom_call.1} parent=11 // pred_fallthru
          _
        // Predicated region
        $region29: #{tpu_custom_call.1} parent=11 // pred_check
          %p428 = pneg %p192
        $region30: #{tpu_custom_call.1} parent=11 // pred_check_branch
          %430 = sbr.rel (%p428) target = $region32
        $region31: #{tpu_custom_call.1} parent=11 // pred_region
          %s432 = ssub.s32 1024, 1024
          %433 = vsyncadd [#allocation12], %s432
          %s434 = sshll.u32 [#allocation13], 4
          %s435 = int_to_ptr.vmem [resolvable:$true] %s434
          %440 = dma.hbm_to_vmem [thread:$0]  %s6, 1024, %s435, [#allocation12], 64, 64, 4
        $region32: #{tpu_custom_call.1} parent=11 // pred_fallthru
          _
        // Predicated region
        $region33: #{tpu_custom_call.1} parent=11 // pred_check
          %p441 = pneg %p213
        $region34: #{tpu_custom_call.1} parent=11 // pred_check_branch
          %443 = sbr.rel (%p441) target = $region36
        $region35: #{tpu_custom_call.1} parent=11 // pred_region
          %s445 = ssub.s32 16, 16
          %446 = vsyncadd [#allocation15], %s445
          %s448 = sshll.u32 [#allocation14], 4
          %s449 = int_to_ptr.vmem [resolvable:$true] %s448
          %451 = dma.hbm_to_vmem [thread:$0]  %s7, 16, %s449, [#allocation15]
        $region36: #{tpu_custom_call.1} parent=11 // pred_fallthru
          _
        // Predicated region
        $region37: #{tpu_custom_call.1} parent=11 // pred_check
          %p452 = pneg %p234
        $region38: #{tpu_custom_call.1} parent=11 // pred_check_branch
          %454 = sbr.rel (%p452) target = $region40
        $region39: #{tpu_custom_call.1} parent=11 // pred_region
          %s456 = ssub.s32 16, 16
          %457 = vsyncadd [#allocation15], %s456
          %s459 = sshll.u32 [#allocation16], 4
          %s460 = int_to_ptr.vmem [resolvable:$true] %s459
          %462 = dma.hbm_to_vmem [thread:$0]  %s8, 16, %s460, [#allocation15]
        $region40: #{tpu_custom_call.1} parent=11 // pred_fallthru
          _
        // Predicated region
        $region41: #{tpu_custom_call.1} parent=11 // pred_check
          %p463 = pneg %p255
        $region42: #{tpu_custom_call.1} parent=11 // pred_check_branch
          %465 = sbr.rel (%p463) target = $region44
        $region43: #{tpu_custom_call.1} parent=11 // pred_region
          %s467 = ssub.s32 16, 16
          %468 = vsyncadd [#allocation18], %s467
          %s470 = sshll.u32 [#allocation17], 4
          %s471 = int_to_ptr.vmem [resolvable:$true] %s470
          %473 = dma.hbm_to_vmem [thread:$0]  %s9, 16, %s471, [#allocation18]
        $region44: #{tpu_custom_call.1} parent=11 // pred_fallthru
          _
        // Predicated region
        $region45: #{tpu_custom_call.1} parent=11 // pred_check
          %p474 = pneg %p276
        $region46: #{tpu_custom_call.1} parent=11 // pred_check_branch
          %476 = sbr.rel (%p474) target = $region48
        $region47: #{tpu_custom_call.1} parent=11 // pred_region
          %s478 = ssub.s32 2048, 2048
          %479 = vsyncadd [#allocation18], %s478
          %s480 = sshll.u32 [#allocation19], 4
          %s481 = int_to_ptr.vmem [resolvable:$true] %s480
          %486 = dma.hbm_to_vmem [thread:$0]  %s10, 2048, %s481, [#allocation18], 128, 128, 8
        $region48: #{tpu_custom_call.1} parent=11 // pred_fallthru
          _
        // Predicated region
        $region49: #{tpu_custom_call.1} parent=11 // pred_check
          %p487 = pneg %p297
        $region50: #{tpu_custom_call.1} parent=11 // pred_check_branch
          %489 = sbr.rel (%p487) target = $region52
        $region51: #{tpu_custom_call.1} parent=11 // pred_region
          %s491 = ssub.s32 32, 32
          %492 = vsyncadd [#allocation21], %s491
          %s494 = sshll.u32 [#allocation20], 4
          %s495 = int_to_ptr.vmem [resolvable:$true] %s494
          %497 = dma.hbm_to_vmem [thread:$0]  %s11, 32, %s495, [#allocation21]
        $region52: #{tpu_custom_call.1} parent=11 // pred_fallthru
          _
        // Predicated region
        $region53: #{tpu_custom_call.1} parent=11 // pred_check
          %p498 = pneg %p318
        $region54: #{tpu_custom_call.1} parent=11 // pred_check_branch
          %500 = sbr.rel (%p498) target = $region56
        $region55: #{tpu_custom_call.1} parent=11 // pred_region
          %s502 = ssub.s32 2048, 2048
          %503 = vsyncadd [#allocation21], %s502
          %s504 = sshll.u32 [#allocation22], 4
          %s505 = int_to_ptr.vmem [resolvable:$true] %s504
          %510 = dma.hbm_to_vmem [thread:$0]  %s12, 2048, %s505, [#allocation21], 64, 64, 4
        $region56: #{tpu_custom_call.1} parent=11 // pred_fallthru
          _
        // Predicated region
        $region57: #{tpu_custom_call.1} parent=11 // pred_check
          %p511 = pneg %p339
        $region58: #{tpu_custom_call.1} parent=11 // pred_check_branch
          %513 = sbr.rel (%p511) target = $region60
        $region59: #{tpu_custom_call.1} parent=11 // pred_region
          %s515 = ssub.s32 16, 16
          %516 = vsyncadd [#allocation24], %s515
          %s518 = sshll.u32 [#allocation23], 4
          %s519 = int_to_ptr.vmem [resolvable:$true] %s518
          %521 = dma.hbm_to_vmem [thread:$0]  %s13, 16, %s519, [#allocation24]
        $region60: #{tpu_custom_call.1} parent=11 // pred_fallthru
          _
      $region12: #{tpu_custom_call.1} parent=5 // pred_fallthru
        _
      %p522 = scmp.lt.s32.totalorder %s35, 2
      // Predicated region
      $region61: #{tpu_custom_call.1} parent=5 // pred_check
        %p523 = pneg %p522
      $region62: #{tpu_custom_call.1} parent=5 // pred_check_branch
        %525 = sbr.rel (%p523) target = $region64
      $region63: #{tpu_custom_call.1} parent=5 // pred_region
        // Predicated region
        $region65: #{tpu_custom_call.1} parent=63 // pred_check
          %p526 = pneg %p55
        $region66: #{tpu_custom_call.1} parent=63 // pred_check_branch
          %528 = sbr.rel (%p526) target = $region68
        $region67: #{tpu_custom_call.1} parent=63 // pred_region
          %s529 = sand.u32 %s45, 1
          %s530 = scalar_lea.sflag [#allocation3], %s529
          %s531 = sand.u32 %s45, 1
          %s532 = smul.addr %s531, 128
          %s533 = scalar_lea.vmem [#allocation2], %s532
          %s534 = smul.u32 2, %s35
          %s536 = ssub.s32 2048, 2048
          %537 = vsyncadd %s530, %s536
          %s538 = smul.addr %s534, 16
          %s539 = smul.addr %s538, 64
          %s540 = scalar_lea.hbm %s0, %s539
          %s541 = sshll.u32 %s533, 4
          %s542 = int_to_ptr.vmem [resolvable:$true] %s541
          %547 = dma.hbm_to_vmem [thread:$0]  %s540, 2048, %s542, %s530, 64, 64, 4
        $region68: #{tpu_custom_call.1} parent=63 // pred_fallthru
          _
        // Predicated region
        $region69: #{tpu_custom_call.1} parent=63 // pred_check
          %p548 = pneg %p81
        $region70: #{tpu_custom_call.1} parent=63 // pred_check_branch
          %550 = sbr.rel (%p548) target = $region72
        $region71: #{tpu_custom_call.1} parent=63 // pred_region
          %s551 = sand.u32 %s35, 1
          %s552 = scalar_lea.sflag [#allocation6], %s551
          %s553 = sand.u32 %s71, 1
          %s554 = smul.addr %s553, 16
          %s555 = scalar_lea.vmem [#allocation5], %s554
          %s556 = smul.u32 2, %s35
          %s558 = ssub.s32 256, 256
          %559 = vsyncadd %s552, %s558
          %s560 = smul.addr %s556, 128
          %s561 = scalar_lea.hbm %s1, %s560
          %s562 = sshll.u32 %s555, 4
          %s563 = int_to_ptr.vmem [resolvable:$true] %s562
          %568 = dma.hbm_to_vmem [thread:$0]  %s561, 256, %s563, %s552, 128, 128, 8
        $region72: #{tpu_custom_call.1} parent=63 // pred_fallthru
          _
      $region64: #{tpu_custom_call.1} parent=5 // pred_fallthru
        _
      %p569 = scmp.le.s32.totalorder 1, %s35
      %p570 = scmp.lt.s32.totalorder %s35, 3
      %p571 = pnand %p569, %p570
      %p572 = pneg %p571
      // Predicated region
      $region73: #{tpu_custom_call.1} parent=5 // pred_check
        _
      $region74: #{tpu_custom_call.1} parent=5 // pred_check_branch
        %574 = sbr.rel (%p571) target = $region76
      $region75: #{tpu_custom_call.1} parent=5 // pred_region
        %s575 = ssub.s32 %s35, 1
        %s576 = sand.u32 %s48, 1
        %s577 = scalar_lea.sflag [#allocation3], %s576
        %s578 = sand.u32 %s48, 1
        %s579 = smul.addr %s578, 128
        %s580 = scalar_lea.vmem [#allocation2], %s579
        // Predicated region
        $region77: #{tpu_custom_call.1} parent=75 // pred_check
          %p581 = pneg %p61
        $region78: #{tpu_custom_call.1} parent=75 // pred_check_branch
          %583 = sbr.rel (%p581) target = $region80
        $region79: #{tpu_custom_call.1} parent=75 // pred_region
          %584 = dma.done %s577, 2048
        $region80: #{tpu_custom_call.1} parent=75 // pred_fallthru
          _
        %s585 = sand.u32 %s40, 1
        %s586 = scalar_lea.sflag [#allocation6], %s585
        %s587 = sand.u32 %s74, 1
        %s588 = smul.addr %s587, 16
        %s589 = scalar_lea.vmem [#allocation5], %s588
        // Predicated region
        $region81: #{tpu_custom_call.1} parent=75 // pred_check
          %p590 = pneg %p87
        $region82: #{tpu_custom_call.1} parent=75 // pred_check_branch
          %592 = sbr.rel (%p590) target = $region84
        $region83: #{tpu_custom_call.1} parent=75 // pred_region
          %593 = dma.done %s586, 256
        $region84: #{tpu_custom_call.1} parent=75 // pred_fallthru
          _
        // Predicated region
        $region85: #{tpu_custom_call.1} parent=75 // pred_check
          %p594 = pneg %p108
        $region86: #{tpu_custom_call.1} parent=75 // pred_check_branch
          %596 = sbr.rel (%p594) target = $region88
        $region87: #{tpu_custom_call.1} parent=75 // pred_region
          %597 = dma.done [#allocation6], 1024
        $region88: #{tpu_custom_call.1} parent=75 // pred_fallthru
          _
        // Predicated region
        $region89: #{tpu_custom_call.1} parent=75 // pred_check
          %p598 = pneg %p129
        $region90: #{tpu_custom_call.1} parent=75 // pred_check_branch
          %600 = sbr.rel (%p598) target = $region92
        $region91: #{tpu_custom_call.1} parent=75 // pred_region
          %601 = dma.done [#allocation9], 16
        $region92: #{tpu_custom_call.1} parent=75 // pred_fallthru
          _
        // Predicated region
        $region93: #{tpu_custom_call.1} parent=75 // pred_check
          %p602 = pneg %p150
        $region94: #{tpu_custom_call.1} parent=75 // pred_check_branch
          %604 = sbr.rel (%p602) target = $region96
        $region95: #{tpu_custom_call.1} parent=75 // pred_region
          %605 = dma.done [#allocation9], 2048
        $region96: #{tpu_custom_call.1} parent=75 // pred_fallthru
          _
        // Predicated region
        $region97: #{tpu_custom_call.1} parent=75 // pred_check
          %p606 = pneg %p171
        $region98: #{tpu_custom_call.1} parent=75 // pred_check_branch
          %608 = sbr.rel (%p606) target = $region100
        $region99: #{tpu_custom_call.1} parent=75 // pred_region
          %609 = dma.done [#allocation12], 32
        $region100: #{tpu_custom_call.1} parent=75 // pred_fallthru
          _
        // Predicated region
        $region101: #{tpu_custom_call.1} parent=75 // pred_check
          %p610 = pneg %p192
        $region102: #{tpu_custom_call.1} parent=75 // pred_check_branch
          %612 = sbr.rel (%p610) target = $region104
        $region103: #{tpu_custom_call.1} parent=75 // pred_region
          %613 = dma.done [#allocation12], 1024
        $region104: #{tpu_custom_call.1} parent=75 // pred_fallthru
          _
        // Predicated region
        $region105: #{tpu_custom_call.1} parent=75 // pred_check
          %p614 = pneg %p213
        $region106: #{tpu_custom_call.1} parent=75 // pred_check_branch
          %616 = sbr.rel (%p614) target = $region108
        $region107: #{tpu_custom_call.1} parent=75 // pred_region
          %617 = dma.done [#allocation15], 16
        $region108: #{tpu_custom_call.1} parent=75 // pred_fallthru
          _
        // Predicated region
        $region109: #{tpu_custom_call.1} parent=75 // pred_check
          %p618 = pneg %p234
        $region110: #{tpu_custom_call.1} parent=75 // pred_check_branch
          %620 = sbr.rel (%p618) target = $region112
        $region111: #{tpu_custom_call.1} parent=75 // pred_region
          %621 = dma.done [#allocation15], 16
        $region112: #{tpu_custom_call.1} parent=75 // pred_fallthru
          _
        // Predicated region
        $region113: #{tpu_custom_call.1} parent=75 // pred_check
          %p622 = pneg %p255
        $region114: #{tpu_custom_call.1} parent=75 // pred_check_branch
          %624 = sbr.rel (%p622) target = $region116
        $region115: #{tpu_custom_call.1} parent=75 // pred_region
          %625 = dma.done [#allocation18], 16
        $region116: #{tpu_custom_call.1} parent=75 // pred_fallthru
          _
        // Predicated region
        $region117: #{tpu_custom_call.1} parent=75 // pred_check
          %p626 = pneg %p276
        $region118: #{tpu_custom_call.1} parent=75 // pred_check_branch
          %628 = sbr.rel (%p626) target = $region120
        $region119: #{tpu_custom_call.1} parent=75 // pred_region
          %629 = dma.done [#allocation18], 2048
        $region120: #{tpu_custom_call.1} parent=75 // pred_fallthru
          _
        // Predicated region
        $region121: #{tpu_custom_call.1} parent=75 // pred_check
          %p630 = pneg %p297
        $region122: #{tpu_custom_call.1} parent=75 // pred_check_branch
          %632 = sbr.rel (%p630) target = $region124
        $region123: #{tpu_custom_call.1} parent=75 // pred_region
          %633 = dma.done [#allocation21], 32
        $region124: #{tpu_custom_call.1} parent=75 // pred_fallthru
          _
        // Predicated region
        $region125: #{tpu_custom_call.1} parent=75 // pred_check
          %p634 = pneg %p318
        $region126: #{tpu_custom_call.1} parent=75 // pred_check_branch
          %636 = sbr.rel (%p634) target = $region128
        $region127: #{tpu_custom_call.1} parent=75 // pred_region
          %637 = dma.done [#allocation21], 2048
        $region128: #{tpu_custom_call.1} parent=75 // pred_fallthru
          _
        // Predicated region
        $region129: #{tpu_custom_call.1} parent=75 // pred_check
          %p638 = pneg %p339
        $region130: #{tpu_custom_call.1} parent=75 // pred_check_branch
          %640 = sbr.rel (%p638) target = $region132
        $region131: #{tpu_custom_call.1} parent=75 // pred_region
          %641 = dma.done [#allocation24], 16
        $region132: #{tpu_custom_call.1} parent=75 // pred_fallthru
          _
        %s642 = sand.u32 %s48, 1
        %s643 = scalar_lea.sflag [#allocation3], %s642
        %s644 = sand.u32 %s48, 1
        %s645 = smul.addr %s644, 128
        %s646 = scalar_lea.vmem [#allocation2], %s645
        %p647 = pneg %p61
        %p648 = pneg %p58
        %s649 = sand.u32 %s40, 1
        %s650 = scalar_lea.sflag [#allocation6], %s649
        %s651 = sand.u32 %s74, 1
        %s652 = smul.addr %s651, 16
        %s653 = scalar_lea.vmem [#allocation5], %s652
        %p654 = pneg %p87
        %p655 = pneg %p84
        %p656 = pneg %p108
        %p657 = pneg %p105
        %p658 = pneg %p129
        %p659 = pneg %p126
        %p660 = pneg %p150
        %p661 = pneg %p147
        %p662 = pneg %p171
        %p663 = pneg %p168
        %p664 = pneg %p192
        %p665 = pneg %p189
        %p666 = pneg %p213
        %p667 = pneg %p210
        %p668 = pneg %p234
        %p669 = pneg %p231
        %p670 = pneg %p255
        %p671 = pneg %p252
        %p672 = pneg %p276
        %p673 = pneg %p273
        %p674 = pneg %p297
        %p675 = pneg %p294
        %p676 = pneg %p318
        %p677 = pneg %p315
        %p678 = pneg %p339
        %p679 = pneg %p336
        %p680 = pneg %p365
        %p681 = pneg %p362
        %s682 = sand.u32 %s352, 1
        %s683 = scalar_lea.sflag [#allocation4], %s682
        %s684 = sand.u32 %s352, 1
        %s685 = smul.addr %s684, 16
        %s686 = scalar_lea.vmem [#allocation25], %s685
        %s687 = smul.u32 2, %s40
        %s688 = smul.u32 2, %s40
        %s689 = smul.u32 2, %s40
        %v691 = vld [vmem:[%s580] sm:$0xf]
        %v692 = vld [vmem:[%s580 + $0x4] sm:$0xf]
        %v693 = vld [vmem:[%s580 + $0x8] sm:$0xf]
        %v694 = vld [vmem:[%s580 + $0xc] sm:$0xf]
        %v695 = vld [vmem:[%s580 + $0x10] sm:$0xf]
        %v696 = vld [vmem:[%s580 + $0x14] sm:$0xf]
        %v697 = vld [vmem:[%s580 + $0x18] sm:$0xf]
        %v698 = vld [vmem:[%s580 + $0x1c] sm:$0xf]
        %v699 = vld [vmem:[%s580 + $0x20] sm:$0xf]
        %v700 = vld [vmem:[%s580 + $0x24] sm:$0xf]
        %v701 = vld [vmem:[%s580 + $0x28] sm:$0xf]
        %v702 = vld [vmem:[%s580 + $0x2c] sm:$0xf]
        %v703 = vld [vmem:[%s580 + $0x30] sm:$0xf]
        %v704 = vld [vmem:[%s580 + $0x34] sm:$0xf]
        %v705 = vld [vmem:[%s580 + $0x38] sm:$0xf]
        %v706 = vld [vmem:[%s580 + $0x3c] sm:$0xf]
        %v707 = vld [vmem:[%s580 + $0x40] sm:$0xf]
        %v708 = vld [vmem:[%s580 + $0x44] sm:$0xf]
        %v709 = vld [vmem:[%s580 + $0x48] sm:$0xf]
        %v710 = vld [vmem:[%s580 + $0x4c] sm:$0xf]
        %v711 = vld [vmem:[%s580 + $0x50] sm:$0xf]
        %v712 = vld [vmem:[%s580 + $0x54] sm:$0xf]
        %v713 = vld [vmem:[%s580 + $0x58] sm:$0xf]
        %v714 = vld [vmem:[%s580 + $0x5c] sm:$0xf]
        %v715 = vld [vmem:[%s580 + $0x60] sm:$0xf]
        %v716 = vld [vmem:[%s580 + $0x64] sm:$0xf]
        %v717 = vld [vmem:[%s580 + $0x68] sm:$0xf]
        %v718 = vld [vmem:[%s580 + $0x6c] sm:$0xf]
        %v719 = vld [vmem:[%s580 + $0x70] sm:$0xf]
        %v720 = vld [vmem:[%s580 + $0x74] sm:$0xf]
        %v721 = vld [vmem:[%s580 + $0x78] sm:$0xf]
        %v722 = vld [vmem:[%s580 + $0x7c] sm:$0xf]
        %v723 = vld [vmem:[%s589] sm:$0xff]
        %v724 = vld [vmem:[%s589 + $0x8] sm:$0xff]
        %v725 = vpack.c.bf16 %v724, %v723
        %v726 = vld [vmem:[#allocation7] sm:$0xf]
        %v727 = vld [vmem:[#allocation7 + $0x4] sm:$0xf]
        %v728 = vld [vmem:[#allocation7 + $0x8] sm:$0xf]
        %v729 = vld [vmem:[#allocation7 + $0xc] sm:$0xf]
        %v730 = vld [vmem:[#allocation7 + $0x10] sm:$0xf]
        %v731 = vld [vmem:[#allocation7 + $0x14] sm:$0xf]
        %v732 = vld [vmem:[#allocation7 + $0x18] sm:$0xf]
        %v733 = vld [vmem:[#allocation7 + $0x1c] sm:$0xf]
        %v734 = vld [vmem:[#allocation7 + $0x20] sm:$0xf]
        %v735 = vld [vmem:[#allocation7 + $0x24] sm:$0xf]
        %v736 = vld [vmem:[#allocation7 + $0x28] sm:$0xf]
        %v737 = vld [vmem:[#allocation7 + $0x2c] sm:$0xf]
        %v738 = vld [vmem:[#allocation7 + $0x30] sm:$0xf]
        %v739 = vld [vmem:[#allocation7 + $0x34] sm:$0xf]
        %v740 = vld [vmem:[#allocation7 + $0x38] sm:$0xf]
        %v741 = vld [vmem:[#allocation7 + $0x3c] sm:$0xf]
        %v742 = vld [vmem:[#allocation8] sm:$0x1]
        %v744 = vlaneseq
        %v745 = vshrl.u32 %v744, 7
        %v746 = vsub.s32 0, %v745
        %v747 = vrot.slane %v742, %v746
        %v765 = vunpack.c.l.b16 %v726
        %v766 = vunpack.c.l.b16 %v727
        %v767 = vunpack.c.l.b16 %v728
        %v768 = vunpack.c.l.b16 %v729
        %v769 = vunpack.c.l.b16 %v730
        %v770 = vunpack.c.l.b16 %v731
        %v771 = vunpack.c.l.b16 %v732
        %v772 = vunpack.c.l.b16 %v733
        %v773 = vunpack.c.l.b16 %v734
        %v774 = vunpack.c.l.b16 %v735
        %v775 = vunpack.c.l.b16 %v736
        %v776 = vunpack.c.l.b16 %v737
        %v777 = vunpack.c.l.b16 %v738
        %v778 = vunpack.c.l.b16 %v739
        %v779 = vunpack.c.l.b16 %v740
        %v780 = vunpack.c.l.b16 %v741
        %v781 = vpack.c.b16 %v766, %v765
        %v782 = vpack.c.b16 %v768, %v767
        %v783 = vpack.c.b16 %v770, %v769
        %v784 = vpack.c.b16 %v772, %v771
        %v785 = vpack.c.b16 %v774, %v773
        %v786 = vpack.c.b16 %v776, %v775
        %v787 = vpack.c.b16 %v778, %v777
        %v788 = vpack.c.b16 %v780, %v779
        %797 = vmatprep.subr.bf16.mxu0 0
        %798 = vmatpush1.bf16.msra.mxu0 %v781
        %799 = vmatprep.subr.bf16.mxu0 0
        %800 = vmatpush1.bf16.msra.mxu0 %v782
        %801 = vmatprep.subr.bf16.mxu0 0
        %802 = vmatpush1.bf16.msra.mxu0 %v783
        %803 = vmatprep.subr.bf16.mxu0 0
        %804 = vmatpush1.bf16.msra.mxu0 %v784
        %805 = vmatprep.subr.bf16.mxu0 0
        %806 = vmatpush1.bf16.msra.mxu0 %v785
        %807 = vmatprep.subr.bf16.mxu0 0
        %808 = vmatpush1.bf16.msra.mxu0 %v786
        %809 = vmatprep.subr.bf16.mxu0 0
        %810 = vmatpush1.bf16.msra.mxu0 %v787
        %811 = vmatprep.subr.bf16.mxu0 0
        %812 = vmatpush1.bf16.msra.mxu0 %v788
        %813 = vmatprep.subr.bf16.mxu0 0
        %814 = vmatpush1.bf16.msra.mxu0 0
        %815 = vmatprep.subr.bf16.mxu0 0
        %816 = vmatpush1.bf16.msra.mxu0 0
        %817 = vmatprep.subr.bf16.mxu0 0
        %818 = vmatpush1.bf16.msra.mxu0 0
        %819 = vmatprep.subr.bf16.mxu0 0
        %820 = vmatpush1.bf16.msra.mxu0 0
        %821 = vmatprep.subr.bf16.mxu0 0
        %822 = vmatpush1.bf16.msra.mxu0 0
        %823 = vmatprep.subr.bf16.mxu0 0
        %824 = vmatpush1.bf16.msra.mxu0 0
        %825 = vmatprep.subr.bf16.mxu0 0
        %826 = vmatpush1.bf16.msra.mxu0 0
        %827 = vmatprep.subr.bf16.mxu0 0
        %828 = vmatpush1.bf16.msra.mxu0 0
        %829 = vmatprep.mubr.bf16.mxu0 0
        %830 = vmatmul.mubr.bf16.gmra.mrb[0].mxu0 %v725
        %v831 = vpop.f32.mrb[0].mxu0
        %v832 = vadd.f32 %v747, %v831
        %v833 = vpop.f32.mrb[0].mxu0
        %v834 = vpop.f32.mrb[0].mxu0
        %v835 = vadd.f32 %v747, %v834
        %v836 = vpop.f32.mrb[0].mxu0
        %837 = vdwg.mxu0
        %v838 = vld [vmem:[#allocation10] sm:$0xff]
        %v839 = vld [vmem:[#allocation10 + $0x8] sm:$0xff]
        %v840 = vld [vmem:[#allocation10 + $0x10] sm:$0xff]
        %v841 = vld [vmem:[#allocation10 + $0x18] sm:$0xff]
        %v842 = vld [vmem:[#allocation10 + $0x20] sm:$0xff]
        %v843 = vld [vmem:[#allocation10 + $0x28] sm:$0xff]
        %v844 = vld [vmem:[#allocation10 + $0x30] sm:$0xff]
        %v845 = vld [vmem:[#allocation10 + $0x38] sm:$0xff]
        %v846 = vld [vmem:[#allocation10 + $0x40] sm:$0xff]
        %v847 = vld [vmem:[#allocation10 + $0x48] sm:$0xff]
        %v848 = vld [vmem:[#allocation10 + $0x50] sm:$0xff]
        %v849 = vld [vmem:[#allocation10 + $0x58] sm:$0xff]
        %v850 = vld [vmem:[#allocation10 + $0x60] sm:$0xff]
        %v851 = vld [vmem:[#allocation10 + $0x68] sm:$0xff]
        %v852 = vld [vmem:[#allocation10 + $0x70] sm:$0xff]
        %v853 = vld [vmem:[#allocation10 + $0x78] sm:$0xff]
        %v854 = vld [vmem:[#allocation11] sm:$0x3]
        %v856 = vlaneseq
        %v857 = vshrl.u32 %v856, 7
        %v858 = vsub.s32 0, %v857
        %v859 = vrot.slane %v854, %v858
        %v860 = vlaneseq
        %v861 = vshrl.u32 %v860, 7
        %v862 = vsub.s32 1, %v861
        %v863 = vrot.slane %v854, %v862
        %v898 = vunpack.c.l.b16 %v691
        %v899 = vunpack.c.l.b16 %v692
        %v900 = vunpack.c.l.b16 %v693
        %v901 = vunpack.c.l.b16 %v694
        %v902 = vunpack.c.l.b16 %v695
        %v903 = vunpack.c.l.b16 %v696
        %v904 = vunpack.c.l.b16 %v697
        %v905 = vunpack.c.l.b16 %v698
        %v906 = vunpack.c.l.b16 %v699
        %v907 = vunpack.c.l.b16 %v700
        %v908 = vunpack.c.l.b16 %v701
        %v909 = vunpack.c.l.b16 %v702
        %v910 = vunpack.c.l.b16 %v703
        %v911 = vunpack.c.l.b16 %v704
        %v912 = vunpack.c.l.b16 %v705
        %v913 = vunpack.c.l.b16 %v706
        %v914 = vunpack.c.l.b16 %v707
        %v915 = vunpack.c.l.b16 %v708
        %v916 = vunpack.c.l.b16 %v709
        %v917 = vunpack.c.l.b16 %v710
        %v918 = vunpack.c.l.b16 %v711
        %v919 = vunpack.c.l.b16 %v712
        %v920 = vunpack.c.l.b16 %v713
        %v921 = vunpack.c.l.b16 %v714
        %v922 = vunpack.c.l.b16 %v715
        %v923 = vunpack.c.l.b16 %v716
        %v924 = vunpack.c.l.b16 %v717
        %v925 = vunpack.c.l.b16 %v718
        %v926 = vunpack.c.l.b16 %v719
        %v927 = vunpack.c.l.b16 %v720
        %v928 = vunpack.c.l.b16 %v721
        %v929 = vunpack.c.l.b16 %v722
        %v930 = vpack.c.b16 %v899, %v898
        %v931 = vpack.c.b16 %v901, %v900
        %v932 = vpack.c.b16 %v903, %v902
        %v933 = vpack.c.b16 %v905, %v904
        %v934 = vpack.c.b16 %v907, %v906
        %v935 = vpack.c.b16 %v909, %v908
        %v936 = vpack.c.b16 %v911, %v910
        %v937 = vpack.c.b16 %v913, %v912
        %v938 = vpack.c.b16 %v915, %v914
        %v939 = vpack.c.b16 %v917, %v916
        %v940 = vpack.c.b16 %v919, %v918
        %v941 = vpack.c.b16 %v921, %v920
        %v942 = vpack.c.b16 %v923, %v922
        %v943 = vpack.c.b16 %v925, %v924
        %v944 = vpack.c.b16 %v927, %v926
        %v945 = vpack.c.b16 %v929, %v928
        %v978 = vunpack.c.l.b16 %v838
        %v979 = vunpack.c.h.b16 %v838
        %v980 = vunpack.c.l.b16 %v839
        %v981 = vunpack.c.h.b16 %v839
        %v982 = vunpack.c.l.b16 %v840
        %v983 = vunpack.c.h.b16 %v840
        %v984 = vunpack.c.l.b16 %v841
        %v985 = vunpack.c.h.b16 %v841
        %v986 = vunpack.c.l.b16 %v842
        %v987 = vunpack.c.h.b16 %v842
        %v988 = vunpack.c.l.b16 %v843
        %v989 = vunpack.c.h.b16 %v843
        %v990 = vunpack.c.l.b16 %v844
        %v991 = vunpack.c.h.b16 %v844
        %v992 = vunpack.c.l.b16 %v845
        %v993 = vunpack.c.h.b16 %v845
        %v994 = vunpack.c.l.b16 %v846
        %v995 = vunpack.c.h.b16 %v846
        %v996 = vunpack.c.l.b16 %v847
        %v997 = vunpack.c.h.b16 %v847
        %v998 = vunpack.c.l.b16 %v848
        %v999 = vunpack.c.h.b16 %v848
        %v1000 = vunpack.c.l.b16 %v849
        %v1001 = vunpack.c.h.b16 %v849
        %v1002 = vunpack.c.l.b16 %v850
        %v1003 = vunpack.c.h.b16 %v850
        %v1004 = vunpack.c.l.b16 %v851
        %v1005 = vunpack.c.h.b16 %v851
        %v1006 = vunpack.c.l.b16 %v852
        %v1007 = vunpack.c.h.b16 %v852
        %v1008 = vunpack.c.l.b16 %v853
        %v1009 = vunpack.c.h.b16 %v853
        %v1010 = vpack.c.b16 %v980, %v978
        %v1011 = vpack.c.b16 %v981, %v979
        %v1012 = vpack.c.b16 %v984, %v982
        %v1013 = vpack.c.b16 %v985, %v983
        %v1014 = vpack.c.b16 %v988, %v986
        %v1015 = vpack.c.b16 %v989, %v987
        %v1016 = vpack.c.b16 %v992, %v990
        %v1017 = vpack.c.b16 %v993, %v991
        %v1018 = vpack.c.b16 %v996, %v994
        %v1019 = vpack.c.b16 %v997, %v995
        %v1020 = vpack.c.b16 %v1000, %v998
        %v1021 = vpack.c.b16 %v1001, %v999
        %v1022 = vpack.c.b16 %v1004, %v1002
        %v1023 = vpack.c.b16 %v1005, %v1003
        %v1024 = vpack.c.b16 %v1008, %v1006
        %v1025 = vpack.c.b16 %v1009, %v1007
        %1042 = vmatprep.subr.bf16.mxu0 %v1011
        %1043 = vmatpush1.bf16.msra.mxu0 %v1010
        %1044 = vmatprep.subr.bf16.mxu0 %v1013
        %1045 = vmatpush1.bf16.msra.mxu0 %v1012
        %1046 = vmatprep.subr.bf16.mxu0 %v1015
        %1047 = vmatpush1.bf16.msra.mxu0 %v1014
        %1048 = vmatprep.subr.bf16.mxu0 %v1017
        %1049 = vmatpush1.bf16.msra.mxu0 %v1016
        %1050 = vmatprep.subr.bf16.mxu0 %v1019
        %1051 = vmatpush1.bf16.msra.mxu0 %v1018
        %1052 = vmatprep.subr.bf16.mxu0 %v1021
        %1053 = vmatpush1.bf16.msra.mxu0 %v1020
        %1054 = vmatprep.subr.bf16.mxu0 %v1023
        %1055 = vmatpush1.bf16.msra.mxu0 %v1022
        %1056 = vmatprep.subr.bf16.mxu0 %v1025
        %1057 = vmatpush1.bf16.msra.mxu0 %v1024
        %1058 = vmatprep.subr.bf16.mxu0 0
        %1059 = vmatpush1.bf16.msra.mxu0 0
        %1060 = vmatprep.subr.bf16.mxu0 0
        %1061 = vmatpush1.bf16.msra.mxu0 0
        %1062 = vmatprep.subr.bf16.mxu0 0
        %1063 = vmatpush1.bf16.msra.mxu0 0
        %1064 = vmatprep.subr.bf16.mxu0 0
        %1065 = vmatpush1.bf16.msra.mxu0 0
        %1066 = vmatprep.subr.bf16.mxu0 0
        %1067 = vmatpush1.bf16.msra.mxu0 0
        %1068 = vmatprep.subr.bf16.mxu0 0
        %1069 = vmatpush1.bf16.msra.mxu0 0
        %1070 = vmatprep.subr.bf16.mxu0 0
        %1071 = vmatpush1.bf16.msra.mxu0 0
        %1072 = vmatprep.subr.bf16.mxu0 0
        %1073 = vmatpush1.bf16.msra.mxu0 0
        %1074 = vmatprep.mubr.bf16.mxu0 0
        %1075 = vmatmul.mubr.bf16.gmra.mrb[0].mxu0 %v930
        %v1076 = vpop.f32.mrb[0].mxu0
        %v1077 = vadd.f32 %v859, %v1076
        %v1078 = vpop.f32.mrb[0].mxu0
        %v1079 = vadd.f32 %v863, %v1078
        %v1080 = vpop.f32.mrb[0].mxu0
        %v1081 = vadd.f32 %v859, %v1080
        %v1082 = vpop.f32.mrb[0].mxu0
        %v1083 = vadd.f32 %v863, %v1082
        %1084 = vmatprep.mubr.bf16.mxu0 0
        %1085 = vmatmul.mubr.bf16.gmra.mrb[0].mxu0 %v931
        %v1086 = vpop.f32.mrb[0].mxu0
        %v1087 = vadd.f32 %v859, %v1086
        %v1088 = vpop.f32.mrb[0].mxu0
        %v1089 = vadd.f32 %v863, %v1088
        %v1090 = vpop.f32.mrb[0].mxu0
        %v1091 = vadd.f32 %v859, %v1090
        %v1092 = vpop.f32.mrb[0].mxu0
        %v1093 = vadd.f32 %v863, %v1092
        %1094 = vmatprep.mubr.bf16.mxu0 0
        %1095 = vmatmul.mubr.bf16.gmra.mrb[0].mxu0 %v932
        %v1096 = vpop.f32.mrb[0].mxu0
        %v1097 = vadd.f32 %v859, %v1096
        %v1098 = vpop.f32.mrb[0].mxu0
        %v1099 = vadd.f32 %v863, %v1098
        %v1100 = vpop.f32.mrb[0].mxu0
        %v1101 = vadd.f32 %v859, %v1100
        %v1102 = vpop.f32.mrb[0].mxu0
        %v1103 = vadd.f32 %v863, %v1102
        %1104 = vmatprep.mubr.bf16.mxu0 0
        %1105 = vmatmul.mubr.bf16.gmra.mrb[0].mxu0 %v933
        %v1106 = vpop.f32.mrb[0].mxu0
        %v1107 = vadd.f32 %v859, %v1106
        %v1108 = vpop.f32.mrb[0].mxu0
        %v1109 = vadd.f32 %v863, %v1108
        %v1110 = vpop.f32.mrb[0].mxu0
        %v1111 = vadd.f32 %v859, %v1110
        %v1112 = vpop.f32.mrb[0].mxu0
        %v1113 = vadd.f32 %v863, %v1112
        %1114 = vmatprep.mubr.bf16.mxu0 0
        %1115 = vmatmul.mubr.bf16.gmra.mrb[0].mxu0 %v934
        %v1116 = vpop.f32.mrb[0].mxu0
        %v1117 = vadd.f32 %v859, %v1116
        %v1118 = vpop.f32.mrb[0].mxu0
        %v1119 = vadd.f32 %v863, %v1118
        %v1120 = vpop.f32.mrb[0].mxu0
        %v1121 = vadd.f32 %v859, %v1120
        %v1122 = vpop.f32.mrb[0].mxu0
        %v1123 = vadd.f32 %v863, %v1122
        %1124 = vmatprep.mubr.bf16.mxu0 0
        %1125 = vmatmul.mubr.bf16.gmra.mrb[0].mxu0 %v935
        %v1126 = vpop.f32.mrb[0].mxu0
        %v1127 = vadd.f32 %v859, %v1126
        %v1128 = vpop.f32.mrb[0].mxu0
        %v1129 = vadd.f32 %v863, %v1128
        %v1130 = vpop.f32.mrb[0].mxu0
        %v1131 = vadd.f32 %v859, %v1130
        %v1132 = vpop.f32.mrb[0].mxu0
        %v1133 = vadd.f32 %v863, %v1132
        %1134 = vmatprep.mubr.bf16.mxu0 0
        %1135 = vmatmul.mubr.bf16.gmra.mrb[0].mxu0 %v936
        %v1136 = vpop.f32.mrb[0].mxu0
        %v1137 = vadd.f32 %v859, %v1136
        %v1138 = vpop.f32.mrb[0].mxu0
        %v1139 = vadd.f32 %v863, %v1138
        %v1140 = vpop.f32.mrb[0].mxu0
        %v1141 = vadd.f32 %v859, %v1140
        %v1142 = vpop.f32.mrb[0].mxu0
        %v1143 = vadd.f32 %v863, %v1142
        %1144 = vmatprep.mubr.bf16.mxu0 0
        %1145 = vmatmul.mubr.bf16.gmra.mrb[0].mxu0 %v937
        %v1146 = vpop.f32.mrb[0].mxu0
        %v1147 = vadd.f32 %v859, %v1146
        %v1148 = vpop.f32.mrb[0].mxu0
        %v1149 = vadd.f32 %v863, %v1148
        %v1150 = vpop.f32.mrb[0].mxu0
        %v1151 = vadd.f32 %v859, %v1150
        %v1152 = vpop.f32.mrb[0].mxu0
        %v1153 = vadd.f32 %v863, %v1152
        %1154 = vmatprep.mubr.bf16.mxu0 0
        %1155 = vmatmul.mubr.bf16.gmra.mrb[0].mxu0 %v938
        %v1156 = vpop.f32.mrb[0].mxu0
        %v1157 = vadd.f32 %v859, %v1156
        %v1158 = vpop.f32.mrb[0].mxu0
        %v1159 = vadd.f32 %v863, %v1158
        %v1160 = vpop.f32.mrb[0].mxu0
        %v1161 = vadd.f32 %v859, %v1160
        %v1162 = vpop.f32.mrb[0].mxu0
        %v1163 = vadd.f32 %v863, %v1162
        %1164 = vmatprep.mubr.bf16.mxu0 0
        %1165 = vmatmul.mubr.bf16.gmra.mrb[0].mxu0 %v939
        %v1166 = vpop.f32.mrb[0].mxu0
        %v1167 = vadd.f32 %v859, %v1166
        %v1168 = vpop.f32.mrb[0].mxu0
        %v1169 = vadd.f32 %v863, %v1168
        %v1170 = vpop.f32.mrb[0].mxu0
        %v1171 = vadd.f32 %v859, %v1170
        %v1172 = vpop.f32.mrb[0].mxu0
        %v1173 = vadd.f32 %v863, %v1172
        %1174 = vmatprep.mubr.bf16.mxu0 0
        %1175 = vmatmul.mubr.bf16.gmra.mrb[0].mxu0 %v940
        %v1176 = vpop.f32.mrb[0].mxu0
        %v1177 = vadd.f32 %v859, %v1176
        %v1178 = vpop.f32.mrb[0].mxu0
        %v1179 = vadd.f32 %v863, %v1178
        %v1180 = vpop.f32.mrb[0].mxu0
        %v1181 = vadd.f32 %v859, %v1180
        %v1182 = vpop.f32.mrb[0].mxu0
        %v1183 = vadd.f32 %v863, %v1182
        %1184 = vmatprep.mubr.bf16.mxu0 0
        %1185 = vmatmul.mubr.bf16.gmra.mrb[0].mxu0 %v941
        %v1186 = vpop.f32.mrb[0].mxu0
        %v1187 = vadd.f32 %v859, %v1186
        %v1188 = vpop.f32.mrb[0].mxu0
        %v1189 = vadd.f32 %v863, %v1188
        %v1190 = vpop.f32.mrb[0].mxu0
        %v1191 = vadd.f32 %v859, %v1190
        %v1192 = vpop.f32.mrb[0].mxu0
        %v1193 = vadd.f32 %v863, %v1192
        %1194 = vmatprep.mubr.bf16.mxu0 0
        %1195 = vmatmul.mubr.bf16.gmra.mrb[0].mxu0 %v942
        %v1196 = vpop.f32.mrb[0].mxu0
        %v1197 = vadd.f32 %v859, %v1196
        %v1198 = vpop.f32.mrb[0].mxu0
        %v1199 = vadd.f32 %v863, %v1198
        %v1200 = vpop.f32.mrb[0].mxu0
        %v1201 = vadd.f32 %v859, %v1200
        %v1202 = vpop.f32.mrb[0].mxu0
        %v1203 = vadd.f32 %v863, %v1202
        %1204 = vmatprep.mubr.bf16.mxu0 0
        %1205 = vmatmul.mubr.bf16.gmra.mrb[0].mxu0 %v943
        %v1206 = vpop.f32.mrb[0].mxu0
        %v1207 = vadd.f32 %v859, %v1206
        %v1208 = vpop.f32.mrb[0].mxu0
        %v1209 = vadd.f32 %v863, %v1208
        %v1210 = vpop.f32.mrb[0].mxu0
        %v1211 = vadd.f32 %v859, %v1210
        %v1212 = vpop.f32.mrb[0].mxu0
        %v1213 = vadd.f32 %v863, %v1212
        %1214 = vmatprep.mubr.bf16.mxu0 0
        %1215 = vmatmul.mubr.bf16.gmra.mrb[0].mxu0 %v944
        %v1216 = vpop.f32.mrb[0].mxu0
        %v1217 = vadd.f32 %v859, %v1216
        %v1218 = vpop.f32.mrb[0].mxu0
        %v1219 = vadd.f32 %v863, %v1218
        %v1220 = vpop.f32.mrb[0].mxu0
        %v1221 = vadd.f32 %v859, %v1220
        %v1222 = vpop.f32.mrb[0].mxu0
        %v1223 = vadd.f32 %v863, %v1222
        %1224 = vmatprep.mubr.bf16.mxu0 0
        %1225 = vmatmul.mubr.bf16.gmra.mrb[0].mxu0 %v945
        %v1226 = vpop.f32.mrb[0].mxu0
        %v1227 = vadd.f32 %v859, %v1226
        %v1228 = vpop.f32.mrb[0].mxu0
        %v1229 = vadd.f32 %v863, %v1228
        %v1230 = vpop.f32.mrb[0].mxu0
        %v1231 = vadd.f32 %v859, %v1230
        %v1232 = vpop.f32.mrb[0].mxu0
        %v1233 = vadd.f32 %v863, %v1232
        %1234 = vdwg.mxu0
        %v1235 = vpack.c.bf16 %v835, %v832
        %v1236 = vpack.c.bf16 %v1081, %v1077
        %v1237 = vpack.c.bf16 %v1083, %v1079
        %v1238 = vpack.c.bf16 %v1091, %v1087
        %v1239 = vpack.c.bf16 %v1093, %v1089
        %v1240 = vpack.c.bf16 %v1101, %v1097
        %v1241 = vpack.c.bf16 %v1103, %v1099
        %v1242 = vpack.c.bf16 %v1111, %v1107
        %v1243 = vpack.c.bf16 %v1113, %v1109
        %v1244 = vpack.c.bf16 %v1121, %v1117
        %v1245 = vpack.c.bf16 %v1123, %v1119
        %v1246 = vpack.c.bf16 %v1131, %v1127
        %v1247 = vpack.c.bf16 %v1133, %v1129
        %v1248 = vpack.c.bf16 %v1141, %v1137
        %v1249 = vpack.c.bf16 %v1143, %v1139
        %v1250 = vpack.c.bf16 %v1151, %v1147
        %v1251 = vpack.c.bf16 %v1153, %v1149
        %v1252 = vpack.c.bf16 %v1161, %v1157
        %v1253 = vpack.c.bf16 %v1163, %v1159
        %v1254 = vpack.c.bf16 %v1171, %v1167
        %v1255 = vpack.c.bf16 %v1173, %v1169
        %v1256 = vpack.c.bf16 %v1181, %v1177
        %v1257 = vpack.c.bf16 %v1183, %v1179
        %v1258 = vpack.c.bf16 %v1191, %v1187
        %v1259 = vpack.c.bf16 %v1193, %v1189
        %v1260 = vpack.c.bf16 %v1201, %v1197
        %v1261 = vpack.c.bf16 %v1203, %v1199
        %v1262 = vpack.c.bf16 %v1211, %v1207
        %v1263 = vpack.c.bf16 %v1213, %v1209
        %v1264 = vpack.c.bf16 %v1221, %v1217
        %v1265 = vpack.c.bf16 %v1223, %v1219
        %v1266 = vpack.c.bf16 %v1231, %v1227
        %v1267 = vpack.c.bf16 %v1233, %v1229
        %1269 = vrot.lane.b32.xlu0 %v1235, 96
        %v1270 = vpop.permute.xlu0 %1269
        %1271 = vrot.lane.b32.xlu0 %v1235, 64
        %v1272 = vpop.permute.xlu0 %1271
        %1273 = vrot.lane.b32.xlu0 %v1235, 32
        %v1274 = vpop.permute.xlu0 %1273
        %v1275 = vunpack.c.l.b16 %v1235
        %v1276 = vunpack.c.h.b16 %v1235
        %v1277 = vunpack.c.l.b16 %v1270
        %v1278 = vunpack.c.h.b16 %v1270
        %v1279 = vunpack.c.l.b16 %v1272
        %v1280 = vunpack.c.h.b16 %v1272
        %v1281 = vunpack.c.l.b16 %v1274
        %v1282 = vunpack.c.h.b16 %v1274
        %v1283 = vpack.c.b16 %v1275, %v1275
        %v1284 = vpack.c.b16 %v1276, %v1276
        %v1285 = vpack.c.b16 %v1277, %v1277
        %v1286 = vpack.c.b16 %v1278, %v1278
        %v1287 = vpack.c.b16 %v1279, %v1279
        %v1288 = vpack.c.b16 %v1280, %v1280
        %v1289 = vpack.c.b16 %v1281, %v1281
        %v1290 = vpack.c.b16 %v1282, %v1282
        %1307 = vrot.lane.b32.xlu0 %v1236, 96
        %v1308 = vpop.permute.xlu0 %1307
        %1309 = vrot.lane.b32.xlu0 %v1238, 96
        %v1310 = vpop.permute.xlu0 %1309
        %1311 = vrot.lane.b32.xlu0 %v1240, 96
        %v1312 = vpop.permute.xlu0 %1311
        %1313 = vrot.lane.b32.xlu0 %v1242, 96
        %v1314 = vpop.permute.xlu0 %1313
        %1315 = vrot.lane.b32.xlu0 %v1244, 96
        %v1316 = vpop.permute.xlu0 %1315
        %1317 = vrot.lane.b32.xlu0 %v1246, 96
        %v1318 = vpop.permute.xlu0 %1317
        %1319 = vrot.lane.b32.xlu0 %v1248, 96
        %v1320 = vpop.permute.xlu0 %1319
        %1321 = vrot.lane.b32.xlu0 %v1250, 96
        %v1322 = vpop.permute.xlu0 %1321
        %1323 = vrot.lane.b32.xlu0 %v1252, 96
        %v1324 = vpop.permute.xlu0 %1323
        %1325 = vrot.lane.b32.xlu0 %v1254, 96
        %v1326 = vpop.permute.xlu0 %1325
        %1327 = vrot.lane.b32.xlu0 %v1256, 96
        %v1328 = vpop.permute.xlu0 %1327
        %1329 = vrot.lane.b32.xlu0 %v1258, 96
        %v1330 = vpop.permute.xlu0 %1329
        %1331 = vrot.lane.b32.xlu0 %v1260, 96
        %v1332 = vpop.permute.xlu0 %1331
        %1333 = vrot.lane.b32.xlu0 %v1262, 96
        %v1334 = vpop.permute.xlu0 %1333
        %1335 = vrot.lane.b32.xlu0 %v1264, 96
        %v1336 = vpop.permute.xlu0 %1335
        %1337 = vrot.lane.b32.xlu0 %v1266, 96
        %v1338 = vpop.permute.xlu0 %1337
        %1339 = vrot.lane.b32.xlu0 %v1236, 64
        %v1340 = vpop.permute.xlu0 %1339
        %1341 = vrot.lane.b32.xlu0 %v1238, 64
        %v1342 = vpop.permute.xlu0 %1341
        %1343 = vrot.lane.b32.xlu0 %v1240, 64
        %v1344 = vpop.permute.xlu0 %1343
        %1345 = vrot.lane.b32.xlu0 %v1242, 64
        %v1346 = vpop.permute.xlu0 %1345
        %1347 = vrot.lane.b32.xlu0 %v1244, 64
        %v1348 = vpop.permute.xlu0 %1347
        %1349 = vrot.lane.b32.xlu0 %v1246, 64
        %v1350 = vpop.permute.xlu0 %1349
        %1351 = vrot.lane.b32.xlu0 %v1248, 64
        %v1352 = vpop.permute.xlu0 %1351
        %1353 = vrot.lane.b32.xlu0 %v1250, 64
        %v1354 = vpop.permute.xlu0 %1353
        %1355 = vrot.lane.b32.xlu0 %v1252, 64
        %v1356 = vpop.permute.xlu0 %1355
        %1357 = vrot.lane.b32.xlu0 %v1254, 64
        %v1358 = vpop.permute.xlu0 %1357
        %1359 = vrot.lane.b32.xlu0 %v1256, 64
        %v1360 = vpop.permute.xlu0 %1359
        %1361 = vrot.lane.b32.xlu0 %v1258, 64
        %v1362 = vpop.permute.xlu0 %1361
        %1363 = vrot.lane.b32.xlu0 %v1260, 64
        %v1364 = vpop.permute.xlu0 %1363
        %1365 = vrot.lane.b32.xlu0 %v1262, 64
        %v1366 = vpop.permute.xlu0 %1365
        %1367 = vrot.lane.b32.xlu0 %v1264, 64
        %v1368 = vpop.permute.xlu0 %1367
        %1369 = vrot.lane.b32.xlu0 %v1266, 64
        %v1370 = vpop.permute.xlu0 %1369
        %1371 = vrot.lane.b32.xlu0 %v1236, 32
        %v1372 = vpop.permute.xlu0 %1371
        %1373 = vrot.lane.b32.xlu0 %v1238, 32
        %v1374 = vpop.permute.xlu0 %1373
        %1375 = vrot.lane.b32.xlu0 %v1240, 32
        %v1376 = vpop.permute.xlu0 %1375
        %1377 = vrot.lane.b32.xlu0 %v1242, 32
        %v1378 = vpop.permute.xlu0 %1377
        %1379 = vrot.lane.b32.xlu0 %v1244, 32
        %v1380 = vpop.permute.xlu0 %1379
        %1381 = vrot.lane.b32.xlu0 %v1246, 32
        %v1382 = vpop.permute.xlu0 %1381
        %1383 = vrot.lane.b32.xlu0 %v1248, 32
        %v1384 = vpop.permute.xlu0 %1383
        %1385 = vrot.lane.b32.xlu0 %v1250, 32
        %v1386 = vpop.permute.xlu0 %1385
        %1387 = vrot.lane.b32.xlu0 %v1252, 32
        %v1388 = vpop.permute.xlu0 %1387
        %1389 = vrot.lane.b32.xlu0 %v1254, 32
        %v1390 = vpop.permute.xlu0 %1389
        %1391 = vrot.lane.b32.xlu0 %v1256, 32
        %v1392 = vpop.permute.xlu0 %1391
        %1393 = vrot.lane.b32.xlu0 %v1258, 32
        %v1394 = vpop.permute.xlu0 %1393
        %1395 = vrot.lane.b32.xlu0 %v1260, 32
        %v1396 = vpop.permute.xlu0 %1395
        %1397 = vrot.lane.b32.xlu0 %v1262, 32
        %v1398 = vpop.permute.xlu0 %1397
        %1399 = vrot.lane.b32.xlu0 %v1264, 32
        %v1400 = vpop.permute.xlu0 %1399
        %1401 = vrot.lane.b32.xlu0 %v1266, 32
        %v1402 = vpop.permute.xlu0 %1401
        %1419 = vrot.lane.b32.xlu0 %v1237, 96
        %v1420 = vpop.permute.xlu0 %1419
        %1421 = vrot.lane.b32.xlu0 %v1239, 96
        %v1422 = vpop.permute.xlu0 %1421
        %1423 = vrot.lane.b32.xlu0 %v1241, 96
        %v1424 = vpop.permute.xlu0 %1423
        %1425 = vrot.lane.b32.xlu0 %v1243, 96
        %v1426 = vpop.permute.xlu0 %1425
        %1427 = vrot.lane.b32.xlu0 %v1245, 96
        %v1428 = vpop.permute.xlu0 %1427
        %1429 = vrot.lane.b32.xlu0 %v1247, 96
        %v1430 = vpop.permute.xlu0 %1429
        %1431 = vrot.lane.b32.xlu0 %v1249, 96
        %v1432 = vpop.permute.xlu0 %1431
        %1433 = vrot.lane.b32.xlu0 %v1251, 96
        %v1434 = vpop.permute.xlu0 %1433
        %1435 = vrot.lane.b32.xlu0 %v1253, 96
        %v1436 = vpop.permute.xlu0 %1435
        %1437 = vrot.lane.b32.xlu0 %v1255, 96
        %v1438 = vpop.permute.xlu0 %1437
        %1439 = vrot.lane.b32.xlu0 %v1257, 96
        %v1440 = vpop.permute.xlu0 %1439
        %1441 = vrot.lane.b32.xlu0 %v1259, 96
        %v1442 = vpop.permute.xlu0 %1441
        %1443 = vrot.lane.b32.xlu0 %v1261, 96
        %v1444 = vpop.permute.xlu0 %1443
        %1445 = vrot.lane.b32.xlu0 %v1263, 96
        %v1446 = vpop.permute.xlu0 %1445
        %1447 = vrot.lane.b32.xlu0 %v1265, 96
        %v1448 = vpop.permute.xlu0 %1447
        %1449 = vrot.lane.b32.xlu0 %v1267, 96
        %v1450 = vpop.permute.xlu0 %1449
        %1467 = vrot.lane.b32.xlu0 %v1237, 64
        %v1468 = vpop.permute.xlu0 %1467
        %1469 = vrot.lane.b32.xlu0 %v1239, 64
        %v1470 = vpop.permute.xlu0 %1469
        %1471 = vrot.lane.b32.xlu0 %v1241, 64
        %v1472 = vpop.permute.xlu0 %1471
        %1473 = vrot.lane.b32.xlu0 %v1243, 64
        %v1474 = vpop.permute.xlu0 %1473
        %1475 = vrot.lane.b32.xlu0 %v1245, 64
        %v1476 = vpop.permute.xlu0 %1475
        %1477 = vrot.lane.b32.xlu0 %v1247, 64
        %v1478 = vpop.permute.xlu0 %1477
        %1479 = vrot.lane.b32.xlu0 %v1249, 64
        %v1480 = vpop.permute.xlu0 %1479
        %1481 = vrot.lane.b32.xlu0 %v1251, 64
        %v1482 = vpop.permute.xlu0 %1481
        %1483 = vrot.lane.b32.xlu0 %v1253, 64
        %v1484 = vpop.permute.xlu0 %1483
        %1485 = vrot.lane.b32.xlu0 %v1255, 64
        %v1486 = vpop.permute.xlu0 %1485
        %1487 = vrot.lane.b32.xlu0 %v1257, 64
        %v1488 = vpop.permute.xlu0 %1487
        %1489 = vrot.lane.b32.xlu0 %v1259, 64
        %v1490 = vpop.permute.xlu0 %1489
        %1491 = vrot.lane.b32.xlu0 %v1261, 64
        %v1492 = vpop.permute.xlu0 %1491
        %1493 = vrot.lane.b32.xlu0 %v1263, 64
        %v1494 = vpop.permute.xlu0 %1493
        %1495 = vrot.lane.b32.xlu0 %v1265, 64
        %v1496 = vpop.permute.xlu0 %1495
        %1497 = vrot.lane.b32.xlu0 %v1267, 64
        %v1498 = vpop.permute.xlu0 %1497
        %1515 = vrot.lane.b32.xlu0 %v1237, 32
        %v1516 = vpop.permute.xlu0 %1515
        %1517 = vrot.lane.b32.xlu0 %v1239, 32
        %v1518 = vpop.permute.xlu0 %1517
        %1519 = vrot.lane.b32.xlu0 %v1241, 32
        %v1520 = vpop.permute.xlu0 %1519
        %1521 = vrot.lane.b32.xlu0 %v1243, 32
        %v1522 = vpop.permute.xlu0 %1521
        %1523 = vrot.lane.b32.xlu0 %v1245, 32
        %v1524 = vpop.permute.xlu0 %1523
        %1525 = vrot.lane.b32.xlu0 %v1247, 32
        %v1526 = vpop.permute.xlu0 %1525
        %1527 = vrot.lane.b32.xlu0 %v1249, 32
        %v1528 = vpop.permute.xlu0 %1527
        %1529 = vrot.lane.b32.xlu0 %v1251, 32
        %v1530 = vpop.permute.xlu0 %1529
        %1531 = vrot.lane.b32.xlu0 %v1253, 32
        %v1532 = vpop.permute.xlu0 %1531
        %1533 = vrot.lane.b32.xlu0 %v1255, 32
        %v1534 = vpop.permute.xlu0 %1533
        %1535 = vrot.lane.b32.xlu0 %v1257, 32
        %v1536 = vpop.permute.xlu0 %1535
        %1537 = vrot.lane.b32.xlu0 %v1259, 32
        %v1538 = vpop.permute.xlu0 %1537
        %1539 = vrot.lane.b32.xlu0 %v1261, 32
        %v1540 = vpop.permute.xlu0 %1539
        %1541 = vrot.lane.b32.xlu0 %v1263, 32
        %v1542 = vpop.permute.xlu0 %1541
        %1543 = vrot.lane.b32.xlu0 %v1265, 32
        %v1544 = vpop.permute.xlu0 %1543
        %1545 = vrot.lane.b32.xlu0 %v1267, 32
        %v1546 = vpop.permute.xlu0 %1545
        %vm1563 = vcmask 261120
        %v1565 = vsel %vm1563, %v1283, 0
        %v1568 = vsel %vm1563, %v1236, 0
        %v1571 = vsel %vm1563, %v1238, 0
        %v1574 = vsel %vm1563, %v1240, 0
        %v1577 = vsel %vm1563, %v1242, 0
        %v1580 = vsel %vm1563, %v1244, 0
        %v1583 = vsel %vm1563, %v1246, 0
        %v1586 = vsel %vm1563, %v1248, 0
        %v1589 = vsel %vm1563, %v1250, 0
        %1591 = vmatprep.subr.bf16.mxu0 0
        %1592 = vmatpush1.bf16.xpose.msra.mxu0 %v1568
        %1593 = vmatprep.subr.bf16.mxu0 0
        %1594 = vmatpush1.bf16.xpose.msra.mxu0 %v1571
        %1595 = vmatprep.subr.bf16.mxu0 0
        %1596 = vmatpush1.bf16.xpose.msra.mxu0 %v1574
        %1597 = vmatprep.subr.bf16.mxu0 0
        %1598 = vmatpush1.bf16.xpose.msra.mxu0 %v1577
        %1599 = vmatprep.subr.bf16.mxu0 0
        %1600 = vmatpush1.bf16.xpose.msra.mxu0 %v1580
        %1601 = vmatprep.subr.bf16.mxu0 0
        %1602 = vmatpush1.bf16.xpose.msra.mxu0 %v1583
        %1603 = vmatprep.subr.bf16.mxu0 0
        %1604 = vmatpush1.bf16.xpose.msra.mxu0 %v1586
        %1605 = vmatprep.subr.bf16.mxu0 0
        %1606 = vmatpush1.bf16.xpose.msra.mxu0 %v1589
        %1607 = vmatprep.subr.bf16.mxu0 0
        %1608 = vmatpush1.bf16.xpose.msra.mxu0 0
        %1609 = vmatprep.subr.bf16.mxu0 0
        %1610 = vmatpush1.bf16.xpose.msra.mxu0 0
        %1611 = vmatprep.subr.bf16.mxu0 0
        %1612 = vmatpush1.bf16.xpose.msra.mxu0 0
        %1613 = vmatprep.subr.bf16.mxu0 0
        %1614 = vmatpush1.bf16.xpose.msra.mxu0 0
        %1615 = vmatprep.subr.bf16.mxu0 0
        %1616 = vmatpush1.bf16.xpose.msra.mxu0 0
        %1617 = vmatprep.subr.bf16.mxu0 0
        %1618 = vmatpush1.bf16.xpose.msra.mxu0 0
        %1619 = vmatprep.subr.bf16.mxu0 0
        %1620 = vmatpush1.bf16.xpose.msra.mxu0 0
        %1621 = vmatprep.subr.bf16.mxu0 0
        %1622 = vmatpush1.bf16.xpose.msra.mxu0 0
        %1623 = vmatprep.mubr.bf16.mxu0 0
        %1624 = vmatmul.mubr.bf16.gmra.mrb[0].mxu0 %v1565
        %v1625 = vpop.f32.mrb[0].mxu0
        %v1626 = vadd.f32 0.0, %v1625
        %v1627 = vpop.f32.mrb[0].mxu0
        %v1628 = vpop.f32.mrb[0].mxu0
        %v1629 = vpop.f32.mrb[0].mxu0
        %1630 = vdwg.mxu0
        %v1632 = vsel %vm1563, %v1284, 0
        %v1635 = vsel %vm1563, %v1252, 0
        %v1638 = vsel %vm1563, %v1254, 0
        %v1641 = vsel %vm1563, %v1256, 0
        %v1644 = vsel %vm1563, %v1258, 0
        %v1647 = vsel %vm1563, %v1260, 0
        %v1650 = vsel %vm1563, %v1262, 0
        %v1653 = vsel %vm1563, %v1264, 0
        %v1656 = vsel %vm1563, %v1266, 0
        %1658 = vmatprep.subr.bf16.mxu0 0
        %1659 = vmatpush1.bf16.xpose.msra.mxu0 %v1635
        %1660 = vmatprep.subr.bf16.mxu0 0
        %1661 = vmatpush1.bf16.xpose.msra.mxu0 %v1638
        %1662 = vmatprep.subr.bf16.mxu0 0
        %1663 = vmatpush1.bf16.xpose.msra.mxu0 %v1641
        %1664 = vmatprep.subr.bf16.mxu0 0
        %1665 = vmatpush1.bf16.xpose.msra.mxu0 %v1644
        %1666 = vmatprep.subr.bf16.mxu0 0
        %1667 = vmatpush1.bf16.xpose.msra.mxu0 %v1647
        %1668 = vmatprep.subr.bf16.mxu0 0
        %1669 = vmatpush1.bf16.xpose.msra.mxu0 %v1650
        %1670 = vmatprep.subr.bf16.mxu0 0
        %1671 = vmatpush1.bf16.xpose.msra.mxu0 %v1653
        %1672 = vmatprep.subr.bf16.mxu0 0
        %1673 = vmatpush1.bf16.xpose.msra.mxu0 %v1656
        %1674 = vmatprep.subr.bf16.mxu0 0
        %1675 = vmatpush1.bf16.xpose.msra.mxu0 0
        %1676 = vmatprep.subr.bf16.mxu0 0
        %1677 = vmatpush1.bf16.xpose.msra.mxu0 0
        %1678 = vmatprep.subr.bf16.mxu0 0
        %1679 = vmatpush1.bf16.xpose.msra.mxu0 0
        %1680 = vmatprep.subr.bf16.mxu0 0
        %1681 = vmatpush1.bf16.xpose.msra.mxu0 0
        %1682 = vmatprep.subr.bf16.mxu0 0
        %1683 = vmatpush1.bf16.xpose.msra.mxu0 0
        %1684 = vmatprep.subr.bf16.mxu0 0
        %1685 = vmatpush1.bf16.xpose.msra.mxu0 0
        %1686 = vmatprep.subr.bf16.mxu0 0
        %1687 = vmatpush1.bf16.xpose.msra.mxu0 0
        %1688 = vmatprep.subr.bf16.mxu0 0
        %1689 = vmatpush1.bf16.xpose.msra.mxu0 0
        %1690 = vmatprep.mubr.bf16.mxu0 0
        %1691 = vmatmul.mubr.bf16.gmra.mrb[0].mxu0 %v1632
        %v1692 = vpop.f32.mrb[0].mxu0
        %v1693 = vadd.f32 0.0, %v1692
        %v1694 = vpop.f32.mrb[0].mxu0
        %v1695 = vpop.f32.mrb[0].mxu0
        %v1696 = vpop.f32.mrb[0].mxu0
        %1697 = vdwg.mxu0
        %v1699 = vsel %vm1563, %v1285, 0
        %v1702 = vsel %vm1563, %v1308, 0
        %v1705 = vsel %vm1563, %v1310, 0
        %v1708 = vsel %vm1563, %v1312, 0
        %v1711 = vsel %vm1563, %v1314, 0
        %v1714 = vsel %vm1563, %v1316, 0
        %v1717 = vsel %vm1563, %v1318, 0
        %v1720 = vsel %vm1563, %v1320, 0
        %v1723 = vsel %vm1563, %v1322, 0
        %1725 = vmatprep.subr.bf16.mxu0 0
        %1726 = vmatpush1.bf16.xpose.msra.mxu0 %v1702
        %1727 = vmatprep.subr.bf16.mxu0 0
        %1728 = vmatpush1.bf16.xpose.msra.mxu0 %v1705
        %1729 = vmatprep.subr.bf16.mxu0 0
        %1730 = vmatpush1.bf16.xpose.msra.mxu0 %v1708
        %1731 = vmatprep.subr.bf16.mxu0 0
        %1732 = vmatpush1.bf16.xpose.msra.mxu0 %v1711
        %1733 = vmatprep.subr.bf16.mxu0 0
        %1734 = vmatpush1.bf16.xpose.msra.mxu0 %v1714
        %1735 = vmatprep.subr.bf16.mxu0 0
        %1736 = vmatpush1.bf16.xpose.msra.mxu0 %v1717
        %1737 = vmatprep.subr.bf16.mxu0 0
        %1738 = vmatpush1.bf16.xpose.msra.mxu0 %v1720
        %1739 = vmatprep.subr.bf16.mxu0 0
        %1740 = vmatpush1.bf16.xpose.msra.mxu0 %v1723
        %1741 = vmatprep.subr.bf16.mxu0 0
        %1742 = vmatpush1.bf16.xpose.msra.mxu0 0
        %1743 = vmatprep.subr.bf16.mxu0 0
        %1744 = vmatpush1.bf16.xpose.msra.mxu0 0
        %1745 = vmatprep.subr.bf16.mxu0 0
        %1746 = vmatpush1.bf16.xpose.msra.mxu0 0
        %1747 = vmatprep.subr.bf16.mxu0 0
        %1748 = vmatpush1.bf16.xpose.msra.mxu0 0
        %1749 = vmatprep.subr.bf16.mxu0 0
        %1750 = vmatpush1.bf16.xpose.msra.mxu0 0
        %1751 = vmatprep.subr.bf16.mxu0 0
        %1752 = vmatpush1.bf16.xpose.msra.mxu0 0
        %1753 = vmatprep.subr.bf16.mxu0 0
        %1754 = vmatpush1.bf16.xpose.msra.mxu0 0
        %1755 = vmatprep.subr.bf16.mxu0 0
        %1756 = vmatpush1.bf16.xpose.msra.mxu0 0
        %1757 = vmatprep.mubr.bf16.mxu0 0
        %1758 = vmatmul.mubr.bf16.gmra.mrb[0].mxu0 %v1699
        %v1759 = vpop.f32.mrb[0].mxu0
        %v1760 = vadd.f32 0.0, %v1759
        %v1761 = vpop.f32.mrb[0].mxu0
        %v1762 = vpop.f32.mrb[0].mxu0
        %v1763 = vpop.f32.mrb[0].mxu0
        %1764 = vdwg.mxu0
        %v1766 = vsel %vm1563, %v1286, 0
        %v1769 = vsel %vm1563, %v1324, 0
        %v1772 = vsel %vm1563, %v1326, 0
        %v1775 = vsel %vm1563, %v1328, 0
        %v1778 = vsel %vm1563, %v1330, 0
        %v1781 = vsel %vm1563, %v1332, 0
        %v1784 = vsel %vm1563, %v1334, 0
        %v1787 = vsel %vm1563, %v1336, 0
        %v1790 = vsel %vm1563, %v1338, 0
        %1792 = vmatprep.subr.bf16.mxu0 0
        %1793 = vmatpush1.bf16.xpose.msra.mxu0 %v1769
        %1794 = vmatprep.subr.bf16.mxu0 0
        %1795 = vmatpush1.bf16.xpose.msra.mxu0 %v1772
        %1796 = vmatprep.subr.bf16.mxu0 0
        %1797 = vmatpush1.bf16.xpose.msra.mxu0 %v1775
        %1798 = vmatprep.subr.bf16.mxu0 0
        %1799 = vmatpush1.bf16.xpose.msra.mxu0 %v1778
        %1800 = vmatprep.subr.bf16.mxu0 0
        %1801 = vmatpush1.bf16.xpose.msra.mxu0 %v1781
        %1802 = vmatprep.subr.bf16.mxu0 0
        %1803 = vmatpush1.bf16.xpose.msra.mxu0 %v1784
        %1804 = vmatprep.subr.bf16.mxu0 0
        %1805 = vmatpush1.bf16.xpose.msra.mxu0 %v1787
        %1806 = vmatprep.subr.bf16.mxu0 0
        %1807 = vmatpush1.bf16.xpose.msra.mxu0 %v1790
        %1808 = vmatprep.subr.bf16.mxu0 0
        %1809 = vmatpush1.bf16.xpose.msra.mxu0 0
        %1810 = vmatprep.subr.bf16.mxu0 0
        %1811 = vmatpush1.bf16.xpose.msra.mxu0 0
        %1812 = vmatprep.subr.bf16.mxu0 0
        %1813 = vmatpush1.bf16.xpose.msra.mxu0 0
        %1814 = vmatprep.subr.bf16.mxu0 0
        %1815 = vmatpush1.bf16.xpose.msra.mxu0 0
        %1816 = vmatprep.subr.bf16.mxu0 0
        %1817 = vmatpush1.bf16.xpose.msra.mxu0 0
        %1818 = vmatprep.subr.bf16.mxu0 0
        %1819 = vmatpush1.bf16.xpose.msra.mxu0 0
        %1820 = vmatprep.subr.bf16.mxu0 0
        %1821 = vmatpush1.bf16.xpose.msra.mxu0 0
        %1822 = vmatprep.subr.bf16.mxu0 0
        %1823 = vmatpush1.bf16.xpose.msra.mxu0 0
        %1824 = vmatprep.mubr.bf16.mxu0 0
        %1825 = vmatmul.mubr.bf16.gmra.mrb[0].mxu0 %v1766
        %v1826 = vpop.f32.mrb[0].mxu0
        %v1827 = vadd.f32 0.0, %v1826
        %v1828 = vpop.f32.mrb[0].mxu0
        %v1829 = vpop.f32.mrb[0].mxu0
        %v1830 = vpop.f32.mrb[0].mxu0
        %1831 = vdwg.mxu0
        %v1833 = vsel %vm1563, %v1287, 0
        %v1836 = vsel %vm1563, %v1340, 0
        %v1839 = vsel %vm1563, %v1342, 0
        %v1842 = vsel %vm1563, %v1344, 0
        %v1845 = vsel %vm1563, %v1346, 0
        %v1848 = vsel %vm1563, %v1348, 0
        %v1851 = vsel %vm1563, %v1350, 0
        %v1854 = vsel %vm1563, %v1352, 0
        %v1857 = vsel %vm1563, %v1354, 0
        %1859 = vmatprep.subr.bf16.mxu0 0
        %1860 = vmatpush1.bf16.xpose.msra.mxu0 %v1836
        %1861 = vmatprep.subr.bf16.mxu0 0
        %1862 = vmatpush1.bf16.xpose.msra.mxu0 %v1839
        %1863 = vmatprep.subr.bf16.mxu0 0
        %1864 = vmatpush1.bf16.xpose.msra.mxu0 %v1842
        %1865 = vmatprep.subr.bf16.mxu0 0
        %1866 = vmatpush1.bf16.xpose.msra.mxu0 %v1845
        %1867 = vmatprep.subr.bf16.mxu0 0
        %1868 = vmatpush1.bf16.xpose.msra.mxu0 %v1848
        %1869 = vmatprep.subr.bf16.mxu0 0
        %1870 = vmatpush1.bf16.xpose.msra.mxu0 %v1851
        %1871 = vmatprep.subr.bf16.mxu0 0
        %1872 = vmatpush1.bf16.xpose.msra.mxu0 %v1854
        %1873 = vmatprep.subr.bf16.mxu0 0
        %1874 = vmatpush1.bf16.xpose.msra.mxu0 %v1857
        %1875 = vmatprep.subr.bf16.mxu0 0
        %1876 = vmatpush1.bf16.xpose.msra.mxu0 0
        %1877 = vmatprep.subr.bf16.mxu0 0
        %1878 = vmatpush1.bf16.xpose.msra.mxu0 0
        %1879 = vmatprep.subr.bf16.mxu0 0
        %1880 = vmatpush1.bf16.xpose.msra.mxu0 0
        %1881 = vmatprep.subr.bf16.mxu0 0
        %1882 = vmatpush1.bf16.xpose.msra.mxu0 0
        %1883 = vmatprep.subr.bf16.mxu0 0
        %1884 = vmatpush1.bf16.xpose.msra.mxu0 0
        %1885 = vmatprep.subr.bf16.mxu0 0
        %1886 = vmatpush1.bf16.xpose.msra.mxu0 0
        %1887 = vmatprep.subr.bf16.mxu0 0
        %1888 = vmatpush1.bf16.xpose.msra.mxu0 0
        %1889 = vmatprep.subr.bf16.mxu0 0
        %1890 = vmatpush1.bf16.xpose.msra.mxu0 0
        %1891 = vmatprep.mubr.bf16.mxu0 0
        %1892 = vmatmul.mubr.bf16.gmra.mrb[0].mxu0 %v1833
        %v1893 = vpop.f32.mrb[0].mxu0
        %v1894 = vadd.f32 0.0, %v1893
        %v1895 = vpop.f32.mrb[0].mxu0
        %v1896 = vpop.f32.mrb[0].mxu0
        %v1897 = vpop.f32.mrb[0].mxu0
        %1898 = vdwg.mxu0
        %v1900 = vsel %vm1563, %v1288, 0
        %v1903 = vsel %vm1563, %v1356, 0
        %v1906 = vsel %vm1563, %v1358, 0
        %v1909 = vsel %vm1563, %v1360, 0
        %v1912 = vsel %vm1563, %v1362, 0
        %v1915 = vsel %vm1563, %v1364, 0
        %v1918 = vsel %vm1563, %v1366, 0
        %v1921 = vsel %vm1563, %v1368, 0
        %v1924 = vsel %vm1563, %v1370, 0
        %1926 = vmatprep.subr.bf16.mxu0 0
        %1927 = vmatpush1.bf16.xpose.msra.mxu0 %v1903
        %1928 = vmatprep.subr.bf16.mxu0 0
        %1929 = vmatpush1.bf16.xpose.msra.mxu0 %v1906
        %1930 = vmatprep.subr.bf16.mxu0 0
        %1931 = vmatpush1.bf16.xpose.msra.mxu0 %v1909
        %1932 = vmatprep.subr.bf16.mxu0 0
        %1933 = vmatpush1.bf16.xpose.msra.mxu0 %v1912
        %1934 = vmatprep.subr.bf16.mxu0 0
        %1935 = vmatpush1.bf16.xpose.msra.mxu0 %v1915
        %1936 = vmatprep.subr.bf16.mxu0 0
        %1937 = vmatpush1.bf16.xpose.msra.mxu0 %v1918
        %1938 = vmatprep.subr.bf16.mxu0 0
        %1939 = vmatpush1.bf16.xpose.msra.mxu0 %v1921
        %1940 = vmatprep.subr.bf16.mxu0 0
        %1941 = vmatpush1.bf16.xpose.msra.mxu0 %v1924
        %1942 = vmatprep.subr.bf16.mxu0 0
        %1943 = vmatpush1.bf16.xpose.msra.mxu0 0
        %1944 = vmatprep.subr.bf16.mxu0 0
        %1945 = vmatpush1.bf16.xpose.msra.mxu0 0
        %1946 = vmatprep.subr.bf16.mxu0 0
        %1947 = vmatpush1.bf16.xpose.msra.mxu0 0
        %1948 = vmatprep.subr.bf16.mxu0 0
        %1949 = vmatpush1.bf16.xpose.msra.mxu0 0
        %1950 = vmatprep.subr.bf16.mxu0 0
        %1951 = vmatpush1.bf16.xpose.msra.mxu0 0
        %1952 = vmatprep.subr.bf16.mxu0 0
        %1953 = vmatpush1.bf16.xpose.msra.mxu0 0
        %1954 = vmatprep.subr.bf16.mxu0 0
        %1955 = vmatpush1.bf16.xpose.msra.mxu0 0
        %1956 = vmatprep.subr.bf16.mxu0 0
        %1957 = vmatpush1.bf16.xpose.msra.mxu0 0
        %1958 = vmatprep.mubr.bf16.mxu0 0
        %1959 = vmatmul.mubr.bf16.gmra.mrb[0].mxu0 %v1900
        %v1960 = vpop.f32.mrb[0].mxu0
        %v1961 = vadd.f32 0.0, %v1960
        %v1962 = vpop.f32.mrb[0].mxu0
        %v1963 = vpop.f32.mrb[0].mxu0
        %v1964 = vpop.f32.mrb[0].mxu0
        %1965 = vdwg.mxu0
        %v1967 = vsel %vm1563, %v1289, 0
        %v1970 = vsel %vm1563, %v1372, 0
        %v1973 = vsel %vm1563, %v1374, 0
        %v1976 = vsel %vm1563, %v1376, 0
        %v1979 = vsel %vm1563, %v1378, 0
        %v1982 = vsel %vm1563, %v1380, 0
        %v1985 = vsel %vm1563, %v1382, 0
        %v1988 = vsel %vm1563, %v1384, 0
        %v1991 = vsel %vm1563, %v1386, 0
        %1993 = vmatprep.subr.bf16.mxu0 0
        %1994 = vmatpush1.bf16.xpose.msra.mxu0 %v1970
        %1995 = vmatprep.subr.bf16.mxu0 0
        %1996 = vmatpush1.bf16.xpose.msra.mxu0 %v1973
        %1997 = vmatprep.subr.bf16.mxu0 0
        %1998 = vmatpush1.bf16.xpose.msra.mxu0 %v1976
        %1999 = vmatprep.subr.bf16.mxu0 0
        %2000 = vmatpush1.bf16.xpose.msra.mxu0 %v1979
        %2001 = vmatprep.subr.bf16.mxu0 0
        %2002 = vmatpush1.bf16.xpose.msra.mxu0 %v1982
        %2003 = vmatprep.subr.bf16.mxu0 0
        %2004 = vmatpush1.bf16.xpose.msra.mxu0 %v1985
        %2005 = vmatprep.subr.bf16.mxu0 0
        %2006 = vmatpush1.bf16.xpose.msra.mxu0 %v1988
        %2007 = vmatprep.subr.bf16.mxu0 0
        %2008 = vmatpush1.bf16.xpose.msra.mxu0 %v1991
        %2009 = vmatprep.subr.bf16.mxu0 0
        %2010 = vmatpush1.bf16.xpose.msra.mxu0 0
        %2011 = vmatprep.subr.bf16.mxu0 0
        %2012 = vmatpush1.bf16.xpose.msra.mxu0 0
        %2013 = vmatprep.subr.bf16.mxu0 0
        %2014 = vmatpush1.bf16.xpose.msra.mxu0 0
        %2015 = vmatprep.subr.bf16.mxu0 0
        %2016 = vmatpush1.bf16.xpose.msra.mxu0 0
        %2017 = vmatprep.subr.bf16.mxu0 0
        %2018 = vmatpush1.bf16.xpose.msra.mxu0 0
        %2019 = vmatprep.subr.bf16.mxu0 0
        %2020 = vmatpush1.bf16.xpose.msra.mxu0 0
        %2021 = vmatprep.subr.bf16.mxu0 0
        %2022 = vmatpush1.bf16.xpose.msra.mxu0 0
        %2023 = vmatprep.subr.bf16.mxu0 0
        %2024 = vmatpush1.bf16.xpose.msra.mxu0 0
        %2025 = vmatprep.mubr.bf16.mxu0 0
        %2026 = vmatmul.mubr.bf16.gmra.mrb[0].mxu0 %v1967
        %v2027 = vpop.f32.mrb[0].mxu0
        %v2028 = vadd.f32 0.0, %v2027
        %v2029 = vpop.f32.mrb[0].mxu0
        %v2030 = vpop.f32.mrb[0].mxu0
        %v2031 = vpop.f32.mrb[0].mxu0
        %2032 = vdwg.mxu0
        %v2034 = vsel %vm1563, %v1290, 0
        %v2037 = vsel %vm1563, %v1388, 0
        %v2040 = vsel %vm1563, %v1390, 0
        %v2043 = vsel %vm1563, %v1392, 0
        %v2046 = vsel %vm1563, %v1394, 0
        %v2049 = vsel %vm1563, %v1396, 0
        %v2052 = vsel %vm1563, %v1398, 0
        %v2055 = vsel %vm1563, %v1400, 0
        %v2058 = vsel %vm1563, %v1402, 0
        %2060 = vmatprep.subr.bf16.mxu0 0
        %2061 = vmatpush1.bf16.xpose.msra.mxu0 %v2037
        %2062 = vmatprep.subr.bf16.mxu0 0
        %2063 = vmatpush1.bf16.xpose.msra.mxu0 %v2040
        %2064 = vmatprep.subr.bf16.mxu0 0
        %2065 = vmatpush1.bf16.xpose.msra.mxu0 %v2043
        %2066 = vmatprep.subr.bf16.mxu0 0
        %2067 = vmatpush1.bf16.xpose.msra.mxu0 %v2046
        %2068 = vmatprep.subr.bf16.mxu0 0
        %2069 = vmatpush1.bf16.xpose.msra.mxu0 %v2049
        %2070 = vmatprep.subr.bf16.mxu0 0
        %2071 = vmatpush1.bf16.xpose.msra.mxu0 %v2052
        %2072 = vmatprep.subr.bf16.mxu0 0
        %2073 = vmatpush1.bf16.xpose.msra.mxu0 %v2055
        %2074 = vmatprep.subr.bf16.mxu0 0
        %2075 = vmatpush1.bf16.xpose.msra.mxu0 %v2058
        %2076 = vmatprep.subr.bf16.mxu0 0
        %2077 = vmatpush1.bf16.xpose.msra.mxu0 0
        %2078 = vmatprep.subr.bf16.mxu0 0
        %2079 = vmatpush1.bf16.xpose.msra.mxu0 0
        %2080 = vmatprep.subr.bf16.mxu0 0
        %2081 = vmatpush1.bf16.xpose.msra.mxu0 0
        %2082 = vmatprep.subr.bf16.mxu0 0
        %2083 = vmatpush1.bf16.xpose.msra.mxu0 0
        %2084 = vmatprep.subr.bf16.mxu0 0
        %2085 = vmatpush1.bf16.xpose.msra.mxu0 0
        %2086 = vmatprep.subr.bf16.mxu0 0
        %2087 = vmatpush1.bf16.xpose.msra.mxu0 0
        %2088 = vmatprep.subr.bf16.mxu0 0
        %2089 = vmatpush1.bf16.xpose.msra.mxu0 0
        %2090 = vmatprep.subr.bf16.mxu0 0
        %2091 = vmatpush1.bf16.xpose.msra.mxu0 0
        %2092 = vmatprep.mubr.bf16.mxu0 0
        %2093 = vmatmul.mubr.bf16.gmra.mrb[0].mxu0 %v2034
        %v2094 = vpop.f32.mrb[0].mxu0
        %v2095 = vadd.f32 0.0, %v2094
        %v2096 = vpop.f32.mrb[0].mxu0
        %v2097 = vpop.f32.mrb[0].mxu0
        %v2098 = vpop.f32.mrb[0].mxu0
        %2099 = vdwg.mxu0
        %2100 = vmax.xlane.f32.xlu0 %v1626
        %v2101 = vpop.xlane.xlu0 %2100
        %2102 = vmax.xlane.f32.xlu0 %v1693
        %v2103 = vpop.xlane.xlu0 %2102
        %2104 = vmax.xlane.f32.xlu0 %v1760
        %v2105 = vpop.xlane.xlu0 %2104
        %2106 = vmax.xlane.f32.xlu0 %v1827
        %v2107 = vpop.xlane.xlu0 %2106
        %2108 = vmax.xlane.f32.xlu0 %v1894
        %v2109 = vpop.xlane.xlu0 %2108
        %2110 = vmax.xlane.f32.xlu0 %v1961
        %v2111 = vpop.xlane.xlu0 %2110
        %2112 = vmax.xlane.f32.xlu0 %v2028
        %v2113 = vpop.xlane.xlu0 %2112
        %2114 = vmax.xlane.f32.xlu0 %v2095
        %v2115 = vpop.xlane.xlu0 %2114
        %v2116 = vsub.f32 %v1626, %v2101
        %v2117 = vsub.f32 %v1693, %v2103
        %v2118 = vsub.f32 %v1760, %v2105
        %v2119 = vsub.f32 %v1827, %v2107
        %v2120 = vsub.f32 %v1894, %v2109
        %v2121 = vsub.f32 %v1961, %v2111
        %v2122 = vsub.f32 %v2028, %v2113
        %v2123 = vsub.f32 %v2095, %v2115
        %v2124 = vmul.f32 %v2116, 1.442695
        %v2125 = vpow.pop %v2124
        %v2126 = vmul.f32 %v2117, 1.442695
        %v2127 = vpow.pop %v2126
        %v2128 = vmul.f32 %v2118, 1.442695
        %v2129 = vpow.pop %v2128
        %v2130 = vmul.f32 %v2119, 1.442695
        %v2131 = vpow.pop %v2130
        %v2132 = vmul.f32 %v2120, 1.442695
        %v2133 = vpow.pop %v2132
        %v2134 = vmul.f32 %v2121, 1.442695
        %v2135 = vpow.pop %v2134
        %v2136 = vmul.f32 %v2122, 1.442695
        %v2137 = vpow.pop %v2136
        %v2138 = vmul.f32 %v2123, 1.442695
        %v2139 = vpow.pop %v2138
        %2140 = vadd.xlane.f32.xlu0 %v2125
        %v2141 = vpop.xlane.xlu0 %2140
        %2142 = vadd.xlane.f32.xlu0 %v2127
        %v2143 = vpop.xlane.xlu0 %2142
        %2144 = vadd.xlane.f32.xlu0 %v2129
        %v2145 = vpop.xlane.xlu0 %2144
        %2146 = vadd.xlane.f32.xlu0 %v2131
        %v2147 = vpop.xlane.xlu0 %2146
        %2148 = vadd.xlane.f32.xlu0 %v2133
        %v2149 = vpop.xlane.xlu0 %2148
        %2150 = vadd.xlane.f32.xlu0 %v2135
        %v2151 = vpop.xlane.xlu0 %2150
        %2152 = vadd.xlane.f32.xlu0 %v2137
        %v2153 = vpop.xlane.xlu0 %2152
        %2154 = vadd.xlane.f32.xlu0 %v2139
        %v2155 = vpop.xlane.xlu0 %2154
        %v2156 = vrcp.pop %v2141
        %v2157 = vrcp.pop %v2143
        %v2158 = vrcp.pop %v2145
        %v2159 = vrcp.pop %v2147
        %v2160 = vrcp.pop %v2149
        %v2161 = vrcp.pop %v2151
        %v2162 = vrcp.pop %v2153
        %v2163 = vrcp.pop %v2155
        %v2164 = vpack.c.bf16 %v2125, %v2125
        %v2165 = vpack.c.bf16 %v2127, %v2127
        %v2166 = vpack.c.bf16 %v2129, %v2129
        %v2167 = vpack.c.bf16 %v2131, %v2131
        %v2168 = vpack.c.bf16 %v2133, %v2133
        %v2169 = vpack.c.bf16 %v2135, %v2135
        %v2170 = vpack.c.bf16 %v2137, %v2137
        %v2171 = vpack.c.bf16 %v2139, %v2139
        %2172 = vmatprep.subr.bf16.mxu0 0
        %2173 = vmatpush1.bf16.msra.mxu0 %v1237
        %2174 = vmatprep.subr.bf16.mxu0 0
        %2175 = vmatpush1.bf16.msra.mxu0 %v1239
        %2176 = vmatprep.subr.bf16.mxu0 0
        %2177 = vmatpush1.bf16.msra.mxu0 %v1241
        %2178 = vmatprep.subr.bf16.mxu0 0
        %2179 = vmatpush1.bf16.msra.mxu0 %v1243
        %2180 = vmatprep.subr.bf16.mxu0 0
        %2181 = vmatpush1.bf16.msra.mxu0 %v1245
        %2182 = vmatprep.subr.bf16.mxu0 0
        %2183 = vmatpush1.bf16.msra.mxu0 %v1247
        %2184 = vmatprep.subr.bf16.mxu0 0
        %2185 = vmatpush1.bf16.msra.mxu0 %v1249
        %2186 = vmatprep.subr.bf16.mxu0 0
        %2187 = vmatpush1.bf16.msra.mxu0 %v1251
        %2188 = vmatprep.subr.bf16.mxu0 0
        %2189 = vmatpush1.bf16.msra.mxu0 0
        %2190 = vmatprep.subr.bf16.mxu0 0
        %2191 = vmatpush1.bf16.msra.mxu0 0
        %2192 = vmatprep.subr.bf16.mxu0 0
        %2193 = vmatpush1.bf16.msra.mxu0 0
        %2194 = vmatprep.subr.bf16.mxu0 0
        %2195 = vmatpush1.bf16.msra.mxu0 0
        %2196 = vmatprep.subr.bf16.mxu0 0
        %2197 = vmatpush1.bf16.msra.mxu0 0
        %2198 = vmatprep.subr.bf16.mxu0 0
        %2199 = vmatpush1.bf16.msra.mxu0 0
        %2200 = vmatprep.subr.bf16.mxu0 0
        %2201 = vmatpush1.bf16.msra.mxu0 0
        %2202 = vmatprep.subr.bf16.mxu0 0
        %2203 = vmatpush1.bf16.msra.mxu0 0
        %2204 = vmatprep.mubr.bf16.mxu0 0
        %2205 = vmatmul.mubr.bf16.gmra.mrb[0].mxu0 %v2164
        %v2206 = vpop.f32.mrb[0].mxu0
        %v2207 = vadd.f32 0.0, %v2206
        %v2208 = vpop.f32.mrb[0].mxu0
        %v2209 = vpop.f32.mrb[0].mxu0
        %v2210 = vpop.f32.mrb[0].mxu0
        %2211 = vdwg.mxu0
        %2212 = vmatprep.subr.bf16.mxu0 0
        %2213 = vmatpush1.bf16.msra.mxu0 %v1253
        %2214 = vmatprep.subr.bf16.mxu0 0
        %2215 = vmatpush1.bf16.msra.mxu0 %v1255
        %2216 = vmatprep.subr.bf16.mxu0 0
        %2217 = vmatpush1.bf16.msra.mxu0 %v1257
        %2218 = vmatprep.subr.bf16.mxu0 0
        %2219 = vmatpush1.bf16.msra.mxu0 %v1259
        %2220 = vmatprep.subr.bf16.mxu0 0
        %2221 = vmatpush1.bf16.msra.mxu0 %v1261
        %2222 = vmatprep.subr.bf16.mxu0 0
        %2223 = vmatpush1.bf16.msra.mxu0 %v1263
        %2224 = vmatprep.subr.bf16.mxu0 0
        %2225 = vmatpush1.bf16.msra.mxu0 %v1265
        %2226 = vmatprep.subr.bf16.mxu0 0
        %2227 = vmatpush1.bf16.msra.mxu0 %v1267
        %2228 = vmatprep.subr.bf16.mxu0 0
        %2229 = vmatpush1.bf16.msra.mxu0 0
        %2230 = vmatprep.subr.bf16.mxu0 0
        %2231 = vmatpush1.bf16.msra.mxu0 0
        %2232 = vmatprep.subr.bf16.mxu0 0
        %2233 = vmatpush1.bf16.msra.mxu0 0
        %2234 = vmatprep.subr.bf16.mxu0 0
        %2235 = vmatpush1.bf16.msra.mxu0 0
        %2236 = vmatprep.subr.bf16.mxu0 0
        %2237 = vmatpush1.bf16.msra.mxu0 0
        %2238 = vmatprep.subr.bf16.mxu0 0
        %2239 = vmatpush1.bf16.msra.mxu0 0
        %2240 = vmatprep.subr.bf16.mxu0 0
        %2241 = vmatpush1.bf16.msra.mxu0 0
        %2242 = vmatprep.subr.bf16.mxu0 0
        %2243 = vmatpush1.bf16.msra.mxu0 0
        %2244 = vmatprep.mubr.bf16.mxu0 0
        %2245 = vmatmul.mubr.bf16.gmra.mrb[0].mxu0 %v2165
        %v2246 = vpop.f32.mrb[0].mxu0
        %v2247 = vadd.f32 0.0, %v2246
        %v2248 = vpop.f32.mrb[0].mxu0
        %v2249 = vpop.f32.mrb[0].mxu0
        %v2250 = vpop.f32.mrb[0].mxu0
        %2251 = vdwg.mxu0
        %2252 = vmatprep.subr.bf16.mxu0 0
        %2253 = vmatpush1.bf16.msra.mxu0 %v1420
        %2254 = vmatprep.subr.bf16.mxu0 0
        %2255 = vmatpush1.bf16.msra.mxu0 %v1422
        %2256 = vmatprep.subr.bf16.mxu0 0
        %2257 = vmatpush1.bf16.msra.mxu0 %v1424
        %2258 = vmatprep.subr.bf16.mxu0 0
        %2259 = vmatpush1.bf16.msra.mxu0 %v1426
        %2260 = vmatprep.subr.bf16.mxu0 0
        %2261 = vmatpush1.bf16.msra.mxu0 %v1428
        %2262 = vmatprep.subr.bf16.mxu0 0
        %2263 = vmatpush1.bf16.msra.mxu0 %v1430
        %2264 = vmatprep.subr.bf16.mxu0 0
        %2265 = vmatpush1.bf16.msra.mxu0 %v1432
        %2266 = vmatprep.subr.bf16.mxu0 0
        %2267 = vmatpush1.bf16.msra.mxu0 %v1434
        %2268 = vmatprep.subr.bf16.mxu0 0
        %2269 = vmatpush1.bf16.msra.mxu0 0
        %2270 = vmatprep.subr.bf16.mxu0 0
        %2271 = vmatpush1.bf16.msra.mxu0 0
        %2272 = vmatprep.subr.bf16.mxu0 0
        %2273 = vmatpush1.bf16.msra.mxu0 0
        %2274 = vmatprep.subr.bf16.mxu0 0
        %2275 = vmatpush1.bf16.msra.mxu0 0
        %2276 = vmatprep.subr.bf16.mxu0 0
        %2277 = vmatpush1.bf16.msra.mxu0 0
        %2278 = vmatprep.subr.bf16.mxu0 0
        %2279 = vmatpush1.bf16.msra.mxu0 0
        %2280 = vmatprep.subr.bf16.mxu0 0
        %2281 = vmatpush1.bf16.msra.mxu0 0
        %2282 = vmatprep.subr.bf16.mxu0 0
        %2283 = vmatpush1.bf16.msra.mxu0 0
        %2284 = vmatprep.mubr.bf16.mxu0 0
        %2285 = vmatmul.mubr.bf16.gmra.mrb[0].mxu0 %v2166
        %v2286 = vpop.f32.mrb[0].mxu0
        %v2287 = vadd.f32 0.0, %v2286
        %v2288 = vpop.f32.mrb[0].mxu0
        %v2289 = vpop.f32.mrb[0].mxu0
        %v2290 = vpop.f32.mrb[0].mxu0
        %2291 = vdwg.mxu0
        %2292 = vmatprep.subr.bf16.mxu0 0
        %2293 = vmatpush1.bf16.msra.mxu0 %v1436
        %2294 = vmatprep.subr.bf16.mxu0 0
        %2295 = vmatpush1.bf16.msra.mxu0 %v1438
        %2296 = vmatprep.subr.bf16.mxu0 0
        %2297 = vmatpush1.bf16.msra.mxu0 %v1440
        %2298 = vmatprep.subr.bf16.mxu0 0
        %2299 = vmatpush1.bf16.msra.mxu0 %v1442
        %2300 = vmatprep.subr.bf16.mxu0 0
        %2301 = vmatpush1.bf16.msra.mxu0 %v1444
        %2302 = vmatprep.subr.bf16.mxu0 0
        %2303 = vmatpush1.bf16.msra.mxu0 %v1446
        %2304 = vmatprep.subr.bf16.mxu0 0
        %2305 = vmatpush1.bf16.msra.mxu0 %v1448
        %2306 = vmatprep.subr.bf16.mxu0 0
        %2307 = vmatpush1.bf16.msra.mxu0 %v1450
        %2308 = vmatprep.subr.bf16.mxu0 0
        %2309 = vmatpush1.bf16.msra.mxu0 0
        %2310 = vmatprep.subr.bf16.mxu0 0
        %2311 = vmatpush1.bf16.msra.mxu0 0
        %2312 = vmatprep.subr.bf16.mxu0 0
        %2313 = vmatpush1.bf16.msra.mxu0 0
        %2314 = vmatprep.subr.bf16.mxu0 0
        %2315 = vmatpush1.bf16.msra.mxu0 0
        %2316 = vmatprep.subr.bf16.mxu0 0
        %2317 = vmatpush1.bf16.msra.mxu0 0
        %2318 = vmatprep.subr.bf16.mxu0 0
        %2319 = vmatpush1.bf16.msra.mxu0 0
        %2320 = vmatprep.subr.bf16.mxu0 0
        %2321 = vmatpush1.bf16.msra.mxu0 0
        %2322 = vmatprep.subr.bf16.mxu0 0
        %2323 = vmatpush1.bf16.msra.mxu0 0
        %2324 = vmatprep.mubr.bf16.mxu0 0
        %2325 = vmatmul.mubr.bf16.gmra.mrb[0].mxu0 %v2167
        %v2326 = vpop.f32.mrb[0].mxu0
        %v2327 = vadd.f32 0.0, %v2326
        %v2328 = vpop.f32.mrb[0].mxu0
        %v2329 = vpop.f32.mrb[0].mxu0
        %v2330 = vpop.f32.mrb[0].mxu0
        %2331 = vdwg.mxu0
        %2332 = vmatprep.subr.bf16.mxu0 0
        %2333 = vmatpush1.bf16.msra.mxu0 %v1468
        %2334 = vmatprep.subr.bf16.mxu0 0
        %2335 = vmatpush1.bf16.msra.mxu0 %v1470
        %2336 = vmatprep.subr.bf16.mxu0 0
        %2337 = vmatpush1.bf16.msra.mxu0 %v1472
        %2338 = vmatprep.subr.bf16.mxu0 0
        %2339 = vmatpush1.bf16.msra.mxu0 %v1474
        %2340 = vmatprep.subr.bf16.mxu0 0
        %2341 = vmatpush1.bf16.msra.mxu0 %v1476
        %2342 = vmatprep.subr.bf16.mxu0 0
        %2343 = vmatpush1.bf16.msra.mxu0 %v1478
        %2344 = vmatprep.subr.bf16.mxu0 0
        %2345 = vmatpush1.bf16.msra.mxu0 %v1480
        %2346 = vmatprep.subr.bf16.mxu0 0
        %2347 = vmatpush1.bf16.msra.mxu0 %v1482
        %2348 = vmatprep.subr.bf16.mxu0 0
        %2349 = vmatpush1.bf16.msra.mxu0 0
        %2350 = vmatprep.subr.bf16.mxu0 0
        %2351 = vmatpush1.bf16.msra.mxu0 0
        %2352 = vmatprep.subr.bf16.mxu0 0
        %2353 = vmatpush1.bf16.msra.mxu0 0
        %2354 = vmatprep.subr.bf16.mxu0 0
        %2355 = vmatpush1.bf16.msra.mxu0 0
        %2356 = vmatprep.subr.bf16.mxu0 0
        %2357 = vmatpush1.bf16.msra.mxu0 0
        %2358 = vmatprep.subr.bf16.mxu0 0
        %2359 = vmatpush1.bf16.msra.mxu0 0
        %2360 = vmatprep.subr.bf16.mxu0 0
        %2361 = vmatpush1.bf16.msra.mxu0 0
        %2362 = vmatprep.subr.bf16.mxu0 0
        %2363 = vmatpush1.bf16.msra.mxu0 0
        %2364 = vmatprep.mubr.bf16.mxu0 0
        %2365 = vmatmul.mubr.bf16.gmra.mrb[0].mxu0 %v2168
        %v2366 = vpop.f32.mrb[0].mxu0
        %v2367 = vadd.f32 0.0, %v2366
        %v2368 = vpop.f32.mrb[0].mxu0
        %v2369 = vpop.f32.mrb[0].mxu0
        %v2370 = vpop.f32.mrb[0].mxu0
        %2371 = vdwg.mxu0
        %2372 = vmatprep.subr.bf16.mxu0 0
        %2373 = vmatpush1.bf16.msra.mxu0 %v1484
        %2374 = vmatprep.subr.bf16.mxu0 0
        %2375 = vmatpush1.bf16.msra.mxu0 %v1486
        %2376 = vmatprep.subr.bf16.mxu0 0
        %2377 = vmatpush1.bf16.msra.mxu0 %v1488
        %2378 = vmatprep.subr.bf16.mxu0 0
        %2379 = vmatpush1.bf16.msra.mxu0 %v1490
        %2380 = vmatprep.subr.bf16.mxu0 0
        %2381 = vmatpush1.bf16.msra.mxu0 %v1492
        %2382 = vmatprep.subr.bf16.mxu0 0
        %2383 = vmatpush1.bf16.msra.mxu0 %v1494
        %2384 = vmatprep.subr.bf16.mxu0 0
        %2385 = vmatpush1.bf16.msra.mxu0 %v1496
        %2386 = vmatprep.subr.bf16.mxu0 0
        %2387 = vmatpush1.bf16.msra.mxu0 %v1498
        %2388 = vmatprep.subr.bf16.mxu0 0
        %2389 = vmatpush1.bf16.msra.mxu0 0
        %2390 = vmatprep.subr.bf16.mxu0 0
        %2391 = vmatpush1.bf16.msra.mxu0 0
        %2392 = vmatprep.subr.bf16.mxu0 0
        %2393 = vmatpush1.bf16.msra.mxu0 0
        %2394 = vmatprep.subr.bf16.mxu0 0
        %2395 = vmatpush1.bf16.msra.mxu0 0
        %2396 = vmatprep.subr.bf16.mxu0 0
        %2397 = vmatpush1.bf16.msra.mxu0 0
        %2398 = vmatprep.subr.bf16.mxu0 0
        %2399 = vmatpush1.bf16.msra.mxu0 0
        %2400 = vmatprep.subr.bf16.mxu0 0
        %2401 = vmatpush1.bf16.msra.mxu0 0
        %2402 = vmatprep.subr.bf16.mxu0 0
        %2403 = vmatpush1.bf16.msra.mxu0 0
        %2404 = vmatprep.mubr.bf16.mxu0 0
        %2405 = vmatmul.mubr.bf16.gmra.mrb[0].mxu0 %v2169
        %v2406 = vpop.f32.mrb[0].mxu0
        %v2407 = vadd.f32 0.0, %v2406
        %v2408 = vpop.f32.mrb[0].mxu0
        %v2409 = vpop.f32.mrb[0].mxu0
        %v2410 = vpop.f32.mrb[0].mxu0
        %2411 = vdwg.mxu0
        %2412 = vmatprep.subr.bf16.mxu0 0
        %2413 = vmatpush1.bf16.msra.mxu0 %v1516
        %2414 = vmatprep.subr.bf16.mxu0 0
        %2415 = vmatpush1.bf16.msra.mxu0 %v1518
        %2416 = vmatprep.subr.bf16.mxu0 0
        %2417 = vmatpush1.bf16.msra.mxu0 %v1520
        %2418 = vmatprep.subr.bf16.mxu0 0
        %2419 = vmatpush1.bf16.msra.mxu0 %v1522
        %2420 = vmatprep.subr.bf16.mxu0 0
        %2421 = vmatpush1.bf16.msra.mxu0 %v1524
        %2422 = vmatprep.subr.bf16.mxu0 0
        %2423 = vmatpush1.bf16.msra.mxu0 %v1526
        %2424 = vmatprep.subr.bf16.mxu0 0
        %2425 = vmatpush1.bf16.msra.mxu0 %v1528
        %2426 = vmatprep.subr.bf16.mxu0 0
        %2427 = vmatpush1.bf16.msra.mxu0 %v1530
        %2428 = vmatprep.subr.bf16.mxu0 0
        %2429 = vmatpush1.bf16.msra.mxu0 0
        %2430 = vmatprep.subr.bf16.mxu0 0
        %2431 = vmatpush1.bf16.msra.mxu0 0
        %2432 = vmatprep.subr.bf16.mxu0 0
        %2433 = vmatpush1.bf16.msra.mxu0 0
        %2434 = vmatprep.subr.bf16.mxu0 0
        %2435 = vmatpush1.bf16.msra.mxu0 0
        %2436 = vmatprep.subr.bf16.mxu0 0
        %2437 = vmatpush1.bf16.msra.mxu0 0
        %2438 = vmatprep.subr.bf16.mxu0 0
        %2439 = vmatpush1.bf16.msra.mxu0 0
        %2440 = vmatprep.subr.bf16.mxu0 0
        %2441 = vmatpush1.bf16.msra.mxu0 0
        %2442 = vmatprep.subr.bf16.mxu0 0
        %2443 = vmatpush1.bf16.msra.mxu0 0
        %2444 = vmatprep.mubr.bf16.mxu0 0
        %2445 = vmatmul.mubr.bf16.gmra.mrb[0].mxu0 %v2170
        %v2446 = vpop.f32.mrb[0].mxu0
        %v2447 = vadd.f32 0.0, %v2446
        %v2448 = vpop.f32.mrb[0].mxu0
        %v2449 = vpop.f32.mrb[0].mxu0
        %v2450 = vpop.f32.mrb[0].mxu0
        %2451 = vdwg.mxu0
        %2452 = vmatprep.subr.bf16.mxu0 0
        %2453 = vmatpush1.bf16.msra.mxu0 %v1532
        %2454 = vmatprep.subr.bf16.mxu0 0
        %2455 = vmatpush1.bf16.msra.mxu0 %v1534
        %2456 = vmatprep.subr.bf16.mxu0 0
        %2457 = vmatpush1.bf16.msra.mxu0 %v1536
        %2458 = vmatprep.subr.bf16.mxu0 0
        %2459 = vmatpush1.bf16.msra.mxu0 %v1538
        %2460 = vmatprep.subr.bf16.mxu0 0
        %2461 = vmatpush1.bf16.msra.mxu0 %v1540
        %2462 = vmatprep.subr.bf16.mxu0 0
        %2463 = vmatpush1.bf16.msra.mxu0 %v1542
        %2464 = vmatprep.subr.bf16.mxu0 0
        %2465 = vmatpush1.bf16.msra.mxu0 %v1544
        %2466 = vmatprep.subr.bf16.mxu0 0
        %2467 = vmatpush1.bf16.msra.mxu0 %v1546
        %2468 = vmatprep.subr.bf16.mxu0 0
        %2469 = vmatpush1.bf16.msra.mxu0 0
        %2470 = vmatprep.subr.bf16.mxu0 0
        %2471 = vmatpush1.bf16.msra.mxu0 0
        %2472 = vmatprep.subr.bf16.mxu0 0
        %2473 = vmatpush1.bf16.msra.mxu0 0
        %2474 = vmatprep.subr.bf16.mxu0 0
        %2475 = vmatpush1.bf16.msra.mxu0 0
        %2476 = vmatprep.subr.bf16.mxu0 0
        %2477 = vmatpush1.bf16.msra.mxu0 0
        %2478 = vmatprep.subr.bf16.mxu0 0
        %2479 = vmatpush1.bf16.msra.mxu0 0
        %2480 = vmatprep.subr.bf16.mxu0 0
        %2481 = vmatpush1.bf16.msra.mxu0 0
        %2482 = vmatprep.subr.bf16.mxu0 0
        %2483 = vmatpush1.bf16.msra.mxu0 0
        %2484 = vmatprep.mubr.bf16.mxu0 0
        %2485 = vmatmul.mubr.bf16.gmra.mrb[0].mxu0 %v2171
        %v2486 = vpop.f32.mrb[0].mxu0
        %v2487 = vadd.f32 0.0, %v2486
        %v2488 = vpop.f32.mrb[0].mxu0
        %v2489 = vpop.f32.mrb[0].mxu0
        %v2490 = vpop.f32.mrb[0].mxu0
        %2491 = vdwg.mxu0
        %v2492 = vmul.f32 %v2207, %v2156
        %v2493 = vmul.f32 %v2247, %v2157
        %v2494 = vmul.f32 %v2287, %v2158
        %v2495 = vmul.f32 %v2327, %v2159
        %v2496 = vmul.f32 %v2367, %v2160
        %v2497 = vmul.f32 %v2407, %v2161
        %v2498 = vmul.f32 %v2447, %v2162
        %v2499 = vmul.f32 %v2487, %v2163
        %2502 = vrot.lane.b32.xlu0 %v2494, 32
        %v2503 = vpop.permute.xlu0 %2502
        %2504 = vrot.lane.b32.xlu0 %v2495, 32
        %v2505 = vpop.permute.xlu0 %2504
        %2510 = vrot.lane.b32.xlu0 %v2496, 64
        %v2511 = vpop.permute.xlu0 %2510
        %2512 = vrot.lane.b32.xlu0 %v2497, 64
        %v2513 = vpop.permute.xlu0 %2512
        %2518 = vrot.lane.b32.xlu0 %v2498, 96
        %v2519 = vpop.permute.xlu0 %2518
        %2520 = vrot.lane.b32.xlu0 %v2499, 96
        %v2521 = vpop.permute.xlu0 %2520
        %v2524 = vsel %vm1563, %v2492, %v2503
        %v2525 = vsel %vm1563, %v2493, %v2505
        %vm2526 = vcmask 523264
        %v2527 = vsel %vm2526, %v2524, %v2511
        %v2528 = vsel %vm2526, %v2525, %v2513
        %vm2529 = vcmask 785408
        %v2530 = vsel %vm2529, %v2527, %v2519
        %v2531 = vsel %vm2529, %v2528, %v2521
        %v2532 = vpack.c.bf16 %v2531, %v2530
        %v2533 = vld [vmem:[#allocation13] sm:$0xf]
        %v2534 = vld [vmem:[#allocation13 + $0x4] sm:$0xf]
        %v2535 = vld [vmem:[#allocation13 + $0x8] sm:$0xf]
        %v2536 = vld [vmem:[#allocation13 + $0xc] sm:$0xf]
        %v2537 = vld [vmem:[#allocation13 + $0x10] sm:$0xf]
        %v2538 = vld [vmem:[#allocation13 + $0x14] sm:$0xf]
        %v2539 = vld [vmem:[#allocation13 + $0x18] sm:$0xf]
        %v2540 = vld [vmem:[#allocation13 + $0x1c] sm:$0xf]
        %v2541 = vld [vmem:[#allocation13 + $0x20] sm:$0xf]
        %v2542 = vld [vmem:[#allocation13 + $0x24] sm:$0xf]
        %v2543 = vld [vmem:[#allocation13 + $0x28] sm:$0xf]
        %v2544 = vld [vmem:[#allocation13 + $0x2c] sm:$0xf]
        %v2545 = vld [vmem:[#allocation13 + $0x30] sm:$0xf]
        %v2546 = vld [vmem:[#allocation13 + $0x34] sm:$0xf]
        %v2547 = vld [vmem:[#allocation13 + $0x38] sm:$0xf]
        %v2548 = vld [vmem:[#allocation13 + $0x3c] sm:$0xf]
        %v2549 = vld [vmem:[#allocation14] sm:$0x1]
        %v2551 = vlaneseq
        %v2552 = vshrl.u32 %v2551, 7
        %v2553 = vsub.s32 0, %v2552
        %v2554 = vrot.slane %v2549, %v2553
        %v2572 = vunpack.c.l.b16 %v2533
        %v2573 = vunpack.c.l.b16 %v2534
        %v2574 = vunpack.c.l.b16 %v2535
        %v2575 = vunpack.c.l.b16 %v2536
        %v2576 = vunpack.c.l.b16 %v2537
        %v2577 = vunpack.c.l.b16 %v2538
        %v2578 = vunpack.c.l.b16 %v2539
        %v2579 = vunpack.c.l.b16 %v2540
        %v2580 = vunpack.c.l.b16 %v2541
        %v2581 = vunpack.c.l.b16 %v2542
        %v2582 = vunpack.c.l.b16 %v2543
        %v2583 = vunpack.c.l.b16 %v2544
        %v2584 = vunpack.c.l.b16 %v2545
        %v2585 = vunpack.c.l.b16 %v2546
        %v2586 = vunpack.c.l.b16 %v2547
        %v2587 = vunpack.c.l.b16 %v2548
        %v2588 = vpack.c.b16 %v2573, %v2572
        %v2589 = vpack.c.b16 %v2575, %v2574
        %v2590 = vpack.c.b16 %v2577, %v2576
        %v2591 = vpack.c.b16 %v2579, %v2578
        %v2592 = vpack.c.b16 %v2581, %v2580
        %v2593 = vpack.c.b16 %v2583, %v2582
        %v2594 = vpack.c.b16 %v2585, %v2584
        %v2595 = vpack.c.b16 %v2587, %v2586
        %2604 = vmatprep.subr.bf16.mxu0 0
        %2605 = vmatpush1.bf16.msra.mxu0 %v2588
        %2606 = vmatprep.subr.bf16.mxu0 0
        %2607 = vmatpush1.bf16.msra.mxu0 %v2589
        %2608 = vmatprep.subr.bf16.mxu0 0
        %2609 = vmatpush1.bf16.msra.mxu0 %v2590
        %2610 = vmatprep.subr.bf16.mxu0 0
        %2611 = vmatpush1.bf16.msra.mxu0 %v2591
        %2612 = vmatprep.subr.bf16.mxu0 0
        %2613 = vmatpush1.bf16.msra.mxu0 %v2592
        %2614 = vmatprep.subr.bf16.mxu0 0
        %2615 = vmatpush1.bf16.msra.mxu0 %v2593
        %2616 = vmatprep.subr.bf16.mxu0 0
        %2617 = vmatpush1.bf16.msra.mxu0 %v2594
        %2618 = vmatprep.subr.bf16.mxu0 0
        %2619 = vmatpush1.bf16.msra.mxu0 %v2595
        %2620 = vmatprep.subr.bf16.mxu0 0
        %2621 = vmatpush1.bf16.msra.mxu0 0
        %2622 = vmatprep.subr.bf16.mxu0 0
        %2623 = vmatpush1.bf16.msra.mxu0 0
        %2624 = vmatprep.subr.bf16.mxu0 0
        %2625 = vmatpush1.bf16.msra.mxu0 0
        %2626 = vmatprep.subr.bf16.mxu0 0
        %2627 = vmatpush1.bf16.msra.mxu0 0
        %2628 = vmatprep.subr.bf16.mxu0 0
        %2629 = vmatpush1.bf16.msra.mxu0 0
        %2630 = vmatprep.subr.bf16.mxu0 0
        %2631 = vmatpush1.bf16.msra.mxu0 0
        %2632 = vmatprep.subr.bf16.mxu0 0
        %2633 = vmatpush1.bf16.msra.mxu0 0
        %2634 = vmatprep.subr.bf16.mxu0 0
        %2635 = vmatpush1.bf16.msra.mxu0 0
        %2636 = vmatprep.mubr.bf16.mxu0 0
        %2637 = vmatmul.mubr.bf16.gmra.mrb[0].mxu0 %v2532
        %v2638 = vpop.f32.mrb[0].mxu0
        %v2639 = vadd.f32 %v2554, %v2638
        %v2640 = vpop.f32.mrb[0].mxu0
        %v2641 = vpop.f32.mrb[0].mxu0
        %v2642 = vadd.f32 %v2554, %v2641
        %v2643 = vpop.f32.mrb[0].mxu0
        %2644 = vdwg.mxu0
        %v2645 = vadd.f32 %v2639, %v723
        %v2646 = vadd.f32 %v2642, %v724
        %2647 = vadd.xlane.f32.xlu0 %v2645
        %v2648 = vpop.xlane.xlu0 %2647
        %2649 = vadd.xlane.f32.xlu0 %v2646
        %v2650 = vpop.xlane.xlu0 %2649
        %v2651 = vrcp.pop 128.0
        %v2652 = vmul.f32 %v2648, %v2651
        %v2653 = vmul.f32 %v2650, %v2651
        %v2654 = vsub.f32 %v2645, %v2652
        %v2655 = vsub.f32 %v2646, %v2653
        %v2656 = vmul.f32 %v2654, %v2654
        %v2657 = vmul.f32 %v2655, %v2655
        %2658 = vadd.xlane.f32.xlu0 %v2656
        %v2659 = vpop.xlane.xlu0 %2658
        %2660 = vadd.xlane.f32.xlu0 %v2657
        %v2661 = vpop.xlane.xlu0 %2660
        %v2662 = vmul.f32 %v2659, %v2651
        %v2663 = vmul.f32 %v2661, %v2651
        %v2664 = vadd.f32 %v2662, 1e-05
        %v2665 = vadd.f32 %v2663, 1e-05
        %v2666 = vrsqrt.pop %v2664
        %v2667 = vrsqrt.pop %v2665
        %v2668 = vmul.f32 %v2654, %v2666
        %v2669 = vmul.f32 %v2655, %v2667
        %v2670 = vld [vmem:[#allocation16] sm:$0x1]
        %v2672 = vlaneseq
        %v2673 = vshrl.u32 %v2672, 7
        %v2674 = vsub.s32 0, %v2673
        %v2675 = vrot.slane %v2670, %v2674
        %v2677 = vmul.f32 %v2668, %v2675
        %v2678 = vmul.f32 %v2669, %v2675
        %v2679 = vld [vmem:[#allocation17] sm:$0x1]
        %v2681 = vlaneseq
        %v2682 = vshrl.u32 %v2681, 7
        %v2683 = vsub.s32 0, %v2682
        %v2684 = vrot.slane %v2679, %v2683
        %v2686 = vadd.f32 %v2677, %v2684
        %v2687 = vadd.f32 %v2678, %v2684
        %v2688 = vpack.c.bf16 %v2687, %v2686
        %v2689 = vld [vmem:[#allocation19] sm:$0xff]
        %v2690 = vld [vmem:[#allocation19 + $0x8] sm:$0xff]
        %v2691 = vld [vmem:[#allocation19 + $0x10] sm:$0xff]
        %v2692 = vld [vmem:[#allocation19 + $0x18] sm:$0xff]
        %v2693 = vld [vmem:[#allocation19 + $0x20] sm:$0xff]
        %v2694 = vld [vmem:[#allocation19 + $0x28] sm:$0xff]
        %v2695 = vld [vmem:[#allocation19 + $0x30] sm:$0xff]
        %v2696 = vld [vmem:[#allocation19 + $0x38] sm:$0xff]
        %v2697 = vld [vmem:[#allocation19 + $0x40] sm:$0xff]
        %v2698 = vld [vmem:[#allocation19 + $0x48] sm:$0xff]
        %v2699 = vld [vmem:[#allocation19 + $0x50] sm:$0xff]
        %v2700 = vld [vmem:[#allocation19 + $0x58] sm:$0xff]
        %v2701 = vld [vmem:[#allocation19 + $0x60] sm:$0xff]
        %v2702 = vld [vmem:[#allocation19 + $0x68] sm:$0xff]
        %v2703 = vld [vmem:[#allocation19 + $0x70] sm:$0xff]
        %v2704 = vld [vmem:[#allocation19 + $0x78] sm:$0xff]
        %v2705 = vld [vmem:[#allocation20] sm:$0x3]
        %v2707 = vlaneseq
        %v2708 = vshrl.u32 %v2707, 7
        %v2709 = vsub.s32 0, %v2708
        %v2710 = vrot.slane %v2705, %v2709
        %v2711 = vlaneseq
        %v2712 = vshrl.u32 %v2711, 7
        %v2713 = vsub.s32 1, %v2712
        %v2714 = vrot.slane %v2705, %v2713
        %v2733 = vunpack.c.l.b16 %v2689
        %v2734 = vunpack.c.h.b16 %v2689
        %v2735 = vunpack.c.l.b16 %v2690
        %v2736 = vunpack.c.h.b16 %v2690
        %v2737 = vunpack.c.l.b16 %v2691
        %v2738 = vunpack.c.h.b16 %v2691
        %v2739 = vunpack.c.l.b16 %v2692
        %v2740 = vunpack.c.h.b16 %v2692
        %v2741 = vunpack.c.l.b16 %v2693
        %v2742 = vunpack.c.h.b16 %v2693
        %v2743 = vunpack.c.l.b16 %v2694
        %v2744 = vunpack.c.h.b16 %v2694
        %v2745 = vunpack.c.l.b16 %v2695
        %v2746 = vunpack.c.h.b16 %v2695
        %v2747 = vunpack.c.l.b16 %v2696
        %v2748 = vunpack.c.h.b16 %v2696
        %v2749 = vunpack.c.l.b16 %v2697
        %v2750 = vunpack.c.h.b16 %v2697
        %v2751 = vunpack.c.l.b16 %v2698
        %v2752 = vunpack.c.h.b16 %v2698
        %v2753 = vunpack.c.l.b16 %v2699
        %v2754 = vunpack.c.h.b16 %v2699
        %v2755 = vunpack.c.l.b16 %v2700
        %v2756 = vunpack.c.h.b16 %v2700
        %v2757 = vunpack.c.l.b16 %v2701
        %v2758 = vunpack.c.h.b16 %v2701
        %v2759 = vunpack.c.l.b16 %v2702
        %v2760 = vunpack.c.h.b16 %v2702
        %v2761 = vunpack.c.l.b16 %v2703
        %v2762 = vunpack.c.h.b16 %v2703
        %v2763 = vunpack.c.l.b16 %v2704
        %v2764 = vunpack.c.h.b16 %v2704
        %v2765 = vpack.c.b16 %v2735, %v2733
        %v2766 = vpack.c.b16 %v2736, %v2734
        %v2767 = vpack.c.b16 %v2739, %v2737
        %v2768 = vpack.c.b16 %v2740, %v2738
        %v2769 = vpack.c.b16 %v2743, %v2741
        %v2770 = vpack.c.b16 %v2744, %v2742
        %v2771 = vpack.c.b16 %v2747, %v2745
        %v2772 = vpack.c.b16 %v2748, %v2746
        %v2773 = vpack.c.b16 %v2751, %v2749
        %v2774 = vpack.c.b16 %v2752, %v2750
        %v2775 = vpack.c.b16 %v2755, %v2753
        %v2776 = vpack.c.b16 %v2756, %v2754
        %v2777 = vpack.c.b16 %v2759, %v2757
        %v2778 = vpack.c.b16 %v2760, %v2758
        %v2779 = vpack.c.b16 %v2763, %v2761
        %v2780 = vpack.c.b16 %v2764, %v2762
        %2797 = vmatprep.subr.bf16.mxu0 %v2766
        %2798 = vmatpush1.bf16.msra.mxu0 %v2765
        %2799 = vmatprep.subr.bf16.mxu0 %v2768
        %2800 = vmatpush1.bf16.msra.mxu0 %v2767
        %2801 = vmatprep.subr.bf16.mxu0 %v2770
        %2802 = vmatpush1.bf16.msra.mxu0 %v2769
        %2803 = vmatprep.subr.bf16.mxu0 %v2772
        %2804 = vmatpush1.bf16.msra.mxu0 %v2771
        %2805 = vmatprep.subr.bf16.mxu0 %v2774
        %2806 = vmatpush1.bf16.msra.mxu0 %v2773
        %2807 = vmatprep.subr.bf16.mxu0 %v2776
        %2808 = vmatpush1.bf16.msra.mxu0 %v2775
        %2809 = vmatprep.subr.bf16.mxu0 %v2778
        %2810 = vmatpush1.bf16.msra.mxu0 %v2777
        %2811 = vmatprep.subr.bf16.mxu0 %v2780
        %2812 = vmatpush1.bf16.msra.mxu0 %v2779
        %2813 = vmatprep.subr.bf16.mxu0 0
        %2814 = vmatpush1.bf16.msra.mxu0 0
        %2815 = vmatprep.subr.bf16.mxu0 0
        %2816 = vmatpush1.bf16.msra.mxu0 0
        %2817 = vmatprep.subr.bf16.mxu0 0
        %2818 = vmatpush1.bf16.msra.mxu0 0
        %2819 = vmatprep.subr.bf16.mxu0 0
        %2820 = vmatpush1.bf16.msra.mxu0 0
        %2821 = vmatprep.subr.bf16.mxu0 0
        %2822 = vmatpush1.bf16.msra.mxu0 0
        %2823 = vmatprep.subr.bf16.mxu0 0
        %2824 = vmatpush1.bf16.msra.mxu0 0
        %2825 = vmatprep.subr.bf16.mxu0 0
        %2826 = vmatpush1.bf16.msra.mxu0 0
        %2827 = vmatprep.subr.bf16.mxu0 0
        %2828 = vmatpush1.bf16.msra.mxu0 0
        %2829 = vmatprep.mubr.bf16.mxu0 0
        %2830 = vmatmul.mubr.bf16.gmra.mrb[0].mxu0 %v2688
        %v2831 = vpop.f32.mrb[0].mxu0
        %v2832 = vadd.f32 %v2710, %v2831
        %v2833 = vpop.f32.mrb[0].mxu0
        %v2834 = vadd.f32 %v2714, %v2833
        %v2835 = vpop.f32.mrb[0].mxu0
        %v2836 = vadd.f32 %v2710, %v2835
        %v2837 = vpop.f32.mrb[0].mxu0
        %v2838 = vadd.f32 %v2714, %v2837
        %2839 = vdwg.mxu0
        %v2840 = vmul.f32 %v2832, 0.5
        %v2841 = vmul.f32 %v2834, 0.5
        %v2842 = vmul.f32 %v2836, 0.5
        %v2843 = vmul.f32 %v2838, 0.5
        %v2844 = vmul.f32 %v2832, 0.70710677
        %v2845 = vmul.f32 %v2834, 0.70710677
        %v2846 = vmul.f32 %v2836, 0.70710677
        %v2847 = vmul.f32 %v2838, 0.70710677
        %v2848 = verf.f32.pop %v2844
        %v2849 = verf.f32.pop %v2845
        %v2850 = verf.f32.pop %v2846
        %v2851 = verf.f32.pop %v2847
        %v2852 = vadd.f32 %v2848, 1.0
        %v2853 = vadd.f32 %v2849, 1.0
        %v2854 = vadd.f32 %v2850, 1.0
        %v2855 = vadd.f32 %v2851, 1.0
        %v2856 = vmul.f32 %v2840, %v2852
        %v2857 = vmul.f32 %v2841, %v2853
        %v2858 = vmul.f32 %v2842, %v2854
        %v2859 = vmul.f32 %v2843, %v2855
        %v2860 = vpack.c.bf16 %v2858, %v2856
        %v2861 = vpack.c.bf16 %v2859, %v2857
        %v2862 = vld [vmem:[#allocation22] sm:$0xf]
        %v2863 = vld [vmem:[#allocation22 + $0x4] sm:$0xf]
        %v2864 = vld [vmem:[#allocation22 + $0x8] sm:$0xf]
        %v2865 = vld [vmem:[#allocation22 + $0xc] sm:$0xf]
        %v2866 = vld [vmem:[#allocation22 + $0x10] sm:$0xf]
        %v2867 = vld [vmem:[#allocation22 + $0x14] sm:$0xf]
        %v2868 = vld [vmem:[#allocation22 + $0x18] sm:$0xf]
        %v2869 = vld [vmem:[#allocation22 + $0x1c] sm:$0xf]
        %v2870 = vld [vmem:[#allocation22 + $0x20] sm:$0xf]
        %v2871 = vld [vmem:[#allocation22 + $0x24] sm:$0xf]
        %v2872 = vld [vmem:[#allocation22 + $0x28] sm:$0xf]
        %v2873 = vld [vmem:[#allocation22 + $0x2c] sm:$0xf]
        %v2874 = vld [vmem:[#allocation22 + $0x30] sm:$0xf]
        %v2875 = vld [vmem:[#allocation22 + $0x34] sm:$0xf]
        %v2876 = vld [vmem:[#allocation22 + $0x38] sm:$0xf]
        %v2877 = vld [vmem:[#allocation22 + $0x3c] sm:$0xf]
        %v2878 = vld [vmem:[#allocation22 + $0x40] sm:$0xf]
        %v2879 = vld [vmem:[#allocation22 + $0x44] sm:$0xf]
        %v2880 = vld [vmem:[#allocation22 + $0x48] sm:$0xf]
        %v2881 = vld [vmem:[#allocation22 + $0x4c] sm:$0xf]
        %v2882 = vld [vmem:[#allocation22 + $0x50] sm:$0xf]
        %v2883 = vld [vmem:[#allocation22 + $0x54] sm:$0xf]
        %v2884 = vld [vmem:[#allocation22 + $0x58] sm:$0xf]
        %v2885 = vld [vmem:[#allocation22 + $0x5c] sm:$0xf]
        %v2886 = vld [vmem:[#allocation22 + $0x60] sm:$0xf]
        %v2887 = vld [vmem:[#allocation22 + $0x64] sm:$0xf]
        %v2888 = vld [vmem:[#allocation22 + $0x68] sm:$0xf]
        %v2889 = vld [vmem:[#allocation22 + $0x6c] sm:$0xf]
        %v2890 = vld [vmem:[#allocation22 + $0x70] sm:$0xf]
        %v2891 = vld [vmem:[#allocation22 + $0x74] sm:$0xf]
        %v2892 = vld [vmem:[#allocation22 + $0x78] sm:$0xf]
        %v2893 = vld [vmem:[#allocation22 + $0x7c] sm:$0xf]
        %v2894 = vld [vmem:[#allocation23] sm:$0x1]
        %v2896 = vlaneseq
        %v2897 = vshrl.u32 %v2896, 7
        %v2898 = vsub.s32 0, %v2897
        %v2899 = vrot.slane %v2894, %v2898
        %v2933 = vunpack.c.l.b16 %v2862
        %v2934 = vunpack.c.l.b16 %v2863
        %v2935 = vunpack.c.l.b16 %v2864
        %v2936 = vunpack.c.l.b16 %v2865
        %v2937 = vunpack.c.l.b16 %v2866
        %v2938 = vunpack.c.l.b16 %v2867
        %v2939 = vunpack.c.l.b16 %v2868
        %v2940 = vunpack.c.l.b16 %v2869
        %v2941 = vunpack.c.l.b16 %v2870
        %v2942 = vunpack.c.l.b16 %v2871
        %v2943 = vunpack.c.l.b16 %v2872
        %v2944 = vunpack.c.l.b16 %v2873
        %v2945 = vunpack.c.l.b16 %v2874
        %v2946 = vunpack.c.l.b16 %v2875
        %v2947 = vunpack.c.l.b16 %v2876
        %v2948 = vunpack.c.l.b16 %v2877
        %v2949 = vunpack.c.l.b16 %v2878
        %v2950 = vunpack.c.l.b16 %v2879
        %v2951 = vunpack.c.l.b16 %v2880
        %v2952 = vunpack.c.l.b16 %v2881
        %v2953 = vunpack.c.l.b16 %v2882
        %v2954 = vunpack.c.l.b16 %v2883
        %v2955 = vunpack.c.l.b16 %v2884
        %v2956 = vunpack.c.l.b16 %v2885
        %v2957 = vunpack.c.l.b16 %v2886
        %v2958 = vunpack.c.l.b16 %v2887
        %v2959 = vunpack.c.l.b16 %v2888
        %v2960 = vunpack.c.l.b16 %v2889
        %v2961 = vunpack.c.l.b16 %v2890
        %v2962 = vunpack.c.l.b16 %v2891
        %v2963 = vunpack.c.l.b16 %v2892
        %v2964 = vunpack.c.l.b16 %v2893
        %v2965 = vpack.c.b16 %v2934, %v2933
        %v2966 = vpack.c.b16 %v2936, %v2935
        %v2967 = vpack.c.b16 %v2938, %v2937
        %v2968 = vpack.c.b16 %v2940, %v2939
        %v2969 = vpack.c.b16 %v2942, %v2941
        %v2970 = vpack.c.b16 %v2944, %v2943
        %v2971 = vpack.c.b16 %v2946, %v2945
        %v2972 = vpack.c.b16 %v2948, %v2947
        %v2973 = vpack.c.b16 %v2950, %v2949
        %v2974 = vpack.c.b16 %v2952, %v2951
        %v2975 = vpack.c.b16 %v2954, %v2953
        %v2976 = vpack.c.b16 %v2956, %v2955
        %v2977 = vpack.c.b16 %v2958, %v2957
        %v2978 = vpack.c.b16 %v2960, %v2959
        %v2979 = vpack.c.b16 %v2962, %v2961
        %v2980 = vpack.c.b16 %v2964, %v2963
        %2997 = vmatprep.subr.bf16.mxu0 0
        %2998 = vmatpush1.bf16.msra.mxu0 %v2965
        %2999 = vmatprep.subr.bf16.mxu0 0
        %3000 = vmatpush1.bf16.msra.mxu0 %v2966
        %3001 = vmatprep.subr.bf16.mxu0 0
        %3002 = vmatpush1.bf16.msra.mxu0 %v2967
        %3003 = vmatprep.subr.bf16.mxu0 0
        %3004 = vmatpush1.bf16.msra.mxu0 %v2968
        %3005 = vmatprep.subr.bf16.mxu0 0
        %3006 = vmatpush1.bf16.msra.mxu0 %v2969
        %3007 = vmatprep.subr.bf16.mxu0 0
        %3008 = vmatpush1.bf16.msra.mxu0 %v2970
        %3009 = vmatprep.subr.bf16.mxu0 0
        %3010 = vmatpush1.bf16.msra.mxu0 %v2971
        %3011 = vmatprep.subr.bf16.mxu0 0
        %3012 = vmatpush1.bf16.msra.mxu0 %v2972
        %3013 = vmatprep.subr.bf16.mxu0 0
        %3014 = vmatpush1.bf16.msra.mxu0 %v2973
        %3015 = vmatprep.subr.bf16.mxu0 0
        %3016 = vmatpush1.bf16.msra.mxu0 %v2974
        %3017 = vmatprep.subr.bf16.mxu0 0
        %3018 = vmatpush1.bf16.msra.mxu0 %v2975
        %3019 = vmatprep.subr.bf16.mxu0 0
        %3020 = vmatpush1.bf16.msra.mxu0 %v2976
        %3021 = vmatprep.subr.bf16.mxu0 0
        %3022 = vmatpush1.bf16.msra.mxu0 %v2977
        %3023 = vmatprep.subr.bf16.mxu0 0
        %3024 = vmatpush1.bf16.msra.mxu0 %v2978
        %3025 = vmatprep.subr.bf16.mxu0 0
        %3026 = vmatpush1.bf16.msra.mxu0 %v2979
        %3027 = vmatprep.subr.bf16.mxu0 0
        %3028 = vmatpush1.bf16.msra.mxu0 %v2980
        %3029 = vmatprep.mubr.bf16.mxu0 %v2861
        %3030 = vmatmul.mubr.bf16.gmra.mrb[0].mxu0 %v2860
        %v3031 = vpop.f32.mrb[0].mxu0
        %v3032 = vadd.f32 %v2899, %v3031
        %v3033 = vpop.f32.mrb[0].mxu0
        %v3034 = vpop.f32.mrb[0].mxu0
        %v3035 = vadd.f32 %v2899, %v3034
        %v3036 = vpop.f32.mrb[0].mxu0
        %3037 = vdwg.mxu0
        %v3038 = vadd.f32 %v3032, %v2645
        %v3039 = vadd.f32 %v3035, %v2646
        %3040 = vst [vmem:[%s686] sm:$0xff] %v3038
        %3041 = vst [vmem:[%s686 + $0x8] sm:$0xff] %v3039
        %s3042 = sand.u32 %s352, 1
        %s3043 = scalar_lea.sflag [#allocation4], %s3042
        %s3044 = sand.u32 %s352, 1
        %s3045 = smul.addr %s3044, 16
        %s3046 = scalar_lea.vmem [#allocation25], %s3045
        // Predicated region
        $region133: #{tpu_custom_call.1} parent=75 // pred_check
          %p3047 = pneg %p362
        $region134: #{tpu_custom_call.1} parent=75 // pred_check_branch
          %3049 = sbr.rel (%p3047) target = $region136
        $region135: #{tpu_custom_call.1} parent=75 // pred_region
          %s3050 = smul.u32 2, %s40
          %s3052 = ssub.s32 256, 256
          %3053 = vsyncadd %s3043, %s3052
          %s3054 = smul.addr %s3050, 128
          %s3055 = scalar_lea.hbm %s14, %s3054
          %s3056 = sshll.u32 %s3046, 4
          %s3057 = int_to_ptr.vmem [resolvable:$true] %s3056
          %3062 = dma.vmem_to_hbm [thread:$0]  %s3057, 256, %s3055, %s3043, 128, 128, 8
        $region136: #{tpu_custom_call.1} parent=75 // pred_fallthru
          _
      $region76: #{tpu_custom_call.1} parent=5 // pred_fallthru
        _
      %p3063 = scmp.le.s32.totalorder 2, %s35
      // Predicated region
      $region137: #{tpu_custom_call.1} parent=5 // pred_check
        %p3064 = pneg %p3063
      $region138: #{tpu_custom_call.1} parent=5 // pred_check_branch
        %3066 = sbr.rel (%p3064) target = $region140
      $region139: #{tpu_custom_call.1} parent=5 // pred_region
        %s3067 = ssub.s32 %s35, 2
        // Predicated region
        $region141: #{tpu_custom_call.1} parent=139 // pred_check
          %p3068 = pneg %p368
        $region142: #{tpu_custom_call.1} parent=139 // pred_check_branch
          %3070 = sbr.rel (%p3068) target = $region144
        $region143: #{tpu_custom_call.1} parent=139 // pred_region
          %s3071 = sand.u32 %s353, 1
          %s3072 = scalar_lea.sflag [#allocation4], %s3071
          %s3073 = sand.u32 %s353, 1
          %s3074 = smul.addr %s3073, 16
          %s3075 = scalar_lea.vmem [#allocation25], %s3074
          %3076 = dma.done %s3072, 256
        $region144: #{tpu_custom_call.1} parent=139 // pred_fallthru
          _
      $region140: #{tpu_custom_call.1} parent=5 // pred_fallthru
        _
    $region6: #{tpu_custom_call.1} parent=1 // loop_footer
      %s39 = sadd.s32 1, %s35
    $region7: #{tpu_custom_call.1} parent=1 // loop_footer_branch
      %34 = sbr.rel target = $region3
    $region8: #{tpu_custom_call.1} parent=1 // loop_exit
      _
    %3077 = vsyncpa [#allocation3], 1
    %s3078 = scalar_lea.sflag [#allocation3], 1
    %3079 = vsyncpa %s3078, 1
    %3080 = vsyncpa [#allocation6], 1
    %s3081 = scalar_lea.sflag [#allocation6], 1
    %3082 = vsyncpa %s3081, 1
    %3083 = vsyncpa [#allocation9], 1
    %3084 = vsyncpa [#allocation12], 1
    %3085 = vsyncpa [#allocation15], 1
    %3086 = vsyncpa [#allocation18], 1
    %3087 = vsyncpa [#allocation21], 1
    %3088 = vsyncpa [#allocation24], 1
    %3089 = vsyncpa [#allocation4], 1
    %s3090 = scalar_lea.sflag [#allocation4], 1
    %3091 = vsyncpa %s3090, 1

</llo_original>
